<compile_context>
chip_gen: v6e
topology: v6e:2x2x1
jax: 0.10.0
libtpu: 0.0.40
codegen_flags: <defaults>
</compile_context>

<pallas_src>
import functools

import jax
import jax.numpy as jnp
from jax.experimental import pallas as pl
from jax.experimental.pallas import tpu as pltpu

_HIDDEN = 256  # hard-coded in the PyTorch module (nn.Linear(dim, 256))


@functools.lru_cache(maxsize=None)
def _heads_per_step():
    """2 heads per grid step on single-TC chips, 1 per step on v7x (2 TCs)."""
    try:
        kind = jax.devices()[0].device_kind.lower()
    except Exception:
        return 2
    return 1 if ("v7" in kind or "tpu7" in kind) else 2


def _mlp_heads_kernel(stat_ref, w1_ref, b1_ref, w2_ref, b2_ref, out_ref):
    """sigmoid(relu(L2(relu(L1(stat))))) for `hb` heads in one grid step.

    stat_ref: (hb, B, dim)     f32   (head 0 = mean stat, head 1 = var stat)
    w1_ref  : (hb, dim, H)     bf16
    b1_ref  : (hb, 1, H)       f32
    w2_ref  : (hb, H, dim)     bf16
    b2_ref  : (hb, 1, dim)     f32
    out_ref : (hb, B, dim)     f32   lane-dense (dim on lanes)
    """
    hb = stat_ref.shape[0]
    for h in range(hb):                      # static unroll (hb is 1 or 2)
        s = stat_ref[h]                      # (B, dim)  f32
        w1 = w1_ref[h]                       # (dim, H)  bf16
        b1 = b1_ref[h]                       # (1, H)    f32
        w2 = w2_ref[h]                       # (H, dim)  bf16
        b2 = b2_ref[h]                       # (1, dim)  f32

        hid = jnp.maximum(
            jnp.dot(s.astype(w1.dtype), w1,
                    preferred_element_type=jnp.float32) + b1, 0.0)
        o = jnp.maximum(
            jnp.dot(hid.astype(w2.dtype), w2,
                    preferred_element_type=jnp.float32) + b2, 0.0)
        out_ref[h] = jax.nn.sigmoid(o)


def prepare_params(params):
    """One-time param prep (hoisted out of the per-call path).

    Stacks the mean/var head weights along a leading head axis and casts the
    matmul weights to bf16 (halves the dominant weight DMA; MXU still
    accumulates in f32).
    """
    (w1m, b1m, w2m, b2m, w1v, b1v, w2v, b2v) = params
    w1 = jnp.stack([w1m, w1v]).astype(jnp.bfloat16)   # (2, dim, H)
    b1 = jnp.stack([b1m, b1v]).astype(jnp.float32)    # (2, 1, H)
    w2 = jnp.stack([w2m, w2v]).astype(jnp.bfloat16)   # (2, H, dim)
    b2 = jnp.stack([b2m, b2v]).astype(jnp.float32)    # (2, 1, dim)
    return (w1, b1, w2, b2)


def get_stat_forward(source_feat, target_feat, prepared_params):
    """Equivalent of get_stat.forward(source_feat, target_feat).

    source_feat / target_feat: (B, dim, L) float32 (PyTorch NCL layout).
    prepared_params: output of prepare_params(...) (call once, reuse).

    Returns (_mean, _var, tgt_mean, tgt_var), each (B, dim, 1, 1), with
    tgt_mean aliasing _mean and tgt_var aliasing _var (faithful to the
    original in-place unsqueeze_ bug — outputs do not depend on target_feat).
    """
    del target_feat
    B, dim, L = source_feat.shape
    w1, b1, w2, b2 = prepared_params
    hidden = w1.shape[-1]

    # Stats on the native layout — no transpose, x streamed once by XLA.
    # jnp.var is two-pass (mean-subtracted), avoiding f32 cancellation;
    # ddof=1 matches torch's unbiased var (L must be > 1, as in the module).
    mean = jnp.mean(source_feat, axis=-1)
    var = jnp.var(source_feat, axis=-1, ddof=1)
    stats = jnp.stack([mean, var]).astype(jnp.float32)      # (2, B, dim)

    hb = _heads_per_step()        # 2 on v5e/v6e (one step), 1 on v7x (2 TCs)
    n_steps = 2 // hb

    flops = 2 * (2 * B * dim * hidden + 2 * B * hidden * dim)
    bytes_accessed = (stats.size * 4 + w1.size * 2 + w2.size * 2
                      + b1.size * 4 + b2.size * 4 + 2 * B * dim * 4)
    cost = pl.CostEstimate(flops=flops,
                           transcendentals=2 * B * dim,
                           bytes_accessed=bytes_accessed)

    out = pl.pallas_call(
        _mlp_heads_kernel,
        out_shape=jax.ShapeDtypeStruct((2, B, dim), jnp.float32),
        grid_spec=pltpu.PrefetchScalarGridSpec(
            num_scalar_prefetch=0,
            grid=(n_steps,),
            in_specs=[
                pl.BlockSpec((hb, B, dim), lambda g: (g, 0, 0)),        # stats
                pl.BlockSpec((hb, dim, hidden), lambda g: (g, 0, 0)),   # w1
                pl.BlockSpec((hb, 1, hidden), lambda g: (g, 0, 0)),     # b1
                pl.BlockSpec((hb, hidden, dim), lambda g: (g, 0, 0)),   # w2
                pl.BlockSpec((hb, 1, dim), lambda g: (g, 0, 0)),        # b2
            ],
            out_specs=pl.BlockSpec((hb, B, dim), lambda g: (g, 0, 0)),
        ),
        compiler_params=pltpu.CompilerParams(
            dimension_semantics=("parallel",)),   # splits heads on v7x 2-TC
        cost_estimate=cost,
    )(stats, w1, b1, w2, b2)

    _mean = out[0].reshape(B, dim, 1, 1)
    _var = out[1].reshape(B, dim, 1, 1)
    # tgt_* alias the source results (original code overwrites them in-place).
    return _mean, _var, _mean, _var


def init_params(key, dim=1024, hidden=_HIDDEN):
    """Deterministic synthetic parameters (shapes per the module __init__)."""
    ks = jax.random.split(key, 8)
    scale1 = 1.0 / jnp.sqrt(dim)
    scale2 = 1.0 / jnp.sqrt(hidden)
    w1m = jax.random.normal(ks[0], (dim, hidden), jnp.float32) * scale1
    b1m = jax.random.normal(ks[1], (1, hidden), jnp.float32) * scale1
    w2m = jax.random.normal(ks[2], (hidden, dim), jnp.float32) * scale2
    b2m = jax.random.normal(ks[3], (1, dim), jnp.float32) * scale2
    w1v = jax.random.normal(ks[4], (dim, hidden), jnp.float32) * scale1
    b1v = jax.random.normal(ks[5], (1, hidden), jnp.float32) * scale1
    w2v = jax.random.normal(ks[6], (hidden, dim), jnp.float32) * scale2
    b2v = jax.random.normal(ks[7], (1, dim), jnp.float32) * scale2
    return (w1m, b1m, w2m, b2m, w1v, b1v, w2v, b2v)


def _reference(source_feat, params):
    """Pure-JAX f32 reference (matches the PyTorch math)."""
    (w1m, b1m, w2m, b2m, w1v, b1v, w2v, b2v) = params
    mean = jnp.mean(source_feat, axis=-1)
    var = jnp.var(source_feat, axis=-1, ddof=1)

    def head(s, w1, b1, w2, b2):
        h = jnp.maximum(s @ w1 + b1, 0.0)
        o = jnp.maximum(h @ w2 + b2, 0.0)
        return jax.nn.sigmoid(o)

    return (head(mean, w1m, b1m, w2m, b2m),
            head(var, w1v, b1v, w2v, b2v))


if __name__ == "__main__":
    B, DIM, L = 2, 1024, 16   # dim=1024 / hidden=256 match the module defaults

    key = jax.random.PRNGKey(0)
    k_src, k_tgt, k_par = jax.random.split(key, 3)
    source_feat = jax.random.normal(k_src, (B, DIM, L), jnp.float32)
    target_feat = jax.random.normal(k_tgt, (B, DIM, L), jnp.float32)
    params = init_params(k_par, dim=DIM)

    # One-time param prep (hoisted out of the per-call path).
    prepared = jax.block_until_ready(prepare_params(params))

    fwd = jax.jit(get_stat_forward)
    outs = jax.block_until_ready(fwd(source_feat, target_feat, prepared))
    _mean, _var, tgt_mean, tgt_var = outs

    assert _mean.shape == (B, DIM, 1, 1) and _var.shape == (B, DIM, 1, 1)
    assert tgt_mean.shape == (B, DIM, 1, 1) and tgt_var.shape == (B, DIM, 1, 1)

    # Numerical check against the f32 reference (bf16 weights => small
    # expected deltas; outputs are sigmoid-bounded).
    ref_mean, ref_var = _reference(source_feat, params)
    err_m = float(jnp.max(jnp.abs(_mean[:, :, 0, 0] - ref_mean)))
    err_v = float(jnp.max(jnp.abs(_var[:, :, 0, 0] - ref_var)))
    assert err_m < 5e-2 and err_v < 5e-2, (err_m, err_v)

    print("KERNEL_OK")
</pallas_src>

<mosaic_0001>
module attributes {stable_mosaic.version = 11 : i64} {
  func.func @_mlp_heads_kernel(%arg0: i32, %arg1: memref<2x2x1024xf32, #tpu.memory_space<vmem>>, %arg2: memref<2x1024x256xbf16, #tpu.memory_space<vmem>>, %arg3: memref<2x1x256xf32, #tpu.memory_space<vmem>>, %arg4: memref<2x256x1024xbf16, #tpu.memory_space<vmem>>, %arg5: memref<2x1x1024xf32, #tpu.memory_space<vmem>>, %arg6: memref<2x2x1024xf32, #tpu.memory_space<vmem>>) attributes {dimension_semantics = [#tpu.dimension_semantics<parallel>], iteration_bounds = array<i64: 1>, scalar_prefetch = 0 : i64, scratch_operands = 0 : i64, tpu.core_type = #tpu.core_type<tc>, window_params = [{transform_indices = @transform_0, window_bounds = array<i64: 2, 2, 1024>}, {transform_indices = @transform_1, window_bounds = array<i64: 2, 1024, 256>}, {transform_indices = @transform_2, window_bounds = array<i64: 2, 1, 256>}, {transform_indices = @transform_3, window_bounds = array<i64: 2, 256, 1024>}, {transform_indices = @transform_4, window_bounds = array<i64: 2, 1, 1024>}, {transform_indices = @transform_5, window_bounds = array<i64: 2, 2, 1024>}]} {
    %c0 = arith.constant 0 : index
    %c0_0 = arith.constant 0 : index
    %c0_1 = arith.constant 0 : index
    %0 = vector.load %arg1[%c0, %c0_0, %c0_1] : memref<2x2x1024xf32, #tpu.memory_space<vmem>>, vector<1x2x1024xf32>
    %1 = vector.shape_cast %0 : vector<1x2x1024xf32> to vector<2x1024xf32>
    %c0_2 = arith.constant 0 : index
    %c0_3 = arith.constant 0 : index
    %c0_4 = arith.constant 0 : index
    %2 = vector.load %arg2[%c0_2, %c0_3, %c0_4] : memref<2x1024x256xbf16, #tpu.memory_space<vmem>>, vector<1x1024x256xbf16>
    %3 = vector.shape_cast %2 : vector<1x1024x256xbf16> to vector<1024x256xbf16>
    %c0_5 = arith.constant 0 : index
    %c0_6 = arith.constant 0 : index
    %c0_7 = arith.constant 0 : index
    %4 = vector.load %arg3[%c0_5, %c0_6, %c0_7] : memref<2x1x256xf32, #tpu.memory_space<vmem>>, vector<1x1x256xf32>
    %5 = vector.shape_cast %4 : vector<1x1x256xf32> to vector<1x256xf32>
    %c0_8 = arith.constant 0 : index
    %c0_9 = arith.constant 0 : index
    %c0_10 = arith.constant 0 : index
    %6 = vector.load %arg4[%c0_8, %c0_9, %c0_10] : memref<2x256x1024xbf16, #tpu.memory_space<vmem>>, vector<1x256x1024xbf16>
    %7 = vector.shape_cast %6 : vector<1x256x1024xbf16> to vector<256x1024xbf16>
    %c0_11 = arith.constant 0 : index
    %c0_12 = arith.constant 0 : index
    %c0_13 = arith.constant 0 : index
    %8 = vector.load %arg5[%c0_11, %c0_12, %c0_13] : memref<2x1x1024xf32, #tpu.memory_space<vmem>>, vector<1x1x1024xf32>
    %9 = vector.shape_cast %8 : vector<1x1x1024xf32> to vector<1x1024xf32>
    %10 = arith.truncf %1 : vector<2x1024xf32> to vector<2x1024xbf16>
    %cst = arith.constant dense<0.000000e+00> : vector<2x256xf32>
    %11 = tpu.matmul %10, %3, %cst {dimension_numbers = #tpu.dot_dimension_numbers<[1], [0], [0], [1], [0, 0, 1, 1], [], []>} : vector<2x1024xbf16>, vector<1024x256xbf16>, vector<2x256xf32> -> vector<2x256xf32>
    %12 = vector.broadcast %5 : vector<1x256xf32> to vector<2x256xf32>
    %13 = arith.addf %11, %12 : vector<2x256xf32>
    %cst_14 = arith.constant 0.000000e+00 : f32
    %14 = vector.broadcast %cst_14 : f32 to vector<2x256xf32>
    %15 = arith.maximumf %13, %14 : vector<2x256xf32>
    %16 = arith.truncf %15 : vector<2x256xf32> to vector<2x256xbf16>
    %cst_15 = arith.constant dense<0.000000e+00> : vector<2x1024xf32>
    %17 = tpu.matmul %16, %7, %cst_15 {dimension_numbers = #tpu.dot_dimension_numbers<[1], [0], [0], [1], [0, 0, 1, 1], [], []>} : vector<2x256xbf16>, vector<256x1024xbf16>, vector<2x1024xf32> -> vector<2x1024xf32>
    %18 = vector.broadcast %9 : vector<1x1024xf32> to vector<2x1024xf32>
    %19 = arith.addf %17, %18 : vector<2x1024xf32>
    %cst_16 = arith.constant 0.000000e+00 : f32
    %20 = vector.broadcast %cst_16 : f32 to vector<2x1024xf32>
    %21 = arith.maximumf %19, %20 : vector<2x1024xf32>
    %22 = arith.negf %21 : vector<2x1024xf32>
    %23 = math.exp %22 : vector<2x1024xf32>
    %cst_17 = arith.constant 1.000000e+00 : f32
    %24 = vector.broadcast %cst_17 : f32 to vector<2x1024xf32>
    %25 = arith.addf %24, %23 : vector<2x1024xf32>
    %26 = arith.divf %24, %25 : vector<2x1024xf32>
    %c0_18 = arith.constant 0 : index
    %c0_19 = arith.constant 0 : index
    %c0_20 = arith.constant 0 : index
    %27 = vector.load %arg6[%c0_18, %c0_19, %c0_20] : memref<2x2x1024xf32, #tpu.memory_space<vmem>>, vector<1x2x1024xf32>
    %28 = vector.shape_cast %27 : vector<1x2x1024xf32> to vector<2x1024xf32>
    %29 = vector.shape_cast %26 : vector<2x1024xf32> to vector<1x2x1024xf32>
    tpu.vector_store %arg6[%c0_18, %c0_19, %c0_20], %29 {strides = array<i32>} : memref<2x2x1024xf32, #tpu.memory_space<vmem>>, vector<1x2x1024xf32>,
    %c1 = arith.constant 1 : index
    %c0_21 = arith.constant 0 : index
    %c0_22 = arith.constant 0 : index
    %30 = vector.load %arg1[%c1, %c0_21, %c0_22] : memref<2x2x1024xf32, #tpu.memory_space<vmem>>, vector<1x2x1024xf32>
    %31 = vector.shape_cast %30 : vector<1x2x1024xf32> to vector<2x1024xf32>
    %c1_23 = arith.constant 1 : index
    %c0_24 = arith.constant 0 : index
    %c0_25 = arith.constant 0 : index
    %32 = vector.load %arg2[%c1_23, %c0_24, %c0_25] : memref<2x1024x256xbf16, #tpu.memory_space<vmem>>, vector<1x1024x256xbf16>
    %33 = vector.shape_cast %32 : vector<1x1024x256xbf16> to vector<1024x256xbf16>
    %c1_26 = arith.constant 1 : index
    %c0_27 = arith.constant 0 : index
    %c0_28 = arith.constant 0 : index
    %34 = vector.load %arg3[%c1_26, %c0_27, %c0_28] : memref<2x1x256xf32, #tpu.memory_space<vmem>>, vector<1x1x256xf32>
    %35 = vector.shape_cast %34 : vector<1x1x256xf32> to vector<1x256xf32>
    %c1_29 = arith.constant 1 : index
    %c0_30 = arith.constant 0 : index
    %c0_31 = arith.constant 0 : index
    %36 = vector.load %arg4[%c1_29, %c0_30, %c0_31] : memref<2x256x1024xbf16, #tpu.memory_space<vmem>>, vector<1x256x1024xbf16>
    %37 = vector.shape_cast %36 : vector<1x256x1024xbf16> to vector<256x1024xbf16>
    %c1_32 = arith.constant 1 : index
    %c0_33 = arith.constant 0 : index
    %c0_34 = arith.constant 0 : index
    %38 = vector.load %arg5[%c1_32, %c0_33, %c0_34] : memref<2x1x1024xf32, #tpu.memory_space<vmem>>, vector<1x1x1024xf32>
    %39 = vector.shape_cast %38 : vector<1x1x1024xf32> to vector<1x1024xf32>
    %40 = arith.truncf %31 : vector<2x1024xf32> to vector<2x1024xbf16>
    %cst_35 = arith.constant dense<0.000000e+00> : vector<2x256xf32>
    %41 = tpu.matmul %40, %33, %cst_35 {dimension_numbers = #tpu.dot_dimension_numbers<[1], [0], [0], [1], [0, 0, 1, 1], [], []>} : vector<2x1024xbf16>, vector<1024x256xbf16>, vector<2x256xf32> -> vector<2x256xf32>
    %42 = vector.broadcast %35 : vector<1x256xf32> to vector<2x256xf32>
    %43 = arith.addf %41, %42 : vector<2x256xf32>
    %cst_36 = arith.constant 0.000000e+00 : f32
    %44 = vector.broadcast %cst_36 : f32 to vector<2x256xf32>
    %45 = arith.maximumf %43, %44 : vector<2x256xf32>
    %46 = arith.truncf %45 : vector<2x256xf32> to vector<2x256xbf16>
    %cst_37 = arith.constant dense<0.000000e+00> : vector<2x1024xf32>
    %47 = tpu.matmul %46, %37, %cst_37 {dimension_numbers = #tpu.dot_dimension_numbers<[1], [0], [0], [1], [0, 0, 1, 1], [], []>} : vector<2x256xbf16>, vector<256x1024xbf16>, vector<2x1024xf32> -> vector<2x1024xf32>
    %48 = vector.broadcast %39 : vector<1x1024xf32> to vector<2x1024xf32>
    %49 = arith.addf %47, %48 : vector<2x1024xf32>
    %cst_38 = arith.constant 0.000000e+00 : f32
    %50 = vector.broadcast %cst_38 : f32 to vector<2x1024xf32>
    %51 = arith.maximumf %49, %50 : vector<2x1024xf32>
    %52 = arith.negf %51 : vector<2x1024xf32>
    %53 = math.exp %52 : vector<2x1024xf32>
    %cst_39 = arith.constant 1.000000e+00 : f32
    %54 = vector.broadcast %cst_39 : f32 to vector<2x1024xf32>
    %55 = arith.addf %54, %53 : vector<2x1024xf32>
    %56 = arith.divf %54, %55 : vector<2x1024xf32>
    %c1_40 = arith.constant 1 : index
    %c0_41 = arith.constant 0 : index
    %c0_42 = arith.constant 0 : index
    %57 = vector.load %arg6[%c1_40, %c0_41, %c0_42] : memref<2x2x1024xf32, #tpu.memory_space<vmem>>, vector<1x2x1024xf32>
    %58 = vector.shape_cast %57 : vector<1x2x1024xf32> to vector<2x1024xf32>
    %59 = vector.shape_cast %56 : vector<2x1024xf32> to vector<1x2x1024xf32>
    tpu.vector_store %arg6[%c1_40, %c0_41, %c0_42], %59 {strides = array<i32>} : memref<2x2x1024xf32, #tpu.memory_space<vmem>>, vector<1x2x1024xf32>,
    return
  }
  func.func @transform_0(%arg0: i32) -> (i32, i32, i32) {
    %c0_i32 = arith.constant 0 : i32
    %c0_i32_0 = arith.constant 0 : i32
    %c0_i32_1 = arith.constant 0 : i32
    return %arg0, %c0_i32, %c0_i32_0 : i32, i32, i32
  }
  func.func @transform_1(%arg0: i32) -> (i32, i32, i32) {
    %c0_i32 = arith.constant 0 : i32
    %c0_i32_0 = arith.constant 0 : i32
    %c0_i32_1 = arith.constant 0 : i32
    return %arg0, %c0_i32, %c0_i32_0 : i32, i32, i32
  }
  func.func @transform_2(%arg0: i32) -> (i32, i32, i32) {
    %c0_i32 = arith.constant 0 : i32
    %c0_i32_0 = arith.constant 0 : i32
    %c0_i32_1 = arith.constant 0 : i32
    return %arg0, %c0_i32, %c0_i32_0 : i32, i32, i32
  }
  func.func @transform_3(%arg0: i32) -> (i32, i32, i32) {
    %c0_i32 = arith.constant 0 : i32
    %c0_i32_0 = arith.constant 0 : i32
    %c0_i32_1 = arith.constant 0 : i32
    return %arg0, %c0_i32, %c0_i32_0 : i32, i32, i32
  }
  func.func @transform_4(%arg0: i32) -> (i32, i32, i32) {
    %c0_i32 = arith.constant 0 : i32
    %c0_i32_0 = arith.constant 0 : i32
    %c0_i32_1 = arith.constant 0 : i32
    return %arg0, %c0_i32, %c0_i32_0 : i32, i32, i32
  }
  func.func @transform_5(%arg0: i32) -> (i32, i32, i32) {
    %c0_i32 = arith.constant 0 : i32
    %c0_i32_0 = arith.constant 0 : i32
    %c0_i32_1 = arith.constant 0 : i32
    return %arg0, %c0_i32, %c0_i32_0 : i32, i32, i32
  }
}

</mosaic_0001>

<llo_original>
// kernel: get_stat_forward.1
$region0: #{get_stat_forward.1}
  #allocation0 [shape = 'u32[]', space=smem, size = 0x4, offset = 0x4, fixed_abs, tag = 'smem constant byte address 0x4 - core index']
  #allocation1 [shape = 'u32[144,128]{1,0:T(1,128)}', space=vmem, size = 0x12000, scoped, tag = 'internal scratch']
  %s0 = inlined_call_operand.vmem [shape: f32[2,2,1024], index: 0, kind: input, shape index: {}]
  %s1 = inlined_call_operand.hbm [shape: bf16[2,1024,256], index: 1, kind: input, shape index: {}]
  %s2 = inlined_call_operand.vmem [shape: f32[2,1,256], index: 2, kind: input, shape index: {}]
  %s3 = inlined_call_operand.hbm [shape: bf16[2,256,1024], index: 3, kind: input, shape index: {}]
  %s4 = inlined_call_operand.vmem [shape: f32[2,1,1024], index: 4, kind: input, shape index: {}]
  %s5 = inlined_call_operand.vmem [shape: f32[2,2,1024], index: 5, kind: output, shape index: {}]
  %s6 = sld [smem:[#allocation0]]
  $region38: #{get_stat_forward.1} parent=0
    _
  %s8 = ssub.s32 1, %s6
  %s9 = scalar_select 0, %s8, %s6
  $region1: #{get_stat_forward.1} parent=0
    #allocation2 [shape = 'u8[1048576]{0}', space=vmem, size = 0x100000, scoped, tag = 'input window, operand 1, single buffered']
    #allocation3 [shape = 's32[1]{0}', space=sflag, size = 0x4, scoped, tag = 'scoped memory for get_stat_forward.1']
    #allocation4 [shape = 'u8[1048576]{0}', space=vmem, size = 0x100000, scoped, tag = 'input window, operand 3, single buffered']
    #allocation5 [shape = 's32[1]{0}', space=sflag, size = 0x4, scoped, tag = 'scoped memory for get_stat_forward.1']
    %10 = vsyncpa [#allocation3], 0
    %11 = vsyncpa [#allocation5], 0
    // Predicated region
    $region2: #{get_stat_forward.1} parent=1 // pred_check
      _
    $region3: #{get_stat_forward.1} parent=1 // pred_check_branch
      %13 = sbr.rel (0) target = $region5
    $region4: #{get_stat_forward.1} parent=1 // pred_region
      _
    $region5: #{get_stat_forward.1} parent=1 // pred_fallthru
      _
    // Predicated region
    $region6: #{get_stat_forward.1} parent=1 // pred_check
      _
    $region7: #{get_stat_forward.1} parent=1 // pred_check_branch
      %15 = sbr.rel (0) target = $region9
    $region8: #{get_stat_forward.1} parent=1 // pred_region
      %s17 = ssub.s32 32768, 32768
      %18 = vsyncadd [#allocation3], %s17
      %s19 = sshll.u32 [#allocation2], 4
      %s20 = int_to_ptr.vmem [resolvable:$true] %s19
      %25 = dma.hbm_to_vmem [thread:$0]  %s1, 32768, %s20, [#allocation3], 128, 128, 8
    $region9: #{get_stat_forward.1} parent=1 // pred_fallthru
      _
    // Predicated region
    $region10: #{get_stat_forward.1} parent=1 // pred_check
      _
    $region11: #{get_stat_forward.1} parent=1 // pred_check_branch
      %27 = sbr.rel (0) target = $region13
    $region12: #{get_stat_forward.1} parent=1 // pred_region
      _
    $region13: #{get_stat_forward.1} parent=1 // pred_fallthru
      _
    // Predicated region
    $region14: #{get_stat_forward.1} parent=1 // pred_check
      _
    $region15: #{get_stat_forward.1} parent=1 // pred_check_branch
      %29 = sbr.rel (0) target = $region17
    $region16: #{get_stat_forward.1} parent=1 // pred_region
      %s31 = ssub.s32 32768, 32768
      %32 = vsyncadd [#allocation5], %s31
      %s33 = sshll.u32 [#allocation4], 4
      %s34 = int_to_ptr.vmem [resolvable:$true] %s33
      %39 = dma.hbm_to_vmem [thread:$0]  %s3, 32768, %s34, [#allocation5], 512, 512, 32
    $region17: #{get_stat_forward.1} parent=1 // pred_fallthru
      _
    // Predicated region
    $region18: #{get_stat_forward.1} parent=1 // pred_check
      _
    $region19: #{get_stat_forward.1} parent=1 // pred_check_branch
      %41 = sbr.rel (0) target = $region21
    $region20: #{get_stat_forward.1} parent=1 // pred_region
      _
    $region21: #{get_stat_forward.1} parent=1 // pred_fallthru
      _
    // Predicated region
    $region22: #{get_stat_forward.1} parent=1 // pred_check
      _
    $region23: #{get_stat_forward.1} parent=1 // pred_check_branch
      %43 = sbr.rel (0) target = $region25
    $region24: #{get_stat_forward.1} parent=1 // pred_region
      %44 = dma.done [#allocation3], 32768
    $region25: #{get_stat_forward.1} parent=1 // pred_fallthru
      _
    // Predicated region
    $region26: #{get_stat_forward.1} parent=1 // pred_check
      _
    $region27: #{get_stat_forward.1} parent=1 // pred_check_branch
      %46 = sbr.rel (0) target = $region29
    $region28: #{get_stat_forward.1} parent=1 // pred_region
      %47 = dma.done [#allocation5], 32768
    $region29: #{get_stat_forward.1} parent=1 // pred_fallthru
      _
    %v48 = vld [vmem:[%s0] sm:$0xff]
    %v49 = vld [vmem:[%s0 + $0x8] sm:$0xff]
    %v50 = vld [vmem:[#allocation2] sm:$0xff]
    %v51 = vld [vmem:[#allocation2 + $0x8] sm:$0xff]
    %v52 = vld [vmem:[#allocation2 + $0x10] sm:$0xff]
    %v53 = vld [vmem:[#allocation2 + $0x18] sm:$0xff]
    %v54 = vld [vmem:[#allocation2 + $0x20] sm:$0xff]
    %v55 = vld [vmem:[#allocation2 + $0x28] sm:$0xff]
    %v56 = vld [vmem:[#allocation2 + $0x30] sm:$0xff]
    %v57 = vld [vmem:[#allocation2 + $0x38] sm:$0xff]
    %v58 = vld [vmem:[#allocation2 + $0x40] sm:$0xff]
    %v59 = vld [vmem:[#allocation2 + $0x48] sm:$0xff]
    %v60 = vld [vmem:[#allocation2 + $0x50] sm:$0xff]
    %v61 = vld [vmem:[#allocation2 + $0x58] sm:$0xff]
    %v62 = vld [vmem:[#allocation2 + $0x60] sm:$0xff]
    %v63 = vld [vmem:[#allocation2 + $0x68] sm:$0xff]
    %v64 = vld [vmem:[#allocation2 + $0x70] sm:$0xff]
    %v65 = vld [vmem:[#allocation2 + $0x78] sm:$0xff]
    %v66 = vld [vmem:[#allocation2 + $0x80] sm:$0xff]
    %v67 = vld [vmem:[#allocation2 + $0x88] sm:$0xff]
    %v68 = vld [vmem:[#allocation2 + $0x90] sm:$0xff]
    %v69 = vld [vmem:[#allocation2 + $0x98] sm:$0xff]
    %v70 = vld [vmem:[#allocation2 + $0xa0] sm:$0xff]
    %v71 = vld [vmem:[#allocation2 + $0xa8] sm:$0xff]
    %v72 = vld [vmem:[#allocation2 + $0xb0] sm:$0xff]
    %v73 = vld [vmem:[#allocation2 + $0xb8] sm:$0xff]
    %v74 = vld [vmem:[#allocation2 + $0xc0] sm:$0xff]
    %v75 = vld [vmem:[#allocation2 + $0xc8] sm:$0xff]
    %v76 = vld [vmem:[#allocation2 + $0xd0] sm:$0xff]
    %v77 = vld [vmem:[#allocation2 + $0xd8] sm:$0xff]
    %v78 = vld [vmem:[#allocation2 + $0xe0] sm:$0xff]
    %v79 = vld [vmem:[#allocation2 + $0xe8] sm:$0xff]
    %v80 = vld [vmem:[#allocation2 + $0xf0] sm:$0xff]
    %v81 = vld [vmem:[#allocation2 + $0xf8] sm:$0xff]
    %v82 = vld [vmem:[#allocation2 + $0x100] sm:$0xff]
    %v83 = vld [vmem:[#allocation2 + $0x108] sm:$0xff]
    %v84 = vld [vmem:[#allocation2 + $0x110] sm:$0xff]
    %v85 = vld [vmem:[#allocation2 + $0x118] sm:$0xff]
    %v86 = vld [vmem:[#allocation2 + $0x120] sm:$0xff]
    %v87 = vld [vmem:[#allocation2 + $0x128] sm:$0xff]
    %v88 = vld [vmem:[#allocation2 + $0x130] sm:$0xff]
    %v89 = vld [vmem:[#allocation2 + $0x138] sm:$0xff]
    %v90 = vld [vmem:[#allocation2 + $0x140] sm:$0xff]
    %v91 = vld [vmem:[#allocation2 + $0x148] sm:$0xff]
    %v92 = vld [vmem:[#allocation2 + $0x150] sm:$0xff]
    %v93 = vld [vmem:[#allocation2 + $0x158] sm:$0xff]
    %v94 = vld [vmem:[#allocation2 + $0x160] sm:$0xff]
    %v95 = vld [vmem:[#allocation2 + $0x168] sm:$0xff]
    %v96 = vld [vmem:[#allocation2 + $0x170] sm:$0xff]
    %v97 = vld [vmem:[#allocation2 + $0x178] sm:$0xff]
    %v98 = vld [vmem:[#allocation2 + $0x180] sm:$0xff]
    %v99 = vld [vmem:[#allocation2 + $0x188] sm:$0xff]
    %v100 = vld [vmem:[#allocation2 + $0x190] sm:$0xff]
    %v101 = vld [vmem:[#allocation2 + $0x198] sm:$0xff]
    %v102 = vld [vmem:[#allocation2 + $0x1a0] sm:$0xff]
    %v103 = vld [vmem:[#allocation2 + $0x1a8] sm:$0xff]
    %v104 = vld [vmem:[#allocation2 + $0x1b0] sm:$0xff]
    %v105 = vld [vmem:[#allocation2 + $0x1b8] sm:$0xff]
    %v106 = vld [vmem:[#allocation2 + $0x1c0] sm:$0xff]
    %v107 = vld [vmem:[#allocation2 + $0x1c8] sm:$0xff]
    %v108 = vld [vmem:[#allocation2 + $0x1d0] sm:$0xff]
    %v109 = vld [vmem:[#allocation2 + $0x1d8] sm:$0xff]
    %v110 = vld [vmem:[#allocation2 + $0x1e0] sm:$0xff]
    %v111 = vld [vmem:[#allocation2 + $0x1e8] sm:$0xff]
    %v112 = vld [vmem:[#allocation2 + $0x1f0] sm:$0xff]
    %v113 = vld [vmem:[#allocation2 + $0x1f8] sm:$0xff]
    %v114 = vld [vmem:[#allocation2 + $0x200] sm:$0xff]
    %v115 = vld [vmem:[#allocation2 + $0x208] sm:$0xff]
    %v116 = vld [vmem:[#allocation2 + $0x210] sm:$0xff]
    %v117 = vld [vmem:[#allocation2 + $0x218] sm:$0xff]
    %v118 = vld [vmem:[#allocation2 + $0x220] sm:$0xff]
    %v119 = vld [vmem:[#allocation2 + $0x228] sm:$0xff]
    %v120 = vld [vmem:[#allocation2 + $0x230] sm:$0xff]
    %v121 = vld [vmem:[#allocation2 + $0x238] sm:$0xff]
    %v122 = vld [vmem:[#allocation2 + $0x240] sm:$0xff]
    %v123 = vld [vmem:[#allocation2 + $0x248] sm:$0xff]
    %v124 = vld [vmem:[#allocation2 + $0x250] sm:$0xff]
    %v125 = vld [vmem:[#allocation2 + $0x258] sm:$0xff]
    %v126 = vld [vmem:[#allocation2 + $0x260] sm:$0xff]
    %v127 = vld [vmem:[#allocation2 + $0x268] sm:$0xff]
    %v128 = vld [vmem:[#allocation2 + $0x270] sm:$0xff]
    %v129 = vld [vmem:[#allocation2 + $0x278] sm:$0xff]
    %v130 = vld [vmem:[#allocation2 + $0x280] sm:$0xff]
    %v131 = vld [vmem:[#allocation2 + $0x288] sm:$0xff]
    %v132 = vld [vmem:[#allocation2 + $0x290] sm:$0xff]
    %v133 = vld [vmem:[#allocation2 + $0x298] sm:$0xff]
    %v134 = vld [vmem:[#allocation2 + $0x2a0] sm:$0xff]
    %v135 = vld [vmem:[#allocation2 + $0x2a8] sm:$0xff]
    %v136 = vld [vmem:[#allocation2 + $0x2b0] sm:$0xff]
    %v137 = vld [vmem:[#allocation2 + $0x2b8] sm:$0xff]
    %v138 = vld [vmem:[#allocation2 + $0x2c0] sm:$0xff]
    %v139 = vld [vmem:[#allocation2 + $0x2c8] sm:$0xff]
    %v140 = vld [vmem:[#allocation2 + $0x2d0] sm:$0xff]
    %v141 = vld [vmem:[#allocation2 + $0x2d8] sm:$0xff]
    %v142 = vld [vmem:[#allocation2 + $0x2e0] sm:$0xff]
    %v143 = vld [vmem:[#allocation2 + $0x2e8] sm:$0xff]
    %v144 = vld [vmem:[#allocation2 + $0x2f0] sm:$0xff]
    %v145 = vld [vmem:[#allocation2 + $0x2f8] sm:$0xff]
    %v146 = vld [vmem:[#allocation2 + $0x300] sm:$0xff]
    %v147 = vld [vmem:[#allocation2 + $0x308] sm:$0xff]
    %v148 = vld [vmem:[#allocation2 + $0x310] sm:$0xff]
    %v149 = vld [vmem:[#allocation2 + $0x318] sm:$0xff]
    %v150 = vld [vmem:[#allocation2 + $0x320] sm:$0xff]
    %v151 = vld [vmem:[#allocation2 + $0x328] sm:$0xff]
    %v152 = vld [vmem:[#allocation2 + $0x330] sm:$0xff]
    %v153 = vld [vmem:[#allocation2 + $0x338] sm:$0xff]
    %v154 = vld [vmem:[#allocation2 + $0x340] sm:$0xff]
    %v155 = vld [vmem:[#allocation2 + $0x348] sm:$0xff]
    %v156 = vld [vmem:[#allocation2 + $0x350] sm:$0xff]
    %v157 = vld [vmem:[#allocation2 + $0x358] sm:$0xff]
    %v158 = vld [vmem:[#allocation2 + $0x360] sm:$0xff]
    %v159 = vld [vmem:[#allocation2 + $0x368] sm:$0xff]
    %v160 = vld [vmem:[#allocation2 + $0x370] sm:$0xff]
    %v161 = vld [vmem:[#allocation2 + $0x378] sm:$0xff]
    %v162 = vld [vmem:[#allocation2 + $0x380] sm:$0xff]
    %v163 = vld [vmem:[#allocation2 + $0x388] sm:$0xff]
    %v164 = vld [vmem:[#allocation2 + $0x390] sm:$0xff]
    %v165 = vld [vmem:[#allocation2 + $0x398] sm:$0xff]
    %v166 = vld [vmem:[#allocation2 + $0x3a0] sm:$0xff]
    %v167 = vld [vmem:[#allocation2 + $0x3a8] sm:$0xff]
    %v168 = vld [vmem:[#allocation2 + $0x3b0] sm:$0xff]
    %v169 = vld [vmem:[#allocation2 + $0x3b8] sm:$0xff]
    %v170 = vld [vmem:[#allocation2 + $0x3c0] sm:$0xff]
    %v171 = vld [vmem:[#allocation2 + $0x3c8] sm:$0xff]
    %v172 = vld [vmem:[#allocation2 + $0x3d0] sm:$0xff]
    %v173 = vld [vmem:[#allocation2 + $0x3d8] sm:$0xff]
    %v174 = vld [vmem:[#allocation2 + $0x3e0] sm:$0xff]
    %v175 = vld [vmem:[#allocation2 + $0x3e8] sm:$0xff]
    %v176 = vld [vmem:[#allocation2 + $0x3f0] sm:$0xff]
    %v177 = vld [vmem:[#allocation2 + $0x3f8] sm:$0xff]
    %v178 = vld [vmem:[%s2] sm:$0x3]
    %v179 = vld [vmem:[#allocation4] sm:$0xff]
    %v180 = vld [vmem:[#allocation4 + $0x8] sm:$0xff]
    %v181 = vld [vmem:[#allocation4 + $0x10] sm:$0xff]
    %v182 = vld [vmem:[#allocation4 + $0x18] sm:$0xff]
    %v183 = vld [vmem:[#allocation4 + $0x20] sm:$0xff]
    %v184 = vld [vmem:[#allocation4 + $0x28] sm:$0xff]
    %v185 = vld [vmem:[#allocation4 + $0x30] sm:$0xff]
    %v186 = vld [vmem:[#allocation4 + $0x38] sm:$0xff]
    %v187 = vld [vmem:[#allocation4 + $0x40] sm:$0xff]
    %v188 = vld [vmem:[#allocation4 + $0x48] sm:$0xff]
    %v189 = vld [vmem:[#allocation4 + $0x50] sm:$0xff]
    %v190 = vld [vmem:[#allocation4 + $0x58] sm:$0xff]
    %v191 = vld [vmem:[#allocation4 + $0x60] sm:$0xff]
    %v192 = vld [vmem:[#allocation4 + $0x68] sm:$0xff]
    %v193 = vld [vmem:[#allocation4 + $0x70] sm:$0xff]
    %v194 = vld [vmem:[#allocation4 + $0x78] sm:$0xff]
    %v195 = vld [vmem:[#allocation4 + $0x80] sm:$0xff]
    %v196 = vld [vmem:[#allocation4 + $0x88] sm:$0xff]
    %v197 = vld [vmem:[#allocation4 + $0x90] sm:$0xff]
    %v198 = vld [vmem:[#allocation4 + $0x98] sm:$0xff]
    %v199 = vld [vmem:[#allocation4 + $0xa0] sm:$0xff]
    %v200 = vld [vmem:[#allocation4 + $0xa8] sm:$0xff]
    %v201 = vld [vmem:[#allocation4 + $0xb0] sm:$0xff]
    %v202 = vld [vmem:[#allocation4 + $0xb8] sm:$0xff]
    %v203 = vld [vmem:[#allocation4 + $0xc0] sm:$0xff]
    %v204 = vld [vmem:[#allocation4 + $0xc8] sm:$0xff]
    %v205 = vld [vmem:[#allocation4 + $0xd0] sm:$0xff]
    %v206 = vld [vmem:[#allocation4 + $0xd8] sm:$0xff]
    %v207 = vld [vmem:[#allocation4 + $0xe0] sm:$0xff]
    %v208 = vld [vmem:[#allocation4 + $0xe8] sm:$0xff]
    %v209 = vld [vmem:[#allocation4 + $0xf0] sm:$0xff]
    %v210 = vld [vmem:[#allocation4 + $0xf8] sm:$0xff]
    %v211 = vld [vmem:[#allocation4 + $0x100] sm:$0xff]
    %v212 = vld [vmem:[#allocation4 + $0x108] sm:$0xff]
    %v213 = vld [vmem:[#allocation4 + $0x110] sm:$0xff]
    %v214 = vld [vmem:[#allocation4 + $0x118] sm:$0xff]
    %v215 = vld [vmem:[#allocation4 + $0x120] sm:$0xff]
    %v216 = vld [vmem:[#allocation4 + $0x128] sm:$0xff]
    %v217 = vld [vmem:[#allocation4 + $0x130] sm:$0xff]
    %v218 = vld [vmem:[#allocation4 + $0x138] sm:$0xff]
    %v219 = vld [vmem:[#allocation4 + $0x140] sm:$0xff]
    %v220 = vld [vmem:[#allocation4 + $0x148] sm:$0xff]
    %v221 = vld [vmem:[#allocation4 + $0x150] sm:$0xff]
    %v222 = vld [vmem:[#allocation4 + $0x158] sm:$0xff]
    %v223 = vld [vmem:[#allocation4 + $0x160] sm:$0xff]
    %v224 = vld [vmem:[#allocation4 + $0x168] sm:$0xff]
    %v225 = vld [vmem:[#allocation4 + $0x170] sm:$0xff]
    %v226 = vld [vmem:[#allocation4 + $0x178] sm:$0xff]
    %v227 = vld [vmem:[#allocation4 + $0x180] sm:$0xff]
    %v228 = vld [vmem:[#allocation4 + $0x188] sm:$0xff]
    %v229 = vld [vmem:[#allocation4 + $0x190] sm:$0xff]
    %v230 = vld [vmem:[#allocation4 + $0x198] sm:$0xff]
    %v231 = vld [vmem:[#allocation4 + $0x1a0] sm:$0xff]
    %v232 = vld [vmem:[#allocation4 + $0x1a8] sm:$0xff]
    %v233 = vld [vmem:[#allocation4 + $0x1b0] sm:$0xff]
    %v234 = vld [vmem:[#allocation4 + $0x1b8] sm:$0xff]
    %v235 = vld [vmem:[#allocation4 + $0x1c0] sm:$0xff]
    %v236 = vld [vmem:[#allocation4 + $0x1c8] sm:$0xff]
    %v237 = vld [vmem:[#allocation4 + $0x1d0] sm:$0xff]
    %v238 = vld [vmem:[#allocation4 + $0x1d8] sm:$0xff]
    %v239 = vld [vmem:[#allocation4 + $0x1e0] sm:$0xff]
    %v240 = vld [vmem:[#allocation4 + $0x1e8] sm:$0xff]
    %v241 = vld [vmem:[#allocation4 + $0x1f0] sm:$0xff]
    %v242 = vld [vmem:[#allocation4 + $0x1f8] sm:$0xff]
    %v243 = vld [vmem:[#allocation4 + $0x200] sm:$0xff]
    %v244 = vld [vmem:[#allocation4 + $0x208] sm:$0xff]
    %v245 = vld [vmem:[#allocation4 + $0x210] sm:$0xff]
    %v246 = vld [vmem:[#allocation4 + $0x218] sm:$0xff]
    %v247 = vld [vmem:[#allocation4 + $0x220] sm:$0xff]
    %v248 = vld [vmem:[#allocation4 + $0x228] sm:$0xff]
    %v249 = vld [vmem:[#allocation4 + $0x230] sm:$0xff]
    %v250 = vld [vmem:[#allocation4 + $0x238] sm:$0xff]
    %v251 = vld [vmem:[#allocation4 + $0x240] sm:$0xff]
    %v252 = vld [vmem:[#allocation4 + $0x248] sm:$0xff]
    %v253 = vld [vmem:[#allocation4 + $0x250] sm:$0xff]
    %v254 = vld [vmem:[#allocation4 + $0x258] sm:$0xff]
    %v255 = vld [vmem:[#allocation4 + $0x260] sm:$0xff]
    %v256 = vld [vmem:[#allocation4 + $0x268] sm:$0xff]
    %v257 = vld [vmem:[#allocation4 + $0x270] sm:$0xff]
    %v258 = vld [vmem:[#allocation4 + $0x278] sm:$0xff]
    %v259 = vld [vmem:[#allocation4 + $0x280] sm:$0xff]
    %v260 = vld [vmem:[#allocation4 + $0x288] sm:$0xff]
    %v261 = vld [vmem:[#allocation4 + $0x290] sm:$0xff]
    %v262 = vld [vmem:[#allocation4 + $0x298] sm:$0xff]
    %v263 = vld [vmem:[#allocation4 + $0x2a0] sm:$0xff]
    %v264 = vld [vmem:[#allocation4 + $0x2a8] sm:$0xff]
    %v265 = vld [vmem:[#allocation4 + $0x2b0] sm:$0xff]
    %v266 = vld [vmem:[#allocation4 + $0x2b8] sm:$0xff]
    %v267 = vld [vmem:[#allocation4 + $0x2c0] sm:$0xff]
    %v268 = vld [vmem:[#allocation4 + $0x2c8] sm:$0xff]
    %v269 = vld [vmem:[#allocation4 + $0x2d0] sm:$0xff]
    %v270 = vld [vmem:[#allocation4 + $0x2d8] sm:$0xff]
    %v271 = vld [vmem:[#allocation4 + $0x2e0] sm:$0xff]
    %v272 = vld [vmem:[#allocation4 + $0x2e8] sm:$0xff]
    %v273 = vld [vmem:[#allocation4 + $0x2f0] sm:$0xff]
    %v274 = vld [vmem:[#allocation4 + $0x2f8] sm:$0xff]
    %v275 = vld [vmem:[#allocation4 + $0x300] sm:$0xff]
    %v276 = vld [vmem:[#allocation4 + $0x308] sm:$0xff]
    %v277 = vld [vmem:[#allocation4 + $0x310] sm:$0xff]
    %v278 = vld [vmem:[#allocation4 + $0x318] sm:$0xff]
    %v279 = vld [vmem:[#allocation4 + $0x320] sm:$0xff]
    %v280 = vld [vmem:[#allocation4 + $0x328] sm:$0xff]
    %v281 = vld [vmem:[#allocation4 + $0x330] sm:$0xff]
    %v282 = vld [vmem:[#allocation4 + $0x338] sm:$0xff]
    %v283 = vld [vmem:[#allocation4 + $0x340] sm:$0xff]
    %v284 = vld [vmem:[#allocation4 + $0x348] sm:$0xff]
    %v285 = vld [vmem:[#allocation4 + $0x350] sm:$0xff]
    %v286 = vld [vmem:[#allocation4 + $0x358] sm:$0xff]
    %v287 = vld [vmem:[#allocation4 + $0x360] sm:$0xff]
    %v288 = vld [vmem:[#allocation4 + $0x368] sm:$0xff]
    %v289 = vld [vmem:[#allocation4 + $0x370] sm:$0xff]
    %v290 = vld [vmem:[#allocation4 + $0x378] sm:$0xff]
    %v291 = vld [vmem:[#allocation4 + $0x380] sm:$0xff]
    %v292 = vld [vmem:[#allocation4 + $0x388] sm:$0xff]
    %v293 = vld [vmem:[#allocation4 + $0x390] sm:$0xff]
    %v294 = vld [vmem:[#allocation4 + $0x398] sm:$0xff]
    %v295 = vld [vmem:[#allocation4 + $0x3a0] sm:$0xff]
    %v296 = vld [vmem:[#allocation4 + $0x3a8] sm:$0xff]
    %v297 = vld [vmem:[#allocation4 + $0x3b0] sm:$0xff]
    %v298 = vld [vmem:[#allocation4 + $0x3b8] sm:$0xff]
    %v299 = vld [vmem:[#allocation4 + $0x3c0] sm:$0xff]
    %v300 = vld [vmem:[#allocation4 + $0x3c8] sm:$0xff]
    %v301 = vld [vmem:[#allocation4 + $0x3d0] sm:$0xff]
    %v302 = vld [vmem:[#allocation4 + $0x3d8] sm:$0xff]
    %v303 = vld [vmem:[#allocation4 + $0x3e0] sm:$0xff]
    %v304 = vld [vmem:[#allocation4 + $0x3e8] sm:$0xff]
    %v305 = vld [vmem:[#allocation4 + $0x3f0] sm:$0xff]
    %v306 = vld [vmem:[#allocation4 + $0x3f8] sm:$0xff]
    %v307 = vld [vmem:[%s4] sm:$0xff]
    %v310 = vcombine.high %v48, %v48
    %v312 = vunpack.c.l.s4 1983009808
    %v313 = vunpack.c.0.s8 %v312
    %v314 = vlaneseq
    %v315 = vshrl.u32 %v314, 7
    %v316 = vsub.s32 %v313, %v315
    %v317 = vrot.slane %v48, %v316
    %v319 = vunpack.c.l.s4 1983009808
    %v320 = vunpack.c.0.s8 %v319
    %v321 = vlaneseq
    %v322 = vshrl.u32 %v321, 7
    %v323 = vsub.s32 %v320, %v322
    %v324 = vrot.slane %v310, %v323
    %v325 = vcombine.high %v317, %v317
    %v326 = vcombine.high %v324, %v324
    %v327 = vcombine.high %v49, %v49
    %v329 = vunpack.c.l.s4 1983009808
    %v330 = vunpack.c.0.s8 %v329
    %v331 = vlaneseq
    %v332 = vshrl.u32 %v331, 7
    %v333 = vsub.s32 %v330, %v332
    %v334 = vrot.slane %v49, %v333
    %v336 = vunpack.c.l.s4 1983009808
    %v337 = vunpack.c.0.s8 %v336
    %v338 = vlaneseq
    %v339 = vshrl.u32 %v338, 7
    %v340 = vsub.s32 %v337, %v339
    %v341 = vrot.slane %v327, %v340
    %v342 = vcombine.high %v334, %v334
    %v343 = vcombine.high %v341, %v341
    %v352 = vpack.c.bf16 %v317, %v317
    %v353 = vpack.c.bf16 %v325, %v325
    %v354 = vpack.c.bf16 %v324, %v324
    %v355 = vpack.c.bf16 %v326, %v326
    %v356 = vpack.c.bf16 %v334, %v334
    %v357 = vpack.c.bf16 %v342, %v342
    %v358 = vpack.c.bf16 %v341, %v341
    %v359 = vpack.c.bf16 %v343, %v343
    %v361 = vlaneseq
    %v362 = vshrl.u32 %v361, 7
    %v363 = vsub.s32 0, %v362
    %v364 = vrot.slane %v178, %v363
    %v365 = vlaneseq
    %v366 = vshrl.u32 %v365, 7
    %v367 = vsub.s32 1, %v366
    %v368 = vrot.slane %v178, %v367
    %v499 = vunpack.c.l.b16 %v50
    %v500 = vunpack.c.h.b16 %v50
    %v501 = vunpack.c.l.b16 %v51
    %v502 = vunpack.c.h.b16 %v51
    %v503 = vunpack.c.l.b16 %v52
    %v504 = vunpack.c.h.b16 %v52
    %v505 = vunpack.c.l.b16 %v53
    %v506 = vunpack.c.h.b16 %v53
    %v507 = vunpack.c.l.b16 %v54
    %v508 = vunpack.c.h.b16 %v54
    %v509 = vunpack.c.l.b16 %v55
    %v510 = vunpack.c.h.b16 %v55
    %v511 = vunpack.c.l.b16 %v56
    %v512 = vunpack.c.h.b16 %v56
    %v513 = vunpack.c.l.b16 %v57
    %v514 = vunpack.c.h.b16 %v57
    %v515 = vunpack.c.l.b16 %v58
    %v516 = vunpack.c.h.b16 %v58
    %v517 = vunpack.c.l.b16 %v59
    %v518 = vunpack.c.h.b16 %v59
    %v519 = vunpack.c.l.b16 %v60
    %v520 = vunpack.c.h.b16 %v60
    %v521 = vunpack.c.l.b16 %v61
    %v522 = vunpack.c.h.b16 %v61
    %v523 = vunpack.c.l.b16 %v62
    %v524 = vunpack.c.h.b16 %v62
    %v525 = vunpack.c.l.b16 %v63
    %v526 = vunpack.c.h.b16 %v63
    %v527 = vunpack.c.l.b16 %v64
    %v528 = vunpack.c.h.b16 %v64
    %v529 = vunpack.c.l.b16 %v65
    %v530 = vunpack.c.h.b16 %v65
    %v531 = vunpack.c.l.b16 %v66
    %v532 = vunpack.c.h.b16 %v66
    %v533 = vunpack.c.l.b16 %v67
    %v534 = vunpack.c.h.b16 %v67
    %v535 = vunpack.c.l.b16 %v68
    %v536 = vunpack.c.h.b16 %v68
    %v537 = vunpack.c.l.b16 %v69
    %v538 = vunpack.c.h.b16 %v69
    %v539 = vunpack.c.l.b16 %v70
    %v540 = vunpack.c.h.b16 %v70
    %v541 = vunpack.c.l.b16 %v71
    %v542 = vunpack.c.h.b16 %v71
    %v543 = vunpack.c.l.b16 %v72
    %v544 = vunpack.c.h.b16 %v72
    %v545 = vunpack.c.l.b16 %v73
    %v546 = vunpack.c.h.b16 %v73
    %v547 = vunpack.c.l.b16 %v74
    %v548 = vunpack.c.h.b16 %v74
    %v549 = vunpack.c.l.b16 %v75
    %v550 = vunpack.c.h.b16 %v75
    %v551 = vunpack.c.l.b16 %v76
    %v552 = vunpack.c.h.b16 %v76
    %v553 = vunpack.c.l.b16 %v77
    %v554 = vunpack.c.h.b16 %v77
    %v555 = vunpack.c.l.b16 %v78
    %v556 = vunpack.c.h.b16 %v78
    %v557 = vunpack.c.l.b16 %v79
    %v558 = vunpack.c.h.b16 %v79
    %v559 = vunpack.c.l.b16 %v80
    %v560 = vunpack.c.h.b16 %v80
    %v561 = vunpack.c.l.b16 %v81
    %v562 = vunpack.c.h.b16 %v81
    %v563 = vunpack.c.l.b16 %v82
    %v564 = vunpack.c.h.b16 %v82
    %v565 = vunpack.c.l.b16 %v83
    %v566 = vunpack.c.h.b16 %v83
    %v567 = vunpack.c.l.b16 %v84
    %v568 = vunpack.c.h.b16 %v84
    %v569 = vunpack.c.l.b16 %v85
    %v570 = vunpack.c.h.b16 %v85
    %v571 = vunpack.c.l.b16 %v86
    %v572 = vunpack.c.h.b16 %v86
    %v573 = vunpack.c.l.b16 %v87
    %v574 = vunpack.c.h.b16 %v87
    %v575 = vunpack.c.l.b16 %v88
    %v576 = vunpack.c.h.b16 %v88
    %v577 = vunpack.c.l.b16 %v89
    %v578 = vunpack.c.h.b16 %v89
    %v579 = vunpack.c.l.b16 %v90
    %v580 = vunpack.c.h.b16 %v90
    %v581 = vunpack.c.l.b16 %v91
    %v582 = vunpack.c.h.b16 %v91
    %v583 = vunpack.c.l.b16 %v92
    %v584 = vunpack.c.h.b16 %v92
    %v585 = vunpack.c.l.b16 %v93
    %v586 = vunpack.c.h.b16 %v93
    %v587 = vunpack.c.l.b16 %v94
    %v588 = vunpack.c.h.b16 %v94
    %v589 = vunpack.c.l.b16 %v95
    %v590 = vunpack.c.h.b16 %v95
    %v591 = vunpack.c.l.b16 %v96
    %v592 = vunpack.c.h.b16 %v96
    %v593 = vunpack.c.l.b16 %v97
    %v594 = vunpack.c.h.b16 %v97
    %v595 = vunpack.c.l.b16 %v98
    %v596 = vunpack.c.h.b16 %v98
    %v597 = vunpack.c.l.b16 %v99
    %v598 = vunpack.c.h.b16 %v99
    %v599 = vunpack.c.l.b16 %v100
    %v600 = vunpack.c.h.b16 %v100
    %v601 = vunpack.c.l.b16 %v101
    %v602 = vunpack.c.h.b16 %v101
    %v603 = vunpack.c.l.b16 %v102
    %v604 = vunpack.c.h.b16 %v102
    %v605 = vunpack.c.l.b16 %v103
    %v606 = vunpack.c.h.b16 %v103
    %v607 = vunpack.c.l.b16 %v104
    %v608 = vunpack.c.h.b16 %v104
    %v609 = vunpack.c.l.b16 %v105
    %v610 = vunpack.c.h.b16 %v105
    %v611 = vunpack.c.l.b16 %v106
    %v612 = vunpack.c.h.b16 %v106
    %v613 = vunpack.c.l.b16 %v107
    %v614 = vunpack.c.h.b16 %v107
    %v615 = vunpack.c.l.b16 %v108
    %v616 = vunpack.c.h.b16 %v108
    %v617 = vunpack.c.l.b16 %v109
    %v618 = vunpack.c.h.b16 %v109
    %v619 = vunpack.c.l.b16 %v110
    %v620 = vunpack.c.h.b16 %v110
    %v621 = vunpack.c.l.b16 %v111
    %v622 = vunpack.c.h.b16 %v111
    %v623 = vunpack.c.l.b16 %v112
    %v624 = vunpack.c.h.b16 %v112
    %v625 = vunpack.c.l.b16 %v113
    %v626 = vunpack.c.h.b16 %v113
    %v627 = vunpack.c.l.b16 %v114
    %v628 = vunpack.c.h.b16 %v114
    %v629 = vunpack.c.l.b16 %v115
    %v630 = vunpack.c.h.b16 %v115
    %v631 = vunpack.c.l.b16 %v116
    %v632 = vunpack.c.h.b16 %v116
    %v633 = vunpack.c.l.b16 %v117
    %v634 = vunpack.c.h.b16 %v117
    %v635 = vunpack.c.l.b16 %v118
    %v636 = vunpack.c.h.b16 %v118
    %v637 = vunpack.c.l.b16 %v119
    %v638 = vunpack.c.h.b16 %v119
    %v639 = vunpack.c.l.b16 %v120
    %v640 = vunpack.c.h.b16 %v120
    %v641 = vunpack.c.l.b16 %v121
    %v642 = vunpack.c.h.b16 %v121
    %v643 = vunpack.c.l.b16 %v122
    %v644 = vunpack.c.h.b16 %v122
    %v645 = vunpack.c.l.b16 %v123
    %v646 = vunpack.c.h.b16 %v123
    %v647 = vunpack.c.l.b16 %v124
    %v648 = vunpack.c.h.b16 %v124
    %v649 = vunpack.c.l.b16 %v125
    %v650 = vunpack.c.h.b16 %v125
    %v651 = vunpack.c.l.b16 %v126
    %v652 = vunpack.c.h.b16 %v126
    %v653 = vunpack.c.l.b16 %v127
    %v654 = vunpack.c.h.b16 %v127
    %v655 = vunpack.c.l.b16 %v128
    %v656 = vunpack.c.h.b16 %v128
    %v657 = vunpack.c.l.b16 %v129
    %v658 = vunpack.c.h.b16 %v129
    %v659 = vunpack.c.l.b16 %v130
    %v660 = vunpack.c.h.b16 %v130
    %v661 = vunpack.c.l.b16 %v131
    %v662 = vunpack.c.h.b16 %v131
    %v663 = vunpack.c.l.b16 %v132
    %v664 = vunpack.c.h.b16 %v132
    %v665 = vunpack.c.l.b16 %v133
    %v666 = vunpack.c.h.b16 %v133
    %v667 = vunpack.c.l.b16 %v134
    %v668 = vunpack.c.h.b16 %v134
    %v669 = vunpack.c.l.b16 %v135
    %v670 = vunpack.c.h.b16 %v135
    %v671 = vunpack.c.l.b16 %v136
    %v672 = vunpack.c.h.b16 %v136
    %v673 = vunpack.c.l.b16 %v137
    %v674 = vunpack.c.h.b16 %v137
    %v675 = vunpack.c.l.b16 %v138
    %v676 = vunpack.c.h.b16 %v138
    %v677 = vunpack.c.l.b16 %v139
    %v678 = vunpack.c.h.b16 %v139
    %v679 = vunpack.c.l.b16 %v140
    %v680 = vunpack.c.h.b16 %v140
    %v681 = vunpack.c.l.b16 %v141
    %v682 = vunpack.c.h.b16 %v141
    %v683 = vunpack.c.l.b16 %v142
    %v684 = vunpack.c.h.b16 %v142
    %v685 = vunpack.c.l.b16 %v143
    %v686 = vunpack.c.h.b16 %v143
    %v687 = vunpack.c.l.b16 %v144
    %v688 = vunpack.c.h.b16 %v144
    %v689 = vunpack.c.l.b16 %v145
    %v690 = vunpack.c.h.b16 %v145
    %v691 = vunpack.c.l.b16 %v146
    %v692 = vunpack.c.h.b16 %v146
    %v693 = vunpack.c.l.b16 %v147
    %v694 = vunpack.c.h.b16 %v147
    %v695 = vunpack.c.l.b16 %v148
    %v696 = vunpack.c.h.b16 %v148
    %v697 = vunpack.c.l.b16 %v149
    %v698 = vunpack.c.h.b16 %v149
    %v699 = vunpack.c.l.b16 %v150
    %v700 = vunpack.c.h.b16 %v150
    %v701 = vunpack.c.l.b16 %v151
    %v702 = vunpack.c.h.b16 %v151
    %v703 = vunpack.c.l.b16 %v152
    %v704 = vunpack.c.h.b16 %v152
    %v705 = vunpack.c.l.b16 %v153
    %v706 = vunpack.c.h.b16 %v153
    %v707 = vunpack.c.l.b16 %v154
    %v708 = vunpack.c.h.b16 %v154
    %v709 = vunpack.c.l.b16 %v155
    %v710 = vunpack.c.h.b16 %v155
    %v711 = vunpack.c.l.b16 %v156
    %v712 = vunpack.c.h.b16 %v156
    %v713 = vunpack.c.l.b16 %v157
    %v714 = vunpack.c.h.b16 %v157
    %v715 = vunpack.c.l.b16 %v158
    %v716 = vunpack.c.h.b16 %v158
    %v717 = vunpack.c.l.b16 %v159
    %v718 = vunpack.c.h.b16 %v159
    %v719 = vunpack.c.l.b16 %v160
    %v720 = vunpack.c.h.b16 %v160
    %v721 = vunpack.c.l.b16 %v161
    %v722 = vunpack.c.h.b16 %v161
    %v723 = vunpack.c.l.b16 %v162
    %v724 = vunpack.c.h.b16 %v162
    %v725 = vunpack.c.l.b16 %v163
    %v726 = vunpack.c.h.b16 %v163
    %v727 = vunpack.c.l.b16 %v164
    %v728 = vunpack.c.h.b16 %v164
    %v729 = vunpack.c.l.b16 %v165
    %v730 = vunpack.c.h.b16 %v165
    %v731 = vunpack.c.l.b16 %v166
    %v732 = vunpack.c.h.b16 %v166
    %v733 = vunpack.c.l.b16 %v167
    %v734 = vunpack.c.h.b16 %v167
    %v735 = vunpack.c.l.b16 %v168
    %v736 = vunpack.c.h.b16 %v168
    %v737 = vunpack.c.l.b16 %v169
    %v738 = vunpack.c.h.b16 %v169
    %v739 = vunpack.c.l.b16 %v170
    %v740 = vunpack.c.h.b16 %v170
    %v741 = vunpack.c.l.b16 %v171
    %v742 = vunpack.c.h.b16 %v171
    %v743 = vunpack.c.l.b16 %v172
    %v744 = vunpack.c.h.b16 %v172
    %v745 = vunpack.c.l.b16 %v173
    %v746 = vunpack.c.h.b16 %v173
    %v747 = vunpack.c.l.b16 %v174
    %v748 = vunpack.c.h.b16 %v174
    %v749 = vunpack.c.l.b16 %v175
    %v750 = vunpack.c.h.b16 %v175
    %v751 = vunpack.c.l.b16 %v176
    %v752 = vunpack.c.h.b16 %v176
    %v753 = vunpack.c.l.b16 %v177
    %v754 = vunpack.c.h.b16 %v177
    %v755 = vpack.c.b16 %v501, %v499
    %v756 = vpack.c.b16 %v502, %v500
    %v757 = vpack.c.b16 %v505, %v503
    %v758 = vpack.c.b16 %v506, %v504
    %v759 = vpack.c.b16 %v509, %v507
    %v760 = vpack.c.b16 %v510, %v508
    %v761 = vpack.c.b16 %v513, %v511
    %v762 = vpack.c.b16 %v514, %v512
    %v763 = vpack.c.b16 %v517, %v515
    %v764 = vpack.c.b16 %v518, %v516
    %v765 = vpack.c.b16 %v521, %v519
    %v766 = vpack.c.b16 %v522, %v520
    %v767 = vpack.c.b16 %v525, %v523
    %v768 = vpack.c.b16 %v526, %v524
    %v769 = vpack.c.b16 %v529, %v527
    %v770 = vpack.c.b16 %v530, %v528
    %v771 = vpack.c.b16 %v533, %v531
    %v772 = vpack.c.b16 %v534, %v532
    %v773 = vpack.c.b16 %v537, %v535
    %v774 = vpack.c.b16 %v538, %v536
    %v775 = vpack.c.b16 %v541, %v539
    %v776 = vpack.c.b16 %v542, %v540
    %v777 = vpack.c.b16 %v545, %v543
    %v778 = vpack.c.b16 %v546, %v544
    %v779 = vpack.c.b16 %v549, %v547
    %v780 = vpack.c.b16 %v550, %v548
    %v781 = vpack.c.b16 %v553, %v551
    %v782 = vpack.c.b16 %v554, %v552
    %v783 = vpack.c.b16 %v557, %v555
    %v784 = vpack.c.b16 %v558, %v556
    %v785 = vpack.c.b16 %v561, %v559
    %v786 = vpack.c.b16 %v562, %v560
    %v787 = vpack.c.b16 %v565, %v563
    %v788 = vpack.c.b16 %v566, %v564
    %v789 = vpack.c.b16 %v569, %v567
    %v790 = vpack.c.b16 %v570, %v568
    %v791 = vpack.c.b16 %v573, %v571
    %v792 = vpack.c.b16 %v574, %v572
    %v793 = vpack.c.b16 %v577, %v575
    %v794 = vpack.c.b16 %v578, %v576
    %v795 = vpack.c.b16 %v581, %v579
    %v796 = vpack.c.b16 %v582, %v580
    %v797 = vpack.c.b16 %v585, %v583
    %v798 = vpack.c.b16 %v586, %v584
    %v799 = vpack.c.b16 %v589, %v587
    %v800 = vpack.c.b16 %v590, %v588
    %v801 = vpack.c.b16 %v593, %v591
    %v802 = vpack.c.b16 %v594, %v592
    %v803 = vpack.c.b16 %v597, %v595
    %v804 = vpack.c.b16 %v598, %v596
    %v805 = vpack.c.b16 %v601, %v599
    %v806 = vpack.c.b16 %v602, %v600
    %v807 = vpack.c.b16 %v605, %v603
    %v808 = vpack.c.b16 %v606, %v604
    %v809 = vpack.c.b16 %v609, %v607
    %v810 = vpack.c.b16 %v610, %v608
    %v811 = vpack.c.b16 %v613, %v611
    %v812 = vpack.c.b16 %v614, %v612
    %v813 = vpack.c.b16 %v617, %v615
    %v814 = vpack.c.b16 %v618, %v616
    %v815 = vpack.c.b16 %v621, %v619
    %v816 = vpack.c.b16 %v622, %v620
    %v817 = vpack.c.b16 %v625, %v623
    %v818 = vpack.c.b16 %v626, %v624
    %v819 = vpack.c.b16 %v629, %v627
    %v820 = vpack.c.b16 %v630, %v628
    %v821 = vpack.c.b16 %v633, %v631
    %v822 = vpack.c.b16 %v634, %v632
    %v823 = vpack.c.b16 %v637, %v635
    %v824 = vpack.c.b16 %v638, %v636
    %v825 = vpack.c.b16 %v641, %v639
    %v826 = vpack.c.b16 %v642, %v640
    %v827 = vpack.c.b16 %v645, %v643
    %v828 = vpack.c.b16 %v646, %v644
    %v829 = vpack.c.b16 %v649, %v647
    %v830 = vpack.c.b16 %v650, %v648
    %v831 = vpack.c.b16 %v653, %v651
    %v832 = vpack.c.b16 %v654, %v652
    %v833 = vpack.c.b16 %v657, %v655
    %v834 = vpack.c.b16 %v658, %v656
    %v835 = vpack.c.b16 %v661, %v659
    %v836 = vpack.c.b16 %v662, %v660
    %v837 = vpack.c.b16 %v665, %v663
    %v838 = vpack.c.b16 %v666, %v664
    %v839 = vpack.c.b16 %v669, %v667
    %v840 = vpack.c.b16 %v670, %v668
    %v841 = vpack.c.b16 %v673, %v671
    %v842 = vpack.c.b16 %v674, %v672
    %v843 = vpack.c.b16 %v677, %v675
    %v844 = vpack.c.b16 %v678, %v676
    %v845 = vpack.c.b16 %v681, %v679
    %v846 = vpack.c.b16 %v682, %v680
    %v847 = vpack.c.b16 %v685, %v683
    %v848 = vpack.c.b16 %v686, %v684
    %v849 = vpack.c.b16 %v689, %v687
    %v850 = vpack.c.b16 %v690, %v688
    %v851 = vpack.c.b16 %v693, %v691
    %v852 = vpack.c.b16 %v694, %v692
    %v853 = vpack.c.b16 %v697, %v695
    %v854 = vpack.c.b16 %v698, %v696
    %v855 = vpack.c.b16 %v701, %v699
    %v856 = vpack.c.b16 %v702, %v700
    %v857 = vpack.c.b16 %v705, %v703
    %v858 = vpack.c.b16 %v706, %v704
    %v859 = vpack.c.b16 %v709, %v707
    %v860 = vpack.c.b16 %v710, %v708
    %v861 = vpack.c.b16 %v713, %v711
    %v862 = vpack.c.b16 %v714, %v712
    %v863 = vpack.c.b16 %v717, %v715
    %v864 = vpack.c.b16 %v718, %v716
    %v865 = vpack.c.b16 %v721, %v719
    %v866 = vpack.c.b16 %v722, %v720
    %v867 = vpack.c.b16 %v725, %v723
    %v868 = vpack.c.b16 %v726, %v724
    %v869 = vpack.c.b16 %v729, %v727
    %v870 = vpack.c.b16 %v730, %v728
    %v871 = vpack.c.b16 %v733, %v731
    %v872 = vpack.c.b16 %v734, %v732
    %v873 = vpack.c.b16 %v737, %v735
    %v874 = vpack.c.b16 %v738, %v736
    %v875 = vpack.c.b16 %v741, %v739
    %v876 = vpack.c.b16 %v742, %v740
    %v877 = vpack.c.b16 %v745, %v743
    %v878 = vpack.c.b16 %v746, %v744
    %v879 = vpack.c.b16 %v749, %v747
    %v880 = vpack.c.b16 %v750, %v748
    %v881 = vpack.c.b16 %v753, %v751
    %v882 = vpack.c.b16 %v754, %v752
    %1011 = vmatprep.subr.bf16.mxu0 %v770
    %1012 = vmatpush1.bf16.msra.mxu0 %v769
    %1013 = vmatprep.subr.bf16.mxu0 %v768
    %1014 = vmatpush1.bf16.msra.mxu0 %v767
    %1015 = vmatprep.subr.bf16.mxu0 %v766
    %1016 = vmatpush1.bf16.msra.mxu0 %v765
    %1017 = vmatprep.subr.bf16.mxu0 %v764
    %1018 = vmatpush1.bf16.msra.mxu0 %v763
    %1019 = vmatprep.subr.bf16.mxu0 %v762
    %1020 = vmatpush1.bf16.msra.mxu0 %v761
    %1021 = vmatprep.subr.bf16.mxu0 %v760
    %1022 = vmatpush1.bf16.msra.mxu0 %v759
    %1023 = vmatprep.subr.bf16.mxu0 %v758
    %1024 = vmatpush1.bf16.msra.mxu0 %v757
    %1025 = vmatprep.subr.bf16.mxu0 %v756
    %1026 = vmatpush1.bf16.msra.mxu0 %v755
    %1027 = vmatprep.subr.bf16.mxu0 %v786
    %1028 = vmatpush2.bf16.msra.mxu0 %v785
    %1029 = vmatprep.subr.bf16.mxu0 %v784
    %1030 = vmatpush2.bf16.msra.mxu0 %v783
    %1031 = vmatprep.subr.bf16.mxu0 %v782
    %1032 = vmatpush2.bf16.msra.mxu0 %v781
    %1033 = vmatprep.subr.bf16.mxu0 %v780
    %1034 = vmatpush2.bf16.msra.mxu0 %v779
    %1035 = vmatprep.subr.bf16.mxu0 %v778
    %1036 = vmatpush2.bf16.msra.mxu0 %v777
    %1037 = vmatprep.subr.bf16.mxu0 %v776
    %1038 = vmatpush2.bf16.msra.mxu0 %v775
    %1039 = vmatprep.subr.bf16.mxu0 %v774
    %1040 = vmatpush2.bf16.msra.mxu0 %v773
    %1041 = vmatprep.subr.bf16.mxu0 %v772
    %1042 = vmatpush2.bf16.msra.mxu0 %v771
    %1043 = vmatprep.mubr.bf16.mxu0 %v353
    %1044 = vmatmul.mubr.bf16.gmra.mxu0 %v352
    %v1045 = vpop.f32.mrf.mxu0
    %v1046 = vadd.f32 %v364, %v1045
    %v1047 = vpop.f32.mrf.mxu0
    %v1048 = vadd.f32 %v368, %v1047
    %v1049 = vpop.f32.mrf.mxu0
    %v1050 = vpop.f32.mrf.mxu0
    %1051 = vdwg.mxu0
    %1052 = vmatprep.subr.bf16.mxu0 %v802
    %1053 = vmatpush1.bf16.msra.mxu0 %v801
    %1054 = vmatprep.subr.bf16.mxu0 %v800
    %1055 = vmatpush1.bf16.msra.mxu0 %v799
    %1056 = vmatprep.subr.bf16.mxu0 %v798
    %1057 = vmatpush1.bf16.msra.mxu0 %v797
    %1058 = vmatprep.subr.bf16.mxu0 %v796
    %1059 = vmatpush1.bf16.msra.mxu0 %v795
    %1060 = vmatprep.subr.bf16.mxu0 %v794
    %1061 = vmatpush1.bf16.msra.mxu0 %v793
    %1062 = vmatprep.subr.bf16.mxu0 %v792
    %1063 = vmatpush1.bf16.msra.mxu0 %v791
    %1064 = vmatprep.subr.bf16.mxu0 %v790
    %1065 = vmatpush1.bf16.msra.mxu0 %v789
    %1066 = vmatprep.subr.bf16.mxu0 %v788
    %1067 = vmatpush1.bf16.msra.mxu0 %v787
    %1068 = vmatprep.subr.bf16.mxu0 %v818
    %1069 = vmatpush2.bf16.msra.mxu0 %v817
    %1070 = vmatprep.subr.bf16.mxu0 %v816
    %1071 = vmatpush2.bf16.msra.mxu0 %v815
    %1072 = vmatprep.subr.bf16.mxu0 %v814
    %1073 = vmatpush2.bf16.msra.mxu0 %v813
    %1074 = vmatprep.subr.bf16.mxu0 %v812
    %1075 = vmatpush2.bf16.msra.mxu0 %v811
    %1076 = vmatprep.subr.bf16.mxu0 %v810
    %1077 = vmatpush2.bf16.msra.mxu0 %v809
    %1078 = vmatprep.subr.bf16.mxu0 %v808
    %1079 = vmatpush2.bf16.msra.mxu0 %v807
    %1080 = vmatprep.subr.bf16.mxu0 %v806
    %1081 = vmatpush2.bf16.msra.mxu0 %v805
    %1082 = vmatprep.subr.bf16.mxu0 %v804
    %1083 = vmatpush2.bf16.msra.mxu0 %v803
    %1084 = vmatprep.mubr.bf16.mxu0 %v355
    %1085 = vmatmul.mubr.bf16.gmra.mxu0 %v354
    %v1086 = vpop.f32.mrf.mxu0
    %v1087 = vadd.f32 %v1046, %v1086
    %v1088 = vpop.f32.mrf.mxu0
    %v1089 = vadd.f32 %v1048, %v1088
    %v1090 = vpop.f32.mrf.mxu0
    %v1091 = vpop.f32.mrf.mxu0
    %1092 = vdwg.mxu0
    %1093 = vmatprep.subr.bf16.mxu0 %v834
    %1094 = vmatpush1.bf16.msra.mxu0 %v833
    %1095 = vmatprep.subr.bf16.mxu0 %v832
    %1096 = vmatpush1.bf16.msra.mxu0 %v831
    %1097 = vmatprep.subr.bf16.mxu0 %v830
    %1098 = vmatpush1.bf16.msra.mxu0 %v829
    %1099 = vmatprep.subr.bf16.mxu0 %v828
    %1100 = vmatpush1.bf16.msra.mxu0 %v827
    %1101 = vmatprep.subr.bf16.mxu0 %v826
    %1102 = vmatpush1.bf16.msra.mxu0 %v825
    %1103 = vmatprep.subr.bf16.mxu0 %v824
    %1104 = vmatpush1.bf16.msra.mxu0 %v823
    %1105 = vmatprep.subr.bf16.mxu0 %v822
    %1106 = vmatpush1.bf16.msra.mxu0 %v821
    %1107 = vmatprep.subr.bf16.mxu0 %v820
    %1108 = vmatpush1.bf16.msra.mxu0 %v819
    %1109 = vmatprep.subr.bf16.mxu0 %v850
    %1110 = vmatpush2.bf16.msra.mxu0 %v849
    %1111 = vmatprep.subr.bf16.mxu0 %v848
    %1112 = vmatpush2.bf16.msra.mxu0 %v847
    %1113 = vmatprep.subr.bf16.mxu0 %v846
    %1114 = vmatpush2.bf16.msra.mxu0 %v845
    %1115 = vmatprep.subr.bf16.mxu0 %v844
    %1116 = vmatpush2.bf16.msra.mxu0 %v843
    %1117 = vmatprep.subr.bf16.mxu0 %v842
    %1118 = vmatpush2.bf16.msra.mxu0 %v841
    %1119 = vmatprep.subr.bf16.mxu0 %v840
    %1120 = vmatpush2.bf16.msra.mxu0 %v839
    %1121 = vmatprep.subr.bf16.mxu0 %v838
    %1122 = vmatpush2.bf16.msra.mxu0 %v837
    %1123 = vmatprep.subr.bf16.mxu0 %v836
    %1124 = vmatpush2.bf16.msra.mxu0 %v835
    %1125 = vmatprep.mubr.bf16.mxu0 %v357
    %1126 = vmatmul.mubr.bf16.gmra.mxu0 %v356
    %v1127 = vpop.f32.mrf.mxu0
    %v1128 = vadd.f32 %v1087, %v1127
    %v1129 = vpop.f32.mrf.mxu0
    %v1130 = vadd.f32 %v1089, %v1129
    %v1131 = vpop.f32.mrf.mxu0
    %v1132 = vpop.f32.mrf.mxu0
    %1133 = vdwg.mxu0
    %1134 = vmatprep.subr.bf16.mxu0 %v866
    %1135 = vmatpush1.bf16.msra.mxu0 %v865
    %1136 = vmatprep.subr.bf16.mxu0 %v864
    %1137 = vmatpush1.bf16.msra.mxu0 %v863
    %1138 = vmatprep.subr.bf16.mxu0 %v862
    %1139 = vmatpush1.bf16.msra.mxu0 %v861
    %1140 = vmatprep.subr.bf16.mxu0 %v860
    %1141 = vmatpush1.bf16.msra.mxu0 %v859
    %1142 = vmatprep.subr.bf16.mxu0 %v858
    %1143 = vmatpush1.bf16.msra.mxu0 %v857
    %1144 = vmatprep.subr.bf16.mxu0 %v856
    %1145 = vmatpush1.bf16.msra.mxu0 %v855
    %1146 = vmatprep.subr.bf16.mxu0 %v854
    %1147 = vmatpush1.bf16.msra.mxu0 %v853
    %1148 = vmatprep.subr.bf16.mxu0 %v852
    %1149 = vmatpush1.bf16.msra.mxu0 %v851
    %1150 = vmatprep.subr.bf16.mxu0 %v882
    %1151 = vmatpush2.bf16.msra.mxu0 %v881
    %1152 = vmatprep.subr.bf16.mxu0 %v880
    %1153 = vmatpush2.bf16.msra.mxu0 %v879
    %1154 = vmatprep.subr.bf16.mxu0 %v878
    %1155 = vmatpush2.bf16.msra.mxu0 %v877
    %1156 = vmatprep.subr.bf16.mxu0 %v876
    %1157 = vmatpush2.bf16.msra.mxu0 %v875
    %1158 = vmatprep.subr.bf16.mxu0 %v874
    %1159 = vmatpush2.bf16.msra.mxu0 %v873
    %1160 = vmatprep.subr.bf16.mxu0 %v872
    %1161 = vmatpush2.bf16.msra.mxu0 %v871
    %1162 = vmatprep.subr.bf16.mxu0 %v870
    %1163 = vmatpush2.bf16.msra.mxu0 %v869
    %1164 = vmatprep.subr.bf16.mxu0 %v868
    %1165 = vmatpush2.bf16.msra.mxu0 %v867
    %1166 = vmatprep.mubr.bf16.mxu0 %v359
    %1167 = vmatmul.mubr.bf16.gmra.mxu0 %v358
    %v1168 = vpop.f32.mrf.mxu0
    %v1169 = vadd.f32 %v1128, %v1168
    %v1170 = vpop.f32.mrf.mxu0
    %v1171 = vadd.f32 %v1130, %v1170
    %v1172 = vpop.f32.mrf.mxu0
    %v1173 = vpop.f32.mrf.mxu0
    %1174 = vdwg.mxu0
    %v1175 = vmax.f32 %v1169, 0.0
    %v1176 = vmax.f32 %v1171, 0.0
    %v1177 = vpack.c.bf16 %v1175, %v1175
    %v1178 = vpack.c.bf16 %v1176, %v1176
    %v1180 = vlaneseq
    %v1181 = vshrl.u32 %v1180, 7
    %v1182 = vsub.s32 0, %v1181
    %v1183 = vrot.slane %v307, %v1182
    %v1184 = vlaneseq
    %v1185 = vshrl.u32 %v1184, 7
    %v1186 = vsub.s32 1, %v1185
    %v1187 = vrot.slane %v307, %v1186
    %v1188 = vlaneseq
    %v1189 = vshrl.u32 %v1188, 7
    %v1190 = vsub.s32 2, %v1189
    %v1191 = vrot.slane %v307, %v1190
    %v1192 = vlaneseq
    %v1193 = vshrl.u32 %v1192, 7
    %v1194 = vsub.s32 3, %v1193
    %v1195 = vrot.slane %v307, %v1194
    %v1196 = vlaneseq
    %v1197 = vshrl.u32 %v1196, 7
    %v1198 = vsub.s32 4, %v1197
    %v1199 = vrot.slane %v307, %v1198
    %v1200 = vlaneseq
    %v1201 = vshrl.u32 %v1200, 7
    %v1202 = vsub.s32 5, %v1201
    %v1203 = vrot.slane %v307, %v1202
    %v1204 = vlaneseq
    %v1205 = vshrl.u32 %v1204, 7
    %v1206 = vsub.s32 6, %v1205
    %v1207 = vrot.slane %v307, %v1206
    %v1208 = vlaneseq
    %v1209 = vshrl.u32 %v1208, 7
    %v1210 = vsub.s32 7, %v1209
    %v1211 = vrot.slane %v307, %v1210
    %v1348 = vunpack.c.l.b16 %v179
    %v1349 = vunpack.c.h.b16 %v179
    %v1350 = vunpack.c.l.b16 %v180
    %v1351 = vunpack.c.h.b16 %v180
    %v1352 = vunpack.c.l.b16 %v181
    %v1353 = vunpack.c.h.b16 %v181
    %v1354 = vunpack.c.l.b16 %v182
    %v1355 = vunpack.c.h.b16 %v182
    %v1356 = vunpack.c.l.b16 %v183
    %v1357 = vunpack.c.h.b16 %v183
    %v1358 = vunpack.c.l.b16 %v184
    %v1359 = vunpack.c.h.b16 %v184
    %v1360 = vunpack.c.l.b16 %v185
    %v1361 = vunpack.c.h.b16 %v185
    %v1362 = vunpack.c.l.b16 %v186
    %v1363 = vunpack.c.h.b16 %v186
    %v1364 = vunpack.c.l.b16 %v187
    %v1365 = vunpack.c.h.b16 %v187
    %v1366 = vunpack.c.l.b16 %v188
    %v1367 = vunpack.c.h.b16 %v188
    %v1368 = vunpack.c.l.b16 %v189
    %v1369 = vunpack.c.h.b16 %v189
    %v1370 = vunpack.c.l.b16 %v190
    %v1371 = vunpack.c.h.b16 %v190
    %v1372 = vunpack.c.l.b16 %v191
    %v1373 = vunpack.c.h.b16 %v191
    %v1374 = vunpack.c.l.b16 %v192
    %v1375 = vunpack.c.h.b16 %v192
    %v1376 = vunpack.c.l.b16 %v193
    %v1377 = vunpack.c.h.b16 %v193
    %v1378 = vunpack.c.l.b16 %v194
    %v1379 = vunpack.c.h.b16 %v194
    %v1380 = vunpack.c.l.b16 %v195
    %v1381 = vunpack.c.h.b16 %v195
    %v1382 = vunpack.c.l.b16 %v196
    %v1383 = vunpack.c.h.b16 %v196
    %v1384 = vunpack.c.l.b16 %v197
    %v1385 = vunpack.c.h.b16 %v197
    %v1386 = vunpack.c.l.b16 %v198
    %v1387 = vunpack.c.h.b16 %v198
    %v1388 = vunpack.c.l.b16 %v199
    %v1389 = vunpack.c.h.b16 %v199
    %v1390 = vunpack.c.l.b16 %v200
    %v1391 = vunpack.c.h.b16 %v200
    %v1392 = vunpack.c.l.b16 %v201
    %v1393 = vunpack.c.h.b16 %v201
    %v1394 = vunpack.c.l.b16 %v202
    %v1395 = vunpack.c.h.b16 %v202
    %v1396 = vunpack.c.l.b16 %v203
    %v1397 = vunpack.c.h.b16 %v203
    %v1398 = vunpack.c.l.b16 %v204
    %v1399 = vunpack.c.h.b16 %v204
    %v1400 = vunpack.c.l.b16 %v205
    %v1401 = vunpack.c.h.b16 %v205
    %v1402 = vunpack.c.l.b16 %v206
    %v1403 = vunpack.c.h.b16 %v206
    %v1404 = vunpack.c.l.b16 %v207
    %v1405 = vunpack.c.h.b16 %v207
    %v1406 = vunpack.c.l.b16 %v208
    %v1407 = vunpack.c.h.b16 %v208
    %v1408 = vunpack.c.l.b16 %v209
    %v1409 = vunpack.c.h.b16 %v209
    %v1410 = vunpack.c.l.b16 %v210
    %v1411 = vunpack.c.h.b16 %v210
    %v1412 = vunpack.c.l.b16 %v211
    %v1413 = vunpack.c.h.b16 %v211
    %v1414 = vunpack.c.l.b16 %v212
    %v1415 = vunpack.c.h.b16 %v212
    %v1416 = vunpack.c.l.b16 %v213
    %v1417 = vunpack.c.h.b16 %v213
    %v1418 = vunpack.c.l.b16 %v214
    %v1419 = vunpack.c.h.b16 %v214
    %v1420 = vunpack.c.l.b16 %v215
    %v1421 = vunpack.c.h.b16 %v215
    %v1422 = vunpack.c.l.b16 %v216
    %v1423 = vunpack.c.h.b16 %v216
    %v1424 = vunpack.c.l.b16 %v217
    %v1425 = vunpack.c.h.b16 %v217
    %v1426 = vunpack.c.l.b16 %v218
    %v1427 = vunpack.c.h.b16 %v218
    %v1428 = vunpack.c.l.b16 %v219
    %v1429 = vunpack.c.h.b16 %v219
    %v1430 = vunpack.c.l.b16 %v220
    %v1431 = vunpack.c.h.b16 %v220
    %v1432 = vunpack.c.l.b16 %v221
    %v1433 = vunpack.c.h.b16 %v221
    %v1434 = vunpack.c.l.b16 %v222
    %v1435 = vunpack.c.h.b16 %v222
    %v1436 = vunpack.c.l.b16 %v223
    %v1437 = vunpack.c.h.b16 %v223
    %v1438 = vunpack.c.l.b16 %v224
    %v1439 = vunpack.c.h.b16 %v224
    %v1440 = vunpack.c.l.b16 %v225
    %v1441 = vunpack.c.h.b16 %v225
    %v1442 = vunpack.c.l.b16 %v226
    %v1443 = vunpack.c.h.b16 %v226
    %v1444 = vunpack.c.l.b16 %v227
    %v1445 = vunpack.c.h.b16 %v227
    %v1446 = vunpack.c.l.b16 %v228
    %v1447 = vunpack.c.h.b16 %v228
    %v1448 = vunpack.c.l.b16 %v229
    %v1449 = vunpack.c.h.b16 %v229
    %v1450 = vunpack.c.l.b16 %v230
    %v1451 = vunpack.c.h.b16 %v230
    %v1452 = vunpack.c.l.b16 %v231
    %v1453 = vunpack.c.h.b16 %v231
    %v1454 = vunpack.c.l.b16 %v232
    %v1455 = vunpack.c.h.b16 %v232
    %v1456 = vunpack.c.l.b16 %v233
    %v1457 = vunpack.c.h.b16 %v233
    %v1458 = vunpack.c.l.b16 %v234
    %v1459 = vunpack.c.h.b16 %v234
    %v1460 = vunpack.c.l.b16 %v235
    %v1461 = vunpack.c.h.b16 %v235
    %v1462 = vunpack.c.l.b16 %v236
    %v1463 = vunpack.c.h.b16 %v236
    %v1464 = vunpack.c.l.b16 %v237
    %v1465 = vunpack.c.h.b16 %v237
    %v1466 = vunpack.c.l.b16 %v238
    %v1467 = vunpack.c.h.b16 %v238
    %v1468 = vunpack.c.l.b16 %v239
    %v1469 = vunpack.c.h.b16 %v239
    %v1470 = vunpack.c.l.b16 %v240
    %v1471 = vunpack.c.h.b16 %v240
    %v1472 = vunpack.c.l.b16 %v241
    %v1473 = vunpack.c.h.b16 %v241
    %v1474 = vunpack.c.l.b16 %v242
    %v1475 = vunpack.c.h.b16 %v242
    %v1476 = vunpack.c.l.b16 %v243
    %v1477 = vunpack.c.h.b16 %v243
    %v1478 = vunpack.c.l.b16 %v244
    %v1479 = vunpack.c.h.b16 %v244
    %v1480 = vunpack.c.l.b16 %v245
    %v1481 = vunpack.c.h.b16 %v245
    %v1482 = vunpack.c.l.b16 %v246
    %v1483 = vunpack.c.h.b16 %v246
    %v1484 = vunpack.c.l.b16 %v247
    %v1485 = vunpack.c.h.b16 %v247
    %v1486 = vunpack.c.l.b16 %v248
    %v1487 = vunpack.c.h.b16 %v248
    %v1488 = vunpack.c.l.b16 %v249
    %v1489 = vunpack.c.h.b16 %v249
    %v1490 = vunpack.c.l.b16 %v250
    %v1491 = vunpack.c.h.b16 %v250
    %v1492 = vunpack.c.l.b16 %v251
    %v1493 = vunpack.c.h.b16 %v251
    %v1494 = vunpack.c.l.b16 %v252
    %v1495 = vunpack.c.h.b16 %v252
    %v1496 = vunpack.c.l.b16 %v253
    %v1497 = vunpack.c.h.b16 %v253
    %v1498 = vunpack.c.l.b16 %v254
    %v1499 = vunpack.c.h.b16 %v254
    %v1500 = vunpack.c.l.b16 %v255
    %v1501 = vunpack.c.h.b16 %v255
    %v1502 = vunpack.c.l.b16 %v256
    %v1503 = vunpack.c.h.b16 %v256
    %v1504 = vunpack.c.l.b16 %v257
    %v1505 = vunpack.c.h.b16 %v257
    %v1506 = vunpack.c.l.b16 %v258
    %v1507 = vunpack.c.h.b16 %v258
    %v1508 = vunpack.c.l.b16 %v259
    %v1509 = vunpack.c.h.b16 %v259
    %v1510 = vunpack.c.l.b16 %v260
    %v1511 = vunpack.c.h.b16 %v260
    %v1512 = vunpack.c.l.b16 %v261
    %v1513 = vunpack.c.h.b16 %v261
    %v1514 = vunpack.c.l.b16 %v262
    %v1515 = vunpack.c.h.b16 %v262
    %v1516 = vunpack.c.l.b16 %v263
    %v1517 = vunpack.c.h.b16 %v263
    %v1518 = vunpack.c.l.b16 %v264
    %v1519 = vunpack.c.h.b16 %v264
    %v1520 = vunpack.c.l.b16 %v265
    %v1521 = vunpack.c.h.b16 %v265
    %v1522 = vunpack.c.l.b16 %v266
    %v1523 = vunpack.c.h.b16 %v266
    %v1524 = vunpack.c.l.b16 %v267
    %v1525 = vunpack.c.h.b16 %v267
    %v1526 = vunpack.c.l.b16 %v268
    %v1527 = vunpack.c.h.b16 %v268
    %v1528 = vunpack.c.l.b16 %v269
    %v1529 = vunpack.c.h.b16 %v269
    %v1530 = vunpack.c.l.b16 %v270
    %v1531 = vunpack.c.h.b16 %v270
    %v1532 = vunpack.c.l.b16 %v271
    %v1533 = vunpack.c.h.b16 %v271
    %v1534 = vunpack.c.l.b16 %v272
    %v1535 = vunpack.c.h.b16 %v272
    %v1536 = vunpack.c.l.b16 %v273
    %v1537 = vunpack.c.h.b16 %v273
    %v1538 = vunpack.c.l.b16 %v274
    %v1539 = vunpack.c.h.b16 %v274
    %v1540 = vunpack.c.l.b16 %v275
    %v1541 = vunpack.c.h.b16 %v275
    %v1542 = vunpack.c.l.b16 %v276
    %v1543 = vunpack.c.h.b16 %v276
    %v1544 = vunpack.c.l.b16 %v277
    %v1545 = vunpack.c.h.b16 %v277
    %v1546 = vunpack.c.l.b16 %v278
    %v1547 = vunpack.c.h.b16 %v278
    %v1548 = vunpack.c.l.b16 %v279
    %v1549 = vunpack.c.h.b16 %v279
    %v1550 = vunpack.c.l.b16 %v280
    %v1551 = vunpack.c.h.b16 %v280
    %v1552 = vunpack.c.l.b16 %v281
    %v1553 = vunpack.c.h.b16 %v281
    %v1554 = vunpack.c.l.b16 %v282
    %v1555 = vunpack.c.h.b16 %v282
    %v1556 = vunpack.c.l.b16 %v283
    %v1557 = vunpack.c.h.b16 %v283
    %v1558 = vunpack.c.l.b16 %v284
    %v1559 = vunpack.c.h.b16 %v284
    %v1560 = vunpack.c.l.b16 %v285
    %v1561 = vunpack.c.h.b16 %v285
    %v1562 = vunpack.c.l.b16 %v286
    %v1563 = vunpack.c.h.b16 %v286
    %v1564 = vunpack.c.l.b16 %v287
    %v1565 = vunpack.c.h.b16 %v287
    %v1566 = vunpack.c.l.b16 %v288
    %v1567 = vunpack.c.h.b16 %v288
    %v1568 = vunpack.c.l.b16 %v289
    %v1569 = vunpack.c.h.b16 %v289
    %v1570 = vunpack.c.l.b16 %v290
    %v1571 = vunpack.c.h.b16 %v290
    %v1572 = vunpack.c.l.b16 %v291
    %v1573 = vunpack.c.h.b16 %v291
    %v1574 = vunpack.c.l.b16 %v292
    %v1575 = vunpack.c.h.b16 %v292
    %v1576 = vunpack.c.l.b16 %v293
    %v1577 = vunpack.c.h.b16 %v293
    %v1578 = vunpack.c.l.b16 %v294
    %v1579 = vunpack.c.h.b16 %v294
    %v1580 = vunpack.c.l.b16 %v295
    %v1581 = vunpack.c.h.b16 %v295
    %v1582 = vunpack.c.l.b16 %v296
    %v1583 = vunpack.c.h.b16 %v296
    %v1584 = vunpack.c.l.b16 %v297
    %v1585 = vunpack.c.h.b16 %v297
    %v1586 = vunpack.c.l.b16 %v298
    %v1587 = vunpack.c.h.b16 %v298
    %v1588 = vunpack.c.l.b16 %v299
    %v1589 = vunpack.c.h.b16 %v299
    %v1590 = vunpack.c.l.b16 %v300
    %v1591 = vunpack.c.h.b16 %v300
    %v1592 = vunpack.c.l.b16 %v301
    %v1593 = vunpack.c.h.b16 %v301
    %v1594 = vunpack.c.l.b16 %v302
    %v1595 = vunpack.c.h.b16 %v302
    %v1596 = vunpack.c.l.b16 %v303
    %v1597 = vunpack.c.h.b16 %v303
    %v1598 = vunpack.c.l.b16 %v304
    %v1599 = vunpack.c.h.b16 %v304
    %v1600 = vunpack.c.l.b16 %v305
    %v1601 = vunpack.c.h.b16 %v305
    %v1602 = vunpack.c.l.b16 %v306
    %v1603 = vunpack.c.h.b16 %v306
    %v1604 = vpack.c.b16 %v1356, %v1348
    %v1605 = vpack.c.b16 %v1357, %v1349
    %v1606 = vpack.c.b16 %v1358, %v1350
    %v1607 = vpack.c.b16 %v1359, %v1351
    %v1608 = vpack.c.b16 %v1360, %v1352
    %v1609 = vpack.c.b16 %v1361, %v1353
    %v1610 = vpack.c.b16 %v1362, %v1354
    %v1611 = vpack.c.b16 %v1363, %v1355
    %v1612 = vpack.c.b16 %v1372, %v1364
    %v1613 = vpack.c.b16 %v1373, %v1365
    %v1614 = vpack.c.b16 %v1374, %v1366
    %v1615 = vpack.c.b16 %v1375, %v1367
    %v1616 = vpack.c.b16 %v1376, %v1368
    %v1617 = vpack.c.b16 %v1377, %v1369
    %v1618 = vpack.c.b16 %v1378, %v1370
    %v1619 = vpack.c.b16 %v1379, %v1371
    %v1620 = vpack.c.b16 %v1388, %v1380
    %v1621 = vpack.c.b16 %v1389, %v1381
    %v1622 = vpack.c.b16 %v1390, %v1382
    %v1623 = vpack.c.b16 %v1391, %v1383
    %v1624 = vpack.c.b16 %v1392, %v1384
    %v1625 = vpack.c.b16 %v1393, %v1385
    %v1626 = vpack.c.b16 %v1394, %v1386
    %v1627 = vpack.c.b16 %v1395, %v1387
    %v1628 = vpack.c.b16 %v1404, %v1396
    %v1629 = vpack.c.b16 %v1405, %v1397
    %v1630 = vpack.c.b16 %v1406, %v1398
    %v1631 = vpack.c.b16 %v1407, %v1399
    %v1632 = vpack.c.b16 %v1408, %v1400
    %v1633 = vpack.c.b16 %v1409, %v1401
    %v1634 = vpack.c.b16 %v1410, %v1402
    %v1635 = vpack.c.b16 %v1411, %v1403
    %v1636 = vpack.c.b16 %v1420, %v1412
    %v1637 = vpack.c.b16 %v1421, %v1413
    %v1638 = vpack.c.b16 %v1422, %v1414
    %v1639 = vpack.c.b16 %v1423, %v1415
    %v1640 = vpack.c.b16 %v1424, %v1416
    %v1641 = vpack.c.b16 %v1425, %v1417
    %v1642 = vpack.c.b16 %v1426, %v1418
    %v1643 = vpack.c.b16 %v1427, %v1419
    %v1644 = vpack.c.b16 %v1436, %v1428
    %v1645 = vpack.c.b16 %v1437, %v1429
    %v1646 = vpack.c.b16 %v1438, %v1430
    %v1647 = vpack.c.b16 %v1439, %v1431
    %v1648 = vpack.c.b16 %v1440, %v1432
    %v1649 = vpack.c.b16 %v1441, %v1433
    %v1650 = vpack.c.b16 %v1442, %v1434
    %v1651 = vpack.c.b16 %v1443, %v1435
    %v1652 = vpack.c.b16 %v1452, %v1444
    %v1653 = vpack.c.b16 %v1453, %v1445
    %v1654 = vpack.c.b16 %v1454, %v1446
    %v1655 = vpack.c.b16 %v1455, %v1447
    %v1656 = vpack.c.b16 %v1456, %v1448
    %v1657 = vpack.c.b16 %v1457, %v1449
    %v1658 = vpack.c.b16 %v1458, %v1450
    %v1659 = vpack.c.b16 %v1459, %v1451
    %v1660 = vpack.c.b16 %v1468, %v1460
    %v1661 = vpack.c.b16 %v1469, %v1461
    %v1662 = vpack.c.b16 %v1470, %v1462
    %v1663 = vpack.c.b16 %v1471, %v1463
    %v1664 = vpack.c.b16 %v1472, %v1464
    %v1665 = vpack.c.b16 %v1473, %v1465
    %v1666 = vpack.c.b16 %v1474, %v1466
    %v1667 = vpack.c.b16 %v1475, %v1467
    %v1668 = vpack.c.b16 %v1484, %v1476
    %v1669 = vpack.c.b16 %v1485, %v1477
    %v1670 = vpack.c.b16 %v1486, %v1478
    %v1671 = vpack.c.b16 %v1487, %v1479
    %v1672 = vpack.c.b16 %v1488, %v1480
    %v1673 = vpack.c.b16 %v1489, %v1481
    %v1674 = vpack.c.b16 %v1490, %v1482
    %v1675 = vpack.c.b16 %v1491, %v1483
    %v1676 = vpack.c.b16 %v1500, %v1492
    %v1677 = vpack.c.b16 %v1501, %v1493
    %v1678 = vpack.c.b16 %v1502, %v1494
    %v1679 = vpack.c.b16 %v1503, %v1495
    %v1680 = vpack.c.b16 %v1504, %v1496
    %v1681 = vpack.c.b16 %v1505, %v1497
    %v1682 = vpack.c.b16 %v1506, %v1498
    %v1683 = vpack.c.b16 %v1507, %v1499
    %v1684 = vpack.c.b16 %v1516, %v1508
    %v1685 = vpack.c.b16 %v1517, %v1509
    %v1686 = vpack.c.b16 %v1518, %v1510
    %v1687 = vpack.c.b16 %v1519, %v1511
    %v1688 = vpack.c.b16 %v1520, %v1512
    %v1689 = vpack.c.b16 %v1521, %v1513
    %v1690 = vpack.c.b16 %v1522, %v1514
    %v1691 = vpack.c.b16 %v1523, %v1515
    %v1692 = vpack.c.b16 %v1532, %v1524
    %v1693 = vpack.c.b16 %v1533, %v1525
    %v1694 = vpack.c.b16 %v1534, %v1526
    %v1695 = vpack.c.b16 %v1535, %v1527
    %v1696 = vpack.c.b16 %v1536, %v1528
    %v1697 = vpack.c.b16 %v1537, %v1529
    %v1698 = vpack.c.b16 %v1538, %v1530
    %v1699 = vpack.c.b16 %v1539, %v1531
    %v1700 = vpack.c.b16 %v1548, %v1540
    %v1701 = vpack.c.b16 %v1549, %v1541
    %v1702 = vpack.c.b16 %v1550, %v1542
    %v1703 = vpack.c.b16 %v1551, %v1543
    %v1704 = vpack.c.b16 %v1552, %v1544
    %v1705 = vpack.c.b16 %v1553, %v1545
    %v1706 = vpack.c.b16 %v1554, %v1546
    %v1707 = vpack.c.b16 %v1555, %v1547
    %v1708 = vpack.c.b16 %v1564, %v1556
    %v1709 = vpack.c.b16 %v1565, %v1557
    %v1710 = vpack.c.b16 %v1566, %v1558
    %v1711 = vpack.c.b16 %v1567, %v1559
    %v1712 = vpack.c.b16 %v1568, %v1560
    %v1713 = vpack.c.b16 %v1569, %v1561
    %v1714 = vpack.c.b16 %v1570, %v1562
    %v1715 = vpack.c.b16 %v1571, %v1563
    %v1716 = vpack.c.b16 %v1580, %v1572
    %v1717 = vpack.c.b16 %v1581, %v1573
    %v1718 = vpack.c.b16 %v1582, %v1574
    %v1719 = vpack.c.b16 %v1583, %v1575
    %v1720 = vpack.c.b16 %v1584, %v1576
    %v1721 = vpack.c.b16 %v1585, %v1577
    %v1722 = vpack.c.b16 %v1586, %v1578
    %v1723 = vpack.c.b16 %v1587, %v1579
    %v1724 = vpack.c.b16 %v1596, %v1588
    %v1725 = vpack.c.b16 %v1597, %v1589
    %v1726 = vpack.c.b16 %v1598, %v1590
    %v1727 = vpack.c.b16 %v1599, %v1591
    %v1728 = vpack.c.b16 %v1600, %v1592
    %v1729 = vpack.c.b16 %v1601, %v1593
    %v1730 = vpack.c.b16 %v1602, %v1594
    %v1731 = vpack.c.b16 %v1603, %v1595
    %1860 = vmatprep.subr.bf16.mxu0 %v1661
    %1861 = vmatpush1.bf16.msra.mxu0 %v1660
    %1862 = vmatprep.subr.bf16.mxu0 %v1653
    %1863 = vmatpush1.bf16.msra.mxu0 %v1652
    %1864 = vmatprep.subr.bf16.mxu0 %v1645
    %1865 = vmatpush1.bf16.msra.mxu0 %v1644
    %1866 = vmatprep.subr.bf16.mxu0 %v1637
    %1867 = vmatpush1.bf16.msra.mxu0 %v1636
    %1868 = vmatprep.subr.bf16.mxu0 %v1629
    %1869 = vmatpush1.bf16.msra.mxu0 %v1628
    %1870 = vmatprep.subr.bf16.mxu0 %v1621
    %1871 = vmatpush1.bf16.msra.mxu0 %v1620
    %1872 = vmatprep.subr.bf16.mxu0 %v1613
    %1873 = vmatpush1.bf16.msra.mxu0 %v1612
    %1874 = vmatprep.subr.bf16.mxu0 %v1605
    %1875 = vmatpush1.bf16.msra.mxu0 %v1604
    %1876 = vmatprep.subr.bf16.mxu0 %v1725
    %1877 = vmatpush2.bf16.msra.mxu0 %v1724
    %1878 = vmatprep.subr.bf16.mxu0 %v1717
    %1879 = vmatpush2.bf16.msra.mxu0 %v1716
    %1880 = vmatprep.subr.bf16.mxu0 %v1709
    %1881 = vmatpush2.bf16.msra.mxu0 %v1708
    %1882 = vmatprep.subr.bf16.mxu0 %v1701
    %1883 = vmatpush2.bf16.msra.mxu0 %v1700
    %1884 = vmatprep.subr.bf16.mxu0 %v1693
    %1885 = vmatpush2.bf16.msra.mxu0 %v1692
    %1886 = vmatprep.subr.bf16.mxu0 %v1685
    %1887 = vmatpush2.bf16.msra.mxu0 %v1684
    %1888 = vmatprep.subr.bf16.mxu0 %v1677
    %1889 = vmatpush2.bf16.msra.mxu0 %v1676
    %1890 = vmatprep.subr.bf16.mxu0 %v1669
    %1891 = vmatpush2.bf16.msra.mxu0 %v1668
    %1892 = vmatprep.mubr.bf16.mxu0 %v1178
    %1893 = vmatmul.mubr.bf16.gmra.mxu0 %v1177
    %v1894 = vpop.f32.mrf.mxu0
    %v1895 = vadd.f32 %v1183, %v1894
    %v1896 = vpop.f32.mrf.mxu0
    %v1897 = vadd.f32 %v1187, %v1896
    %v1898 = vpop.f32.mrf.mxu0
    %v1899 = vpop.f32.mrf.mxu0
    %1900 = vdwg.mxu0
    %1901 = vmatprep.subr.bf16.mxu0 %v1663
    %1902 = vmatpush1.bf16.msra.mxu0 %v1662
    %1903 = vmatprep.subr.bf16.mxu0 %v1655
    %1904 = vmatpush1.bf16.msra.mxu0 %v1654
    %1905 = vmatprep.subr.bf16.mxu0 %v1647
    %1906 = vmatpush1.bf16.msra.mxu0 %v1646
    %1907 = vmatprep.subr.bf16.mxu0 %v1639
    %1908 = vmatpush1.bf16.msra.mxu0 %v1638
    %1909 = vmatprep.subr.bf16.mxu0 %v1631
    %1910 = vmatpush1.bf16.msra.mxu0 %v1630
    %1911 = vmatprep.subr.bf16.mxu0 %v1623
    %1912 = vmatpush1.bf16.msra.mxu0 %v1622
    %1913 = vmatprep.subr.bf16.mxu0 %v1615
    %1914 = vmatpush1.bf16.msra.mxu0 %v1614
    %1915 = vmatprep.subr.bf16.mxu0 %v1607
    %1916 = vmatpush1.bf16.msra.mxu0 %v1606
    %1917 = vmatprep.subr.bf16.mxu0 %v1727
    %1918 = vmatpush2.bf16.msra.mxu0 %v1726
    %1919 = vmatprep.subr.bf16.mxu0 %v1719
    %1920 = vmatpush2.bf16.msra.mxu0 %v1718
    %1921 = vmatprep.subr.bf16.mxu0 %v1711
    %1922 = vmatpush2.bf16.msra.mxu0 %v1710
    %1923 = vmatprep.subr.bf16.mxu0 %v1703
    %1924 = vmatpush2.bf16.msra.mxu0 %v1702
    %1925 = vmatprep.subr.bf16.mxu0 %v1695
    %1926 = vmatpush2.bf16.msra.mxu0 %v1694
    %1927 = vmatprep.subr.bf16.mxu0 %v1687
    %1928 = vmatpush2.bf16.msra.mxu0 %v1686
    %1929 = vmatprep.subr.bf16.mxu0 %v1679
    %1930 = vmatpush2.bf16.msra.mxu0 %v1678
    %1931 = vmatprep.subr.bf16.mxu0 %v1671
    %1932 = vmatpush2.bf16.msra.mxu0 %v1670
    %1933 = vmatprep.mubr.bf16.mxu0 %v1178
    %1934 = vmatmul.mubr.bf16.gmra.mxu0 %v1177
    %v1935 = vpop.f32.mrf.mxu0
    %v1936 = vadd.f32 %v1191, %v1935
    %v1937 = vpop.f32.mrf.mxu0
    %v1938 = vadd.f32 %v1195, %v1937
    %v1939 = vpop.f32.mrf.mxu0
    %v1940 = vpop.f32.mrf.mxu0
    %1941 = vdwg.mxu0
    %1942 = vmatprep.subr.bf16.mxu0 %v1665
    %1943 = vmatpush1.bf16.msra.mxu0 %v1664
    %1944 = vmatprep.subr.bf16.mxu0 %v1657
    %1945 = vmatpush1.bf16.msra.mxu0 %v1656
    %1946 = vmatprep.subr.bf16.mxu0 %v1649
    %1947 = vmatpush1.bf16.msra.mxu0 %v1648
    %1948 = vmatprep.subr.bf16.mxu0 %v1641
    %1949 = vmatpush1.bf16.msra.mxu0 %v1640
    %1950 = vmatprep.subr.bf16.mxu0 %v1633
    %1951 = vmatpush1.bf16.msra.mxu0 %v1632
    %1952 = vmatprep.subr.bf16.mxu0 %v1625
    %1953 = vmatpush1.bf16.msra.mxu0 %v1624
    %1954 = vmatprep.subr.bf16.mxu0 %v1617
    %1955 = vmatpush1.bf16.msra.mxu0 %v1616
    %1956 = vmatprep.subr.bf16.mxu0 %v1609
    %1957 = vmatpush1.bf16.msra.mxu0 %v1608
    %1958 = vmatprep.subr.bf16.mxu0 %v1729
    %1959 = vmatpush2.bf16.msra.mxu0 %v1728
    %1960 = vmatprep.subr.bf16.mxu0 %v1721
    %1961 = vmatpush2.bf16.msra.mxu0 %v1720
    %1962 = vmatprep.subr.bf16.mxu0 %v1713
    %1963 = vmatpush2.bf16.msra.mxu0 %v1712
    %1964 = vmatprep.subr.bf16.mxu0 %v1705
    %1965 = vmatpush2.bf16.msra.mxu0 %v1704
    %1966 = vmatprep.subr.bf16.mxu0 %v1697
    %1967 = vmatpush2.bf16.msra.mxu0 %v1696
    %1968 = vmatprep.subr.bf16.mxu0 %v1689
    %1969 = vmatpush2.bf16.msra.mxu0 %v1688
    %1970 = vmatprep.subr.bf16.mxu0 %v1681
    %1971 = vmatpush2.bf16.msra.mxu0 %v1680
    %1972 = vmatprep.subr.bf16.mxu0 %v1673
    %1973 = vmatpush2.bf16.msra.mxu0 %v1672
    %1974 = vmatprep.mubr.bf16.mxu0 %v1178
    %1975 = vmatmul.mubr.bf16.gmra.mxu0 %v1177
    %v1976 = vpop.f32.mrf.mxu0
    %v1977 = vadd.f32 %v1199, %v1976
    %v1978 = vpop.f32.mrf.mxu0
    %v1979 = vadd.f32 %v1203, %v1978
    %v1980 = vpop.f32.mrf.mxu0
    %v1981 = vpop.f32.mrf.mxu0
    %1982 = vdwg.mxu0
    %1983 = vmatprep.subr.bf16.mxu0 %v1667
    %1984 = vmatpush1.bf16.msra.mxu0 %v1666
    %1985 = vmatprep.subr.bf16.mxu0 %v1659
    %1986 = vmatpush1.bf16.msra.mxu0 %v1658
    %1987 = vmatprep.subr.bf16.mxu0 %v1651
    %1988 = vmatpush1.bf16.msra.mxu0 %v1650
    %1989 = vmatprep.subr.bf16.mxu0 %v1643
    %1990 = vmatpush1.bf16.msra.mxu0 %v1642
    %1991 = vmatprep.subr.bf16.mxu0 %v1635
    %1992 = vmatpush1.bf16.msra.mxu0 %v1634
    %1993 = vmatprep.subr.bf16.mxu0 %v1627
    %1994 = vmatpush1.bf16.msra.mxu0 %v1626
    %1995 = vmatprep.subr.bf16.mxu0 %v1619
    %1996 = vmatpush1.bf16.msra.mxu0 %v1618
    %1997 = vmatprep.subr.bf16.mxu0 %v1611
    %1998 = vmatpush1.bf16.msra.mxu0 %v1610
    %1999 = vmatprep.subr.bf16.mxu0 %v1731
    %2000 = vmatpush2.bf16.msra.mxu0 %v1730
    %2001 = vmatprep.subr.bf16.mxu0 %v1723
    %2002 = vmatpush2.bf16.msra.mxu0 %v1722
    %2003 = vmatprep.subr.bf16.mxu0 %v1715
    %2004 = vmatpush2.bf16.msra.mxu0 %v1714
    %2005 = vmatprep.subr.bf16.mxu0 %v1707
    %2006 = vmatpush2.bf16.msra.mxu0 %v1706
    %2007 = vmatprep.subr.bf16.mxu0 %v1699
    %2008 = vmatpush2.bf16.msra.mxu0 %v1698
    %2009 = vmatprep.subr.bf16.mxu0 %v1691
    %2010 = vmatpush2.bf16.msra.mxu0 %v1690
    %2011 = vmatprep.subr.bf16.mxu0 %v1683
    %2012 = vmatpush2.bf16.msra.mxu0 %v1682
    %2013 = vmatprep.subr.bf16.mxu0 %v1675
    %2014 = vmatpush2.bf16.msra.mxu0 %v1674
    %2015 = vmatprep.mubr.bf16.mxu0 %v1178
    %2016 = vmatmul.mubr.bf16.gmra.mxu0 %v1177
    %v2017 = vpop.f32.mrf.mxu0
    %v2018 = vadd.f32 %v1207, %v2017
    %v2019 = vpop.f32.mrf.mxu0
    %v2020 = vadd.f32 %v1211, %v2019
    %v2021 = vpop.f32.mrf.mxu0
    %v2022 = vpop.f32.mrf.mxu0
    %2023 = vdwg.mxu0
    %v2024 = vmax.f32 %v1895, 0.0
    %v2025 = vmax.f32 %v1897, 0.0
    %v2026 = vmax.f32 %v1936, 0.0
    %v2027 = vmax.f32 %v1938, 0.0
    %v2028 = vmax.f32 %v1977, 0.0
    %v2029 = vmax.f32 %v1979, 0.0
    %v2030 = vmax.f32 %v2018, 0.0
    %v2031 = vmax.f32 %v2020, 0.0
    %v2032 = vxor.u32 %v2024, 2147483648
    %v2033 = vxor.u32 %v2025, 2147483648
    %v2034 = vxor.u32 %v2026, 2147483648
    %v2035 = vxor.u32 %v2027, 2147483648
    %v2036 = vxor.u32 %v2028, 2147483648
    %v2037 = vxor.u32 %v2029, 2147483648
    %v2038 = vxor.u32 %v2030, 2147483648
    %v2039 = vxor.u32 %v2031, 2147483648
    %v2040 = vmul.f32 %v2032, 1.442695
    %v2041 = vpow.pop %v2040
    %v2042 = vmul.f32 %v2033, 1.442695
    %v2043 = vpow.pop %v2042
    %v2044 = vmul.f32 %v2034, 1.442695
    %v2045 = vpow.pop %v2044
    %v2046 = vmul.f32 %v2035, 1.442695
    %v2047 = vpow.pop %v2046
    %v2048 = vmul.f32 %v2036, 1.442695
    %v2049 = vpow.pop %v2048
    %v2050 = vmul.f32 %v2037, 1.442695
    %v2051 = vpow.pop %v2050
    %v2052 = vmul.f32 %v2038, 1.442695
    %v2053 = vpow.pop %v2052
    %v2054 = vmul.f32 %v2039, 1.442695
    %v2055 = vpow.pop %v2054
    %v2056 = vadd.f32 %v2041, 1.0
    %v2057 = vadd.f32 %v2043, 1.0
    %v2058 = vadd.f32 %v2045, 1.0
    %v2059 = vadd.f32 %v2047, 1.0
    %v2060 = vadd.f32 %v2049, 1.0
    %v2061 = vadd.f32 %v2051, 1.0
    %v2062 = vadd.f32 %v2053, 1.0
    %v2063 = vadd.f32 %v2055, 1.0
    %v2064 = vrcp.pop %v2056
    %v2065 = vmul.f32 1.0, %v2064
    %v2066 = vrcp.pop %v2057
    %v2067 = vmul.f32 1.0, %v2066
    %v2068 = vrcp.pop %v2058
    %v2069 = vmul.f32 1.0, %v2068
    %v2070 = vrcp.pop %v2059
    %v2071 = vmul.f32 1.0, %v2070
    %v2072 = vrcp.pop %v2060
    %v2073 = vmul.f32 1.0, %v2072
    %v2074 = vrcp.pop %v2061
    %v2075 = vmul.f32 1.0, %v2074
    %v2076 = vrcp.pop %v2062
    %v2077 = vmul.f32 1.0, %v2076
    %v2078 = vrcp.pop %v2063
    %v2079 = vmul.f32 1.0, %v2078
    %v2088 = vcombine.low %v2065, %v2067
    %v2089 = vcombine.low %v2069, %v2071
    %v2091 = vunpack.c.l.s4 1983009808
    %v2092 = vunpack.c.0.s8 %v2091
    %v2093 = vlaneseq
    %v2094 = vshrl.u32 %v2093, 7
    %v2095 = vsub.s32 %v2092, %v2094
    %v2096 = vrot.slane %v2088, %v2095
    %v2098 = vunpack.c.l.s4 1983009808
    %v2099 = vunpack.c.0.s8 %v2098
    %v2100 = vlaneseq
    %v2101 = vshrl.u32 %v2100, 7
    %v2102 = vsub.s32 %v2099, %v2101
    %v2103 = vrot.slane %v2089, %v2102
    %v2104 = vcombine.low %v2096, %v2103
    %v2105 = vcombine.low %v2073, %v2075
    %v2106 = vcombine.low %v2077, %v2079
    %v2108 = vunpack.c.l.s4 1983009808
    %v2109 = vunpack.c.0.s8 %v2108
    %v2110 = vlaneseq
    %v2111 = vshrl.u32 %v2110, 7
    %v2112 = vsub.s32 %v2109, %v2111
    %v2113 = vrot.slane %v2105, %v2112
    %v2115 = vunpack.c.l.s4 1983009808
    %v2116 = vunpack.c.0.s8 %v2115
    %v2117 = vlaneseq
    %v2118 = vshrl.u32 %v2117, 7
    %v2119 = vsub.s32 %v2116, %v2118
    %v2120 = vrot.slane %v2106, %v2119
    %v2121 = vcombine.low %v2113, %v2120
    %2124 = vst [vmem:[%s5] sm:$0xff] %v2104
    %2125 = vst [vmem:[%s5 + $0x8] sm:$0xff] %v2121
    %s2126 = scalar_lea.vmem %s0, 16
    %v2127 = vld [vmem:[%s2126] sm:$0xff]
    %v2128 = vld [vmem:[%s2126 + $0x8] sm:$0xff]
    %s2129 = scalar_lea.vmem [#allocation2], 1024
    %v2130 = vld [vmem:[%s2129] sm:$0xff]
    %v2131 = vld [vmem:[%s2129 + $0x8] sm:$0xff]
    %v2132 = vld [vmem:[%s2129 + $0x10] sm:$0xff]
    %v2133 = vld [vmem:[%s2129 + $0x18] sm:$0xff]
    %v2134 = vld [vmem:[%s2129 + $0x20] sm:$0xff]
    %v2135 = vld [vmem:[%s2129 + $0x28] sm:$0xff]
    %v2136 = vld [vmem:[%s2129 + $0x30] sm:$0xff]
    %v2137 = vld [vmem:[%s2129 + $0x38] sm:$0xff]
    %v2138 = vld [vmem:[%s2129 + $0x40] sm:$0xff]
    %v2139 = vld [vmem:[%s2129 + $0x48] sm:$0xff]
    %v2140 = vld [vmem:[%s2129 + $0x50] sm:$0xff]
    %v2141 = vld [vmem:[%s2129 + $0x58] sm:$0xff]
    %v2142 = vld [vmem:[%s2129 + $0x60] sm:$0xff]
    %v2143 = vld [vmem:[%s2129 + $0x68] sm:$0xff]
    %v2144 = vld [vmem:[%s2129 + $0x70] sm:$0xff]
    %v2145 = vld [vmem:[%s2129 + $0x78] sm:$0xff]
    %v2146 = vld [vmem:[%s2129 + $0x80] sm:$0xff]
    %v2147 = vld [vmem:[%s2129 + $0x88] sm:$0xff]
    %v2148 = vld [vmem:[%s2129 + $0x90] sm:$0xff]
    %v2149 = vld [vmem:[%s2129 + $0x98] sm:$0xff]
    %v2150 = vld [vmem:[%s2129 + $0xa0] sm:$0xff]
    %v2151 = vld [vmem:[%s2129 + $0xa8] sm:$0xff]
    %v2152 = vld [vmem:[%s2129 + $0xb0] sm:$0xff]
    %v2153 = vld [vmem:[%s2129 + $0xb8] sm:$0xff]
    %v2154 = vld [vmem:[%s2129 + $0xc0] sm:$0xff]
    %v2155 = vld [vmem:[%s2129 + $0xc8] sm:$0xff]
    %v2156 = vld [vmem:[%s2129 + $0xd0] sm:$0xff]
    %v2157 = vld [vmem:[%s2129 + $0xd8] sm:$0xff]
    %v2158 = vld [vmem:[%s2129 + $0xe0] sm:$0xff]
    %v2159 = vld [vmem:[%s2129 + $0xe8] sm:$0xff]
    %v2160 = vld [vmem:[%s2129 + $0xf0] sm:$0xff]
    %v2161 = vld [vmem:[%s2129 + $0xf8] sm:$0xff]
    %v2162 = vld [vmem:[%s2129 + $0x100] sm:$0xff]
    %v2163 = vld [vmem:[%s2129 + $0x108] sm:$0xff]
    %v2164 = vld [vmem:[%s2129 + $0x110] sm:$0xff]
    %v2165 = vld [vmem:[%s2129 + $0x118] sm:$0xff]
    %v2166 = vld [vmem:[%s2129 + $0x120] sm:$0xff]
    %v2167 = vld [vmem:[%s2129 + $0x128] sm:$0xff]
    %v2168 = vld [vmem:[%s2129 + $0x130] sm:$0xff]
    %v2169 = vld [vmem:[%s2129 + $0x138] sm:$0xff]
    %v2170 = vld [vmem:[%s2129 + $0x140] sm:$0xff]
    %v2171 = vld [vmem:[%s2129 + $0x148] sm:$0xff]
    %v2172 = vld [vmem:[%s2129 + $0x150] sm:$0xff]
    %v2173 = vld [vmem:[%s2129 + $0x158] sm:$0xff]
    %v2174 = vld [vmem:[%s2129 + $0x160] sm:$0xff]
    %v2175 = vld [vmem:[%s2129 + $0x168] sm:$0xff]
    %v2176 = vld [vmem:[%s2129 + $0x170] sm:$0xff]
    %v2177 = vld [vmem:[%s2129 + $0x178] sm:$0xff]
    %v2178 = vld [vmem:[%s2129 + $0x180] sm:$0xff]
    %v2179 = vld [vmem:[%s2129 + $0x188] sm:$0xff]
    %v2180 = vld [vmem:[%s2129 + $0x190] sm:$0xff]
    %v2181 = vld [vmem:[%s2129 + $0x198] sm:$0xff]
    %v2182 = vld [vmem:[%s2129 + $0x1a0] sm:$0xff]
    %v2183 = vld [vmem:[%s2129 + $0x1a8] sm:$0xff]
    %v2184 = vld [vmem:[%s2129 + $0x1b0] sm:$0xff]
    %v2185 = vld [vmem:[%s2129 + $0x1b8] sm:$0xff]
    %v2186 = vld [vmem:[%s2129 + $0x1c0] sm:$0xff]
    %v2187 = vld [vmem:[%s2129 + $0x1c8] sm:$0xff]
    %v2188 = vld [vmem:[%s2129 + $0x1d0] sm:$0xff]
    %v2189 = vld [vmem:[%s2129 + $0x1d8] sm:$0xff]
    %v2190 = vld [vmem:[%s2129 + $0x1e0] sm:$0xff]
    %v2191 = vld [vmem:[%s2129 + $0x1e8] sm:$0xff]
    %v2192 = vld [vmem:[%s2129 + $0x1f0] sm:$0xff]
    %v2193 = vld [vmem:[%s2129 + $0x1f8] sm:$0xff]
    %v2194 = vld [vmem:[%s2129 + $0x200] sm:$0xff]
    %v2195 = vld [vmem:[%s2129 + $0x208] sm:$0xff]
    %v2196 = vld [vmem:[%s2129 + $0x210] sm:$0xff]
    %v2197 = vld [vmem:[%s2129 + $0x218] sm:$0xff]
    %v2198 = vld [vmem:[%s2129 + $0x220] sm:$0xff]
    %v2199 = vld [vmem:[%s2129 + $0x228] sm:$0xff]
    %v2200 = vld [vmem:[%s2129 + $0x230] sm:$0xff]
    %v2201 = vld [vmem:[%s2129 + $0x238] sm:$0xff]
    %v2202 = vld [vmem:[%s2129 + $0x240] sm:$0xff]
    %v2203 = vld [vmem:[%s2129 + $0x248] sm:$0xff]
    %v2204 = vld [vmem:[%s2129 + $0x250] sm:$0xff]
    %v2205 = vld [vmem:[%s2129 + $0x258] sm:$0xff]
    %v2206 = vld [vmem:[%s2129 + $0x260] sm:$0xff]
    %v2207 = vld [vmem:[%s2129 + $0x268] sm:$0xff]
    %v2208 = vld [vmem:[%s2129 + $0x270] sm:$0xff]
    %v2209 = vld [vmem:[%s2129 + $0x278] sm:$0xff]
    %v2210 = vld [vmem:[%s2129 + $0x280] sm:$0xff]
    %v2211 = vld [vmem:[%s2129 + $0x288] sm:$0xff]
    %v2212 = vld [vmem:[%s2129 + $0x290] sm:$0xff]
    %v2213 = vld [vmem:[%s2129 + $0x298] sm:$0xff]
    %v2214 = vld [vmem:[%s2129 + $0x2a0] sm:$0xff]
    %v2215 = vld [vmem:[%s2129 + $0x2a8] sm:$0xff]
    %v2216 = vld [vmem:[%s2129 + $0x2b0] sm:$0xff]
    %v2217 = vld [vmem:[%s2129 + $0x2b8] sm:$0xff]
    %v2218 = vld [vmem:[%s2129 + $0x2c0] sm:$0xff]
    %v2219 = vld [vmem:[%s2129 + $0x2c8] sm:$0xff]
    %v2220 = vld [vmem:[%s2129 + $0x2d0] sm:$0xff]
    %v2221 = vld [vmem:[%s2129 + $0x2d8] sm:$0xff]
    %v2222 = vld [vmem:[%s2129 + $0x2e0] sm:$0xff]
    %v2223 = vld [vmem:[%s2129 + $0x2e8] sm:$0xff]
    %v2224 = vld [vmem:[%s2129 + $0x2f0] sm:$0xff]
    %v2225 = vld [vmem:[%s2129 + $0x2f8] sm:$0xff]
    %v2226 = vld [vmem:[%s2129 + $0x300] sm:$0xff]
    %v2227 = vld [vmem:[%s2129 + $0x308] sm:$0xff]
    %v2228 = vld [vmem:[%s2129 + $0x310] sm:$0xff]
    %v2229 = vld [vmem:[%s2129 + $0x318] sm:$0xff]
    %v2230 = vld [vmem:[%s2129 + $0x320] sm:$0xff]
    %v2231 = vld [vmem:[%s2129 + $0x328] sm:$0xff]
    %v2232 = vld [vmem:[%s2129 + $0x330] sm:$0xff]
    %v2233 = vld [vmem:[%s2129 + $0x338] sm:$0xff]
    %v2234 = vld [vmem:[%s2129 + $0x340] sm:$0xff]
    %v2235 = vld [vmem:[%s2129 + $0x348] sm:$0xff]
    %v2236 = vld [vmem:[%s2129 + $0x350] sm:$0xff]
    %v2237 = vld [vmem:[%s2129 + $0x358] sm:$0xff]
    %v2238 = vld [vmem:[%s2129 + $0x360] sm:$0xff]
    %v2239 = vld [vmem:[%s2129 + $0x368] sm:$0xff]
    %v2240 = vld [vmem:[%s2129 + $0x370] sm:$0xff]
    %v2241 = vld [vmem:[%s2129 + $0x378] sm:$0xff]
    %v2242 = vld [vmem:[%s2129 + $0x380] sm:$0xff]
    %v2243 = vld [vmem:[%s2129 + $0x388] sm:$0xff]
    %v2244 = vld [vmem:[%s2129 + $0x390] sm:$0xff]
    %v2245 = vld [vmem:[%s2129 + $0x398] sm:$0xff]
    %v2246 = vld [vmem:[%s2129 + $0x3a0] sm:$0xff]
    %v2247 = vld [vmem:[%s2129 + $0x3a8] sm:$0xff]
    %v2248 = vld [vmem:[%s2129 + $0x3b0] sm:$0xff]
    %v2249 = vld [vmem:[%s2129 + $0x3b8] sm:$0xff]
    %v2250 = vld [vmem:[%s2129 + $0x3c0] sm:$0xff]
    %v2251 = vld [vmem:[%s2129 + $0x3c8] sm:$0xff]
    %v2252 = vld [vmem:[%s2129 + $0x3d0] sm:$0xff]
    %v2253 = vld [vmem:[%s2129 + $0x3d8] sm:$0xff]
    %v2254 = vld [vmem:[%s2129 + $0x3e0] sm:$0xff]
    %v2255 = vld [vmem:[%s2129 + $0x3e8] sm:$0xff]
    %v2256 = vld [vmem:[%s2129 + $0x3f0] sm:$0xff]
    %v2257 = vld [vmem:[%s2129 + $0x3f8] sm:$0xff]
    %s2258 = scalar_lea.vmem %s2, 2
    %v2259 = vld [vmem:[%s2258] sm:$0x3]
    %s2260 = scalar_lea.vmem [#allocation4], 1024
    %v2261 = vld [vmem:[%s2260] sm:$0xff]
    %v2262 = vld [vmem:[%s2260 + $0x8] sm:$0xff]
    %v2263 = vld [vmem:[%s2260 + $0x10] sm:$0xff]
    %v2264 = vld [vmem:[%s2260 + $0x18] sm:$0xff]
    %v2265 = vld [vmem:[%s2260 + $0x20] sm:$0xff]
    %v2266 = vld [vmem:[%s2260 + $0x28] sm:$0xff]
    %v2267 = vld [vmem:[%s2260 + $0x30] sm:$0xff]
    %v2268 = vld [vmem:[%s2260 + $0x38] sm:$0xff]
    %v2269 = vld [vmem:[%s2260 + $0x40] sm:$0xff]
    %v2270 = vld [vmem:[%s2260 + $0x48] sm:$0xff]
    %v2271 = vld [vmem:[%s2260 + $0x50] sm:$0xff]
    %v2272 = vld [vmem:[%s2260 + $0x58] sm:$0xff]
    %v2273 = vld [vmem:[%s2260 + $0x60] sm:$0xff]
    %v2274 = vld [vmem:[%s2260 + $0x68] sm:$0xff]
    %v2275 = vld [vmem:[%s2260 + $0x70] sm:$0xff]
    %v2276 = vld [vmem:[%s2260 + $0x78] sm:$0xff]
    %v2277 = vld [vmem:[%s2260 + $0x80] sm:$0xff]
    %v2278 = vld [vmem:[%s2260 + $0x88] sm:$0xff]
    %v2279 = vld [vmem:[%s2260 + $0x90] sm:$0xff]
    %v2280 = vld [vmem:[%s2260 + $0x98] sm:$0xff]
    %v2281 = vld [vmem:[%s2260 + $0xa0] sm:$0xff]
    %v2282 = vld [vmem:[%s2260 + $0xa8] sm:$0xff]
    %v2283 = vld [vmem:[%s2260 + $0xb0] sm:$0xff]
    %v2284 = vld [vmem:[%s2260 + $0xb8] sm:$0xff]
    %v2285 = vld [vmem:[%s2260 + $0xc0] sm:$0xff]
    %v2286 = vld [vmem:[%s2260 + $0xc8] sm:$0xff]
    %v2287 = vld [vmem:[%s2260 + $0xd0] sm:$0xff]
    %v2288 = vld [vmem:[%s2260 + $0xd8] sm:$0xff]
    %v2289 = vld [vmem:[%s2260 + $0xe0] sm:$0xff]
    %v2290 = vld [vmem:[%s2260 + $0xe8] sm:$0xff]
    %v2291 = vld [vmem:[%s2260 + $0xf0] sm:$0xff]
    %v2292 = vld [vmem:[%s2260 + $0xf8] sm:$0xff]
    %v2293 = vld [vmem:[%s2260 + $0x100] sm:$0xff]
    %v2294 = vld [vmem:[%s2260 + $0x108] sm:$0xff]
    %v2295 = vld [vmem:[%s2260 + $0x110] sm:$0xff]
    %v2296 = vld [vmem:[%s2260 + $0x118] sm:$0xff]
    %v2297 = vld [vmem:[%s2260 + $0x120] sm:$0xff]
    %v2298 = vld [vmem:[%s2260 + $0x128] sm:$0xff]
    %v2299 = vld [vmem:[%s2260 + $0x130] sm:$0xff]
    %v2300 = vld [vmem:[%s2260 + $0x138] sm:$0xff]
    %v2301 = vld [vmem:[%s2260 + $0x140] sm:$0xff]
    %v2302 = vld [vmem:[%s2260 + $0x148] sm:$0xff]
    %v2303 = vld [vmem:[%s2260 + $0x150] sm:$0xff]
    %v2304 = vld [vmem:[%s2260 + $0x158] sm:$0xff]
    %v2305 = vld [vmem:[%s2260 + $0x160] sm:$0xff]
    %v2306 = vld [vmem:[%s2260 + $0x168] sm:$0xff]
    %v2307 = vld [vmem:[%s2260 + $0x170] sm:$0xff]
    %v2308 = vld [vmem:[%s2260 + $0x178] sm:$0xff]
    %v2309 = vld [vmem:[%s2260 + $0x180] sm:$0xff]
    %v2310 = vld [vmem:[%s2260 + $0x188] sm:$0xff]
    %v2311 = vld [vmem:[%s2260 + $0x190] sm:$0xff]
    %v2312 = vld [vmem:[%s2260 + $0x198] sm:$0xff]
    %v2313 = vld [vmem:[%s2260 + $0x1a0] sm:$0xff]
    %v2314 = vld [vmem:[%s2260 + $0x1a8] sm:$0xff]
    %v2315 = vld [vmem:[%s2260 + $0x1b0] sm:$0xff]
    %v2316 = vld [vmem:[%s2260 + $0x1b8] sm:$0xff]
    %v2317 = vld [vmem:[%s2260 + $0x1c0] sm:$0xff]
    %v2318 = vld [vmem:[%s2260 + $0x1c8] sm:$0xff]
    %v2319 = vld [vmem:[%s2260 + $0x1d0] sm:$0xff]
    %v2320 = vld [vmem:[%s2260 + $0x1d8] sm:$0xff]
    %v2321 = vld [vmem:[%s2260 + $0x1e0] sm:$0xff]
    %v2322 = vld [vmem:[%s2260 + $0x1e8] sm:$0xff]
    %v2323 = vld [vmem:[%s2260 + $0x1f0] sm:$0xff]
    %v2324 = vld [vmem:[%s2260 + $0x1f8] sm:$0xff]
    %v2325 = vld [vmem:[%s2260 + $0x200] sm:$0xff]
    %v2326 = vld [vmem:[%s2260 + $0x208] sm:$0xff]
    %v2327 = vld [vmem:[%s2260 + $0x210] sm:$0xff]
    %v2328 = vld [vmem:[%s2260 + $0x218] sm:$0xff]
    %v2329 = vld [vmem:[%s2260 + $0x220] sm:$0xff]
    %v2330 = vld [vmem:[%s2260 + $0x228] sm:$0xff]
    %v2331 = vld [vmem:[%s2260 + $0x230] sm:$0xff]
    %v2332 = vld [vmem:[%s2260 + $0x238] sm:$0xff]
    %v2333 = vld [vmem:[%s2260 + $0x240] sm:$0xff]
    %v2334 = vld [vmem:[%s2260 + $0x248] sm:$0xff]
    %v2335 = vld [vmem:[%s2260 + $0x250] sm:$0xff]
    %v2336 = vld [vmem:[%s2260 + $0x258] sm:$0xff]
    %v2337 = vld [vmem:[%s2260 + $0x260] sm:$0xff]
    %v2338 = vld [vmem:[%s2260 + $0x268] sm:$0xff]
    %v2339 = vld [vmem:[%s2260 + $0x270] sm:$0xff]
    %v2340 = vld [vmem:[%s2260 + $0x278] sm:$0xff]
    %v2341 = vld [vmem:[%s2260 + $0x280] sm:$0xff]
    %v2342 = vld [vmem:[%s2260 + $0x288] sm:$0xff]
    %v2343 = vld [vmem:[%s2260 + $0x290] sm:$0xff]
    %v2344 = vld [vmem:[%s2260 + $0x298] sm:$0xff]
    %v2345 = vld [vmem:[%s2260 + $0x2a0] sm:$0xff]
    %v2346 = vld [vmem:[%s2260 + $0x2a8] sm:$0xff]
    %v2347 = vld [vmem:[%s2260 + $0x2b0] sm:$0xff]
    %v2348 = vld [vmem:[%s2260 + $0x2b8] sm:$0xff]
    %v2349 = vld [vmem:[%s2260 + $0x2c0] sm:$0xff]
    %v2350 = vld [vmem:[%s2260 + $0x2c8] sm:$0xff]
    %v2351 = vld [vmem:[%s2260 + $0x2d0] sm:$0xff]
    %v2352 = vld [vmem:[%s2260 + $0x2d8] sm:$0xff]
    %v2353 = vld [vmem:[%s2260 + $0x2e0] sm:$0xff]
    %v2354 = vld [vmem:[%s2260 + $0x2e8] sm:$0xff]
    %v2355 = vld [vmem:[%s2260 + $0x2f0] sm:$0xff]
    %v2356 = vld [vmem:[%s2260 + $0x2f8] sm:$0xff]
    %v2357 = vld [vmem:[%s2260 + $0x300] sm:$0xff]
    %v2358 = vld [vmem:[%s2260 + $0x308] sm:$0xff]
    %v2359 = vld [vmem:[%s2260 + $0x310] sm:$0xff]
    %v2360 = vld [vmem:[%s2260 + $0x318] sm:$0xff]
    %v2361 = vld [vmem:[%s2260 + $0x320] sm:$0xff]
    %v2362 = vld [vmem:[%s2260 + $0x328] sm:$0xff]
    %v2363 = vld [vmem:[%s2260 + $0x330] sm:$0xff]
    %v2364 = vld [vmem:[%s2260 + $0x338] sm:$0xff]
    %v2365 = vld [vmem:[%s2260 + $0x340] sm:$0xff]
    %v2366 = vld [vmem:[%s2260 + $0x348] sm:$0xff]
    %v2367 = vld [vmem:[%s2260 + $0x350] sm:$0xff]
    %v2368 = vld [vmem:[%s2260 + $0x358] sm:$0xff]
    %v2369 = vld [vmem:[%s2260 + $0x360] sm:$0xff]
    %v2370 = vld [vmem:[%s2260 + $0x368] sm:$0xff]
    %v2371 = vld [vmem:[%s2260 + $0x370] sm:$0xff]
    %v2372 = vld [vmem:[%s2260 + $0x378] sm:$0xff]
    %v2373 = vld [vmem:[%s2260 + $0x380] sm:$0xff]
    %v2374 = vld [vmem:[%s2260 + $0x388] sm:$0xff]
    %v2375 = vld [vmem:[%s2260 + $0x390] sm:$0xff]
    %v2376 = vld [vmem:[%s2260 + $0x398] sm:$0xff]
    %v2377 = vld [vmem:[%s2260 + $0x3a0] sm:$0xff]
    %v2378 = vld [vmem:[%s2260 + $0x3a8] sm:$0xff]
    %v2379 = vld [vmem:[%s2260 + $0x3b0] sm:$0xff]
    %v2380 = vld [vmem:[%s2260 + $0x3b8] sm:$0xff]
    %v2381 = vld [vmem:[%s2260 + $0x3c0] sm:$0xff]
    %v2382 = vld [vmem:[%s2260 + $0x3c8] sm:$0xff]
    %v2383 = vld [vmem:[%s2260 + $0x3d0] sm:$0xff]
    %v2384 = vld [vmem:[%s2260 + $0x3d8] sm:$0xff]
    %v2385 = vld [vmem:[%s2260 + $0x3e0] sm:$0xff]
    %v2386 = vld [vmem:[%s2260 + $0x3e8] sm:$0xff]
    %v2387 = vld [vmem:[%s2260 + $0x3f0] sm:$0xff]
    %v2388 = vld [vmem:[%s2260 + $0x3f8] sm:$0xff]
    %s2389 = scalar_lea.vmem %s4, 8
    %v2390 = vld [vmem:[%s2389] sm:$0xff]
    %v2393 = vcombine.high %v2127, %v2127
    %v2395 = vunpack.c.l.s4 1983009808
    %v2396 = vunpack.c.0.s8 %v2395
    %v2397 = vlaneseq
    %v2398 = vshrl.u32 %v2397, 7
    %v2399 = vsub.s32 %v2396, %v2398
    %v2400 = vrot.slane %v2127, %v2399
    %v2402 = vunpack.c.l.s4 1983009808
    %v2403 = vunpack.c.0.s8 %v2402
    %v2404 = vlaneseq
    %v2405 = vshrl.u32 %v2404, 7
    %v2406 = vsub.s32 %v2403, %v2405
    %v2407 = vrot.slane %v2393, %v2406
    %v2408 = vcombine.high %v2400, %v2400
    %v2409 = vcombine.high %v2407, %v2407
    %v2410 = vcombine.high %v2128, %v2128
    %v2412 = vunpack.c.l.s4 1983009808
    %v2413 = vunpack.c.0.s8 %v2412
    %v2414 = vlaneseq
    %v2415 = vshrl.u32 %v2414, 7
    %v2416 = vsub.s32 %v2413, %v2415
    %v2417 = vrot.slane %v2128, %v2416
    %v2419 = vunpack.c.l.s4 1983009808
    %v2420 = vunpack.c.0.s8 %v2419
    %v2421 = vlaneseq
    %v2422 = vshrl.u32 %v2421, 7
    %v2423 = vsub.s32 %v2420, %v2422
    %v2424 = vrot.slane %v2410, %v2423
    %v2425 = vcombine.high %v2417, %v2417
    %v2426 = vcombine.high %v2424, %v2424
    %v2435 = vpack.c.bf16 %v2400, %v2400
    %v2436 = vpack.c.bf16 %v2408, %v2408
    %v2437 = vpack.c.bf16 %v2407, %v2407
    %v2438 = vpack.c.bf16 %v2409, %v2409
    %v2439 = vpack.c.bf16 %v2417, %v2417
    %v2440 = vpack.c.bf16 %v2425, %v2425
    %v2441 = vpack.c.bf16 %v2424, %v2424
    %v2442 = vpack.c.bf16 %v2426, %v2426
    %v2444 = vlaneseq
    %v2445 = vshrl.u32 %v2444, 7
    %v2446 = vsub.s32 0, %v2445
    %v2447 = vrot.slane %v2259, %v2446
    %v2448 = vlaneseq
    %v2449 = vshrl.u32 %v2448, 7
    %v2450 = vsub.s32 1, %v2449
    %v2451 = vrot.slane %v2259, %v2450
    %v2582 = vunpack.c.l.b16 %v2130
    %v2583 = vunpack.c.h.b16 %v2130
    %v2584 = vunpack.c.l.b16 %v2131
    %v2585 = vunpack.c.h.b16 %v2131
    %v2586 = vunpack.c.l.b16 %v2132
    %v2587 = vunpack.c.h.b16 %v2132
    %v2588 = vunpack.c.l.b16 %v2133
    %v2589 = vunpack.c.h.b16 %v2133
    %v2590 = vunpack.c.l.b16 %v2134
    %v2591 = vunpack.c.h.b16 %v2134
    %v2592 = vunpack.c.l.b16 %v2135
    %v2593 = vunpack.c.h.b16 %v2135
    %v2594 = vunpack.c.l.b16 %v2136
    %v2595 = vunpack.c.h.b16 %v2136
    %v2596 = vunpack.c.l.b16 %v2137
    %v2597 = vunpack.c.h.b16 %v2137
    %v2598 = vunpack.c.l.b16 %v2138
    %v2599 = vunpack.c.h.b16 %v2138
    %v2600 = vunpack.c.l.b16 %v2139
    %v2601 = vunpack.c.h.b16 %v2139
    %v2602 = vunpack.c.l.b16 %v2140
    %v2603 = vunpack.c.h.b16 %v2140
    %v2604 = vunpack.c.l.b16 %v2141
    %v2605 = vunpack.c.h.b16 %v2141
    %v2606 = vunpack.c.l.b16 %v2142
    %v2607 = vunpack.c.h.b16 %v2142
    %v2608 = vunpack.c.l.b16 %v2143
    %v2609 = vunpack.c.h.b16 %v2143
    %v2610 = vunpack.c.l.b16 %v2144
    %v2611 = vunpack.c.h.b16 %v2144
    %v2612 = vunpack.c.l.b16 %v2145
    %v2613 = vunpack.c.h.b16 %v2145
    %v2614 = vunpack.c.l.b16 %v2146
    %v2615 = vunpack.c.h.b16 %v2146
    %v2616 = vunpack.c.l.b16 %v2147
    %v2617 = vunpack.c.h.b16 %v2147
    %v2618 = vunpack.c.l.b16 %v2148
    %v2619 = vunpack.c.h.b16 %v2148
    %v2620 = vunpack.c.l.b16 %v2149
    %v2621 = vunpack.c.h.b16 %v2149
    %v2622 = vunpack.c.l.b16 %v2150
    %v2623 = vunpack.c.h.b16 %v2150
    %v2624 = vunpack.c.l.b16 %v2151
    %v2625 = vunpack.c.h.b16 %v2151
    %v2626 = vunpack.c.l.b16 %v2152
    %v2627 = vunpack.c.h.b16 %v2152
    %v2628 = vunpack.c.l.b16 %v2153
    %v2629 = vunpack.c.h.b16 %v2153
    %v2630 = vunpack.c.l.b16 %v2154
    %v2631 = vunpack.c.h.b16 %v2154
    %v2632 = vunpack.c.l.b16 %v2155
    %v2633 = vunpack.c.h.b16 %v2155
    %v2634 = vunpack.c.l.b16 %v2156
    %v2635 = vunpack.c.h.b16 %v2156
    %v2636 = vunpack.c.l.b16 %v2157
    %v2637 = vunpack.c.h.b16 %v2157
    %v2638 = vunpack.c.l.b16 %v2158
    %v2639 = vunpack.c.h.b16 %v2158
    %v2640 = vunpack.c.l.b16 %v2159
    %v2641 = vunpack.c.h.b16 %v2159
    %v2642 = vunpack.c.l.b16 %v2160
    %v2643 = vunpack.c.h.b16 %v2160
    %v2644 = vunpack.c.l.b16 %v2161
    %v2645 = vunpack.c.h.b16 %v2161
    %v2646 = vunpack.c.l.b16 %v2162
    %v2647 = vunpack.c.h.b16 %v2162
    %v2648 = vunpack.c.l.b16 %v2163
    %v2649 = vunpack.c.h.b16 %v2163
    %v2650 = vunpack.c.l.b16 %v2164
    %v2651 = vunpack.c.h.b16 %v2164
    %v2652 = vunpack.c.l.b16 %v2165
    %v2653 = vunpack.c.h.b16 %v2165
    %v2654 = vunpack.c.l.b16 %v2166
    %v2655 = vunpack.c.h.b16 %v2166
    %v2656 = vunpack.c.l.b16 %v2167
    %v2657 = vunpack.c.h.b16 %v2167
    %v2658 = vunpack.c.l.b16 %v2168
    %v2659 = vunpack.c.h.b16 %v2168
    %v2660 = vunpack.c.l.b16 %v2169
    %v2661 = vunpack.c.h.b16 %v2169
    %v2662 = vunpack.c.l.b16 %v2170
    %v2663 = vunpack.c.h.b16 %v2170
    %v2664 = vunpack.c.l.b16 %v2171
    %v2665 = vunpack.c.h.b16 %v2171
    %v2666 = vunpack.c.l.b16 %v2172
    %v2667 = vunpack.c.h.b16 %v2172
    %v2668 = vunpack.c.l.b16 %v2173
    %v2669 = vunpack.c.h.b16 %v2173
    %v2670 = vunpack.c.l.b16 %v2174
    %v2671 = vunpack.c.h.b16 %v2174
    %v2672 = vunpack.c.l.b16 %v2175
    %v2673 = vunpack.c.h.b16 %v2175
    %v2674 = vunpack.c.l.b16 %v2176
    %v2675 = vunpack.c.h.b16 %v2176
    %v2676 = vunpack.c.l.b16 %v2177
    %v2677 = vunpack.c.h.b16 %v2177
    %v2678 = vunpack.c.l.b16 %v2178
    %v2679 = vunpack.c.h.b16 %v2178
    %v2680 = vunpack.c.l.b16 %v2179
    %v2681 = vunpack.c.h.b16 %v2179
    %v2682 = vunpack.c.l.b16 %v2180
    %v2683 = vunpack.c.h.b16 %v2180
    %v2684 = vunpack.c.l.b16 %v2181
    %v2685 = vunpack.c.h.b16 %v2181
    %v2686 = vunpack.c.l.b16 %v2182
    %v2687 = vunpack.c.h.b16 %v2182
    %v2688 = vunpack.c.l.b16 %v2183
    %v2689 = vunpack.c.h.b16 %v2183
    %v2690 = vunpack.c.l.b16 %v2184
    %v2691 = vunpack.c.h.b16 %v2184
    %v2692 = vunpack.c.l.b16 %v2185
    %v2693 = vunpack.c.h.b16 %v2185
    %v2694 = vunpack.c.l.b16 %v2186
    %v2695 = vunpack.c.h.b16 %v2186
    %v2696 = vunpack.c.l.b16 %v2187
    %v2697 = vunpack.c.h.b16 %v2187
    %v2698 = vunpack.c.l.b16 %v2188
    %v2699 = vunpack.c.h.b16 %v2188
    %v2700 = vunpack.c.l.b16 %v2189
    %v2701 = vunpack.c.h.b16 %v2189
    %v2702 = vunpack.c.l.b16 %v2190
    %v2703 = vunpack.c.h.b16 %v2190
    %v2704 = vunpack.c.l.b16 %v2191
    %v2705 = vunpack.c.h.b16 %v2191
    %v2706 = vunpack.c.l.b16 %v2192
    %v2707 = vunpack.c.h.b16 %v2192
    %v2708 = vunpack.c.l.b16 %v2193
    %v2709 = vunpack.c.h.b16 %v2193
    %v2710 = vunpack.c.l.b16 %v2194
    %v2711 = vunpack.c.h.b16 %v2194
    %v2712 = vunpack.c.l.b16 %v2195
    %v2713 = vunpack.c.h.b16 %v2195
    %v2714 = vunpack.c.l.b16 %v2196
    %v2715 = vunpack.c.h.b16 %v2196
    %v2716 = vunpack.c.l.b16 %v2197
    %v2717 = vunpack.c.h.b16 %v2197
    %v2718 = vunpack.c.l.b16 %v2198
    %v2719 = vunpack.c.h.b16 %v2198
    %v2720 = vunpack.c.l.b16 %v2199
    %v2721 = vunpack.c.h.b16 %v2199
    %v2722 = vunpack.c.l.b16 %v2200
    %v2723 = vunpack.c.h.b16 %v2200
    %v2724 = vunpack.c.l.b16 %v2201
    %v2725 = vunpack.c.h.b16 %v2201
    %v2726 = vunpack.c.l.b16 %v2202
    %v2727 = vunpack.c.h.b16 %v2202
    %v2728 = vunpack.c.l.b16 %v2203
    %v2729 = vunpack.c.h.b16 %v2203
    %v2730 = vunpack.c.l.b16 %v2204
    %v2731 = vunpack.c.h.b16 %v2204
    %v2732 = vunpack.c.l.b16 %v2205
    %v2733 = vunpack.c.h.b16 %v2205
    %v2734 = vunpack.c.l.b16 %v2206
    %v2735 = vunpack.c.h.b16 %v2206
    %v2736 = vunpack.c.l.b16 %v2207
    %v2737 = vunpack.c.h.b16 %v2207
    %v2738 = vunpack.c.l.b16 %v2208
    %v2739 = vunpack.c.h.b16 %v2208
    %v2740 = vunpack.c.l.b16 %v2209
    %v2741 = vunpack.c.h.b16 %v2209
    %v2742 = vunpack.c.l.b16 %v2210
    %v2743 = vunpack.c.h.b16 %v2210
    %v2744 = vunpack.c.l.b16 %v2211
    %v2745 = vunpack.c.h.b16 %v2211
    %v2746 = vunpack.c.l.b16 %v2212
    %v2747 = vunpack.c.h.b16 %v2212
    %v2748 = vunpack.c.l.b16 %v2213
    %v2749 = vunpack.c.h.b16 %v2213
    %v2750 = vunpack.c.l.b16 %v2214
    %v2751 = vunpack.c.h.b16 %v2214
    %v2752 = vunpack.c.l.b16 %v2215
    %v2753 = vunpack.c.h.b16 %v2215
    %v2754 = vunpack.c.l.b16 %v2216
    %v2755 = vunpack.c.h.b16 %v2216
    %v2756 = vunpack.c.l.b16 %v2217
    %v2757 = vunpack.c.h.b16 %v2217
    %v2758 = vunpack.c.l.b16 %v2218
    %v2759 = vunpack.c.h.b16 %v2218
    %v2760 = vunpack.c.l.b16 %v2219
    %v2761 = vunpack.c.h.b16 %v2219
    %v2762 = vunpack.c.l.b16 %v2220
    %v2763 = vunpack.c.h.b16 %v2220
    %v2764 = vunpack.c.l.b16 %v2221
    %v2765 = vunpack.c.h.b16 %v2221
    %v2766 = vunpack.c.l.b16 %v2222
    %v2767 = vunpack.c.h.b16 %v2222
    %v2768 = vunpack.c.l.b16 %v2223
    %v2769 = vunpack.c.h.b16 %v2223
    %v2770 = vunpack.c.l.b16 %v2224
    %v2771 = vunpack.c.h.b16 %v2224
    %v2772 = vunpack.c.l.b16 %v2225
    %v2773 = vunpack.c.h.b16 %v2225
    %v2774 = vunpack.c.l.b16 %v2226
    %v2775 = vunpack.c.h.b16 %v2226
    %v2776 = vunpack.c.l.b16 %v2227
    %v2777 = vunpack.c.h.b16 %v2227
    %v2778 = vunpack.c.l.b16 %v2228
    %v2779 = vunpack.c.h.b16 %v2228
    %v2780 = vunpack.c.l.b16 %v2229
    %v2781 = vunpack.c.h.b16 %v2229
    %v2782 = vunpack.c.l.b16 %v2230
    %v2783 = vunpack.c.h.b16 %v2230
    %v2784 = vunpack.c.l.b16 %v2231
    %v2785 = vunpack.c.h.b16 %v2231
    %v2786 = vunpack.c.l.b16 %v2232
    %v2787 = vunpack.c.h.b16 %v2232
    %v2788 = vunpack.c.l.b16 %v2233
    %v2789 = vunpack.c.h.b16 %v2233
    %v2790 = vunpack.c.l.b16 %v2234
    %v2791 = vunpack.c.h.b16 %v2234
    %v2792 = vunpack.c.l.b16 %v2235
    %v2793 = vunpack.c.h.b16 %v2235
    %v2794 = vunpack.c.l.b16 %v2236
    %v2795 = vunpack.c.h.b16 %v2236
    %v2796 = vunpack.c.l.b16 %v2237
    %v2797 = vunpack.c.h.b16 %v2237
    %v2798 = vunpack.c.l.b16 %v2238
    %v2799 = vunpack.c.h.b16 %v2238
    %v2800 = vunpack.c.l.b16 %v2239
    %v2801 = vunpack.c.h.b16 %v2239
    %v2802 = vunpack.c.l.b16 %v2240
    %v2803 = vunpack.c.h.b16 %v2240
    %v2804 = vunpack.c.l.b16 %v2241
    %v2805 = vunpack.c.h.b16 %v2241
    %v2806 = vunpack.c.l.b16 %v2242
    %v2807 = vunpack.c.h.b16 %v2242
    %v2808 = vunpack.c.l.b16 %v2243
    %v2809 = vunpack.c.h.b16 %v2243
    %v2810 = vunpack.c.l.b16 %v2244
    %v2811 = vunpack.c.h.b16 %v2244
    %v2812 = vunpack.c.l.b16 %v2245
    %v2813 = vunpack.c.h.b16 %v2245
    %v2814 = vunpack.c.l.b16 %v2246
    %v2815 = vunpack.c.h.b16 %v2246
    %v2816 = vunpack.c.l.b16 %v2247
    %v2817 = vunpack.c.h.b16 %v2247
    %v2818 = vunpack.c.l.b16 %v2248
    %v2819 = vunpack.c.h.b16 %v2248
    %v2820 = vunpack.c.l.b16 %v2249
    %v2821 = vunpack.c.h.b16 %v2249
    %v2822 = vunpack.c.l.b16 %v2250
    %v2823 = vunpack.c.h.b16 %v2250
    %v2824 = vunpack.c.l.b16 %v2251
    %v2825 = vunpack.c.h.b16 %v2251
    %v2826 = vunpack.c.l.b16 %v2252
    %v2827 = vunpack.c.h.b16 %v2252
    %v2828 = vunpack.c.l.b16 %v2253
    %v2829 = vunpack.c.h.b16 %v2253
    %v2830 = vunpack.c.l.b16 %v2254
    %v2831 = vunpack.c.h.b16 %v2254
    %v2832 = vunpack.c.l.b16 %v2255
    %v2833 = vunpack.c.h.b16 %v2255
    %v2834 = vunpack.c.l.b16 %v2256
    %v2835 = vunpack.c.h.b16 %v2256
    %v2836 = vunpack.c.l.b16 %v2257
    %v2837 = vunpack.c.h.b16 %v2257
    %v2838 = vpack.c.b16 %v2584, %v2582
    %v2839 = vpack.c.b16 %v2585, %v2583
    %v2840 = vpack.c.b16 %v2588, %v2586
    %v2841 = vpack.c.b16 %v2589, %v2587
    %v2842 = vpack.c.b16 %v2592, %v2590
    %v2843 = vpack.c.b16 %v2593, %v2591
    %v2844 = vpack.c.b16 %v2596, %v2594
    %v2845 = vpack.c.b16 %v2597, %v2595
    %v2846 = vpack.c.b16 %v2600, %v2598
    %v2847 = vpack.c.b16 %v2601, %v2599
    %v2848 = vpack.c.b16 %v2604, %v2602
    %v2849 = vpack.c.b16 %v2605, %v2603
    %v2850 = vpack.c.b16 %v2608, %v2606
    %v2851 = vpack.c.b16 %v2609, %v2607
    %v2852 = vpack.c.b16 %v2612, %v2610
    %v2853 = vpack.c.b16 %v2613, %v2611
    %v2854 = vpack.c.b16 %v2616, %v2614
    %v2855 = vpack.c.b16 %v2617, %v2615
    %v2856 = vpack.c.b16 %v2620, %v2618
    %v2857 = vpack.c.b16 %v2621, %v2619
    %v2858 = vpack.c.b16 %v2624, %v2622
    %v2859 = vpack.c.b16 %v2625, %v2623
    %v2860 = vpack.c.b16 %v2628, %v2626
    %v2861 = vpack.c.b16 %v2629, %v2627
    %v2862 = vpack.c.b16 %v2632, %v2630
    %v2863 = vpack.c.b16 %v2633, %v2631
    %v2864 = vpack.c.b16 %v2636, %v2634
    %v2865 = vpack.c.b16 %v2637, %v2635
    %v2866 = vpack.c.b16 %v2640, %v2638
    %v2867 = vpack.c.b16 %v2641, %v2639
    %v2868 = vpack.c.b16 %v2644, %v2642
    %v2869 = vpack.c.b16 %v2645, %v2643
    %v2870 = vpack.c.b16 %v2648, %v2646
    %v2871 = vpack.c.b16 %v2649, %v2647
    %v2872 = vpack.c.b16 %v2652, %v2650
    %v2873 = vpack.c.b16 %v2653, %v2651
    %v2874 = vpack.c.b16 %v2656, %v2654
    %v2875 = vpack.c.b16 %v2657, %v2655
    %v2876 = vpack.c.b16 %v2660, %v2658
    %v2877 = vpack.c.b16 %v2661, %v2659
    %v2878 = vpack.c.b16 %v2664, %v2662
    %v2879 = vpack.c.b16 %v2665, %v2663
    %v2880 = vpack.c.b16 %v2668, %v2666
    %v2881 = vpack.c.b16 %v2669, %v2667
    %v2882 = vpack.c.b16 %v2672, %v2670
    %v2883 = vpack.c.b16 %v2673, %v2671
    %v2884 = vpack.c.b16 %v2676, %v2674
    %v2885 = vpack.c.b16 %v2677, %v2675
    %v2886 = vpack.c.b16 %v2680, %v2678
    %v2887 = vpack.c.b16 %v2681, %v2679
    %v2888 = vpack.c.b16 %v2684, %v2682
    %v2889 = vpack.c.b16 %v2685, %v2683
    %v2890 = vpack.c.b16 %v2688, %v2686
    %v2891 = vpack.c.b16 %v2689, %v2687
    %v2892 = vpack.c.b16 %v2692, %v2690
    %v2893 = vpack.c.b16 %v2693, %v2691
    %v2894 = vpack.c.b16 %v2696, %v2694
    %v2895 = vpack.c.b16 %v2697, %v2695
    %v2896 = vpack.c.b16 %v2700, %v2698
    %v2897 = vpack.c.b16 %v2701, %v2699
    %v2898 = vpack.c.b16 %v2704, %v2702
    %v2899 = vpack.c.b16 %v2705, %v2703
    %v2900 = vpack.c.b16 %v2708, %v2706
    %v2901 = vpack.c.b16 %v2709, %v2707
    %v2902 = vpack.c.b16 %v2712, %v2710
    %v2903 = vpack.c.b16 %v2713, %v2711
    %v2904 = vpack.c.b16 %v2716, %v2714
    %v2905 = vpack.c.b16 %v2717, %v2715
    %v2906 = vpack.c.b16 %v2720, %v2718
    %v2907 = vpack.c.b16 %v2721, %v2719
    %v2908 = vpack.c.b16 %v2724, %v2722
    %v2909 = vpack.c.b16 %v2725, %v2723
    %v2910 = vpack.c.b16 %v2728, %v2726
    %v2911 = vpack.c.b16 %v2729, %v2727
    %v2912 = vpack.c.b16 %v2732, %v2730
    %v2913 = vpack.c.b16 %v2733, %v2731
    %v2914 = vpack.c.b16 %v2736, %v2734
    %v2915 = vpack.c.b16 %v2737, %v2735
    %v2916 = vpack.c.b16 %v2740, %v2738
    %v2917 = vpack.c.b16 %v2741, %v2739
    %v2918 = vpack.c.b16 %v2744, %v2742
    %v2919 = vpack.c.b16 %v2745, %v2743
    %v2920 = vpack.c.b16 %v2748, %v2746
    %v2921 = vpack.c.b16 %v2749, %v2747
    %v2922 = vpack.c.b16 %v2752, %v2750
    %v2923 = vpack.c.b16 %v2753, %v2751
    %v2924 = vpack.c.b16 %v2756, %v2754
    %v2925 = vpack.c.b16 %v2757, %v2755
    %v2926 = vpack.c.b16 %v2760, %v2758
    %v2927 = vpack.c.b16 %v2761, %v2759
    %v2928 = vpack.c.b16 %v2764, %v2762
    %v2929 = vpack.c.b16 %v2765, %v2763
    %v2930 = vpack.c.b16 %v2768, %v2766
    %v2931 = vpack.c.b16 %v2769, %v2767
    %v2932 = vpack.c.b16 %v2772, %v2770
    %v2933 = vpack.c.b16 %v2773, %v2771
    %v2934 = vpack.c.b16 %v2776, %v2774
    %v2935 = vpack.c.b16 %v2777, %v2775
    %v2936 = vpack.c.b16 %v2780, %v2778
    %v2937 = vpack.c.b16 %v2781, %v2779
    %v2938 = vpack.c.b16 %v2784, %v2782
    %v2939 = vpack.c.b16 %v2785, %v2783
    %v2940 = vpack.c.b16 %v2788, %v2786
    %v2941 = vpack.c.b16 %v2789, %v2787
    %v2942 = vpack.c.b16 %v2792, %v2790
    %v2943 = vpack.c.b16 %v2793, %v2791
    %v2944 = vpack.c.b16 %v2796, %v2794
    %v2945 = vpack.c.b16 %v2797, %v2795
    %v2946 = vpack.c.b16 %v2800, %v2798
    %v2947 = vpack.c.b16 %v2801, %v2799
    %v2948 = vpack.c.b16 %v2804, %v2802
    %v2949 = vpack.c.b16 %v2805, %v2803
    %v2950 = vpack.c.b16 %v2808, %v2806
    %v2951 = vpack.c.b16 %v2809, %v2807
    %v2952 = vpack.c.b16 %v2812, %v2810
    %v2953 = vpack.c.b16 %v2813, %v2811
    %v2954 = vpack.c.b16 %v2816, %v2814
    %v2955 = vpack.c.b16 %v2817, %v2815
    %v2956 = vpack.c.b16 %v2820, %v2818
    %v2957 = vpack.c.b16 %v2821, %v2819
    %v2958 = vpack.c.b16 %v2824, %v2822
    %v2959 = vpack.c.b16 %v2825, %v2823
    %v2960 = vpack.c.b16 %v2828, %v2826
    %v2961 = vpack.c.b16 %v2829, %v2827
    %v2962 = vpack.c.b16 %v2832, %v2830
    %v2963 = vpack.c.b16 %v2833, %v2831
    %v2964 = vpack.c.b16 %v2836, %v2834
    %v2965 = vpack.c.b16 %v2837, %v2835
    %3094 = vmatprep.subr.bf16.mxu0 %v2853
    %3095 = vmatpush1.bf16.msra.mxu0 %v2852
    %3096 = vmatprep.subr.bf16.mxu0 %v2851
    %3097 = vmatpush1.bf16.msra.mxu0 %v2850
    %3098 = vmatprep.subr.bf16.mxu0 %v2849
    %3099 = vmatpush1.bf16.msra.mxu0 %v2848
    %3100 = vmatprep.subr.bf16.mxu0 %v2847
    %3101 = vmatpush1.bf16.msra.mxu0 %v2846
    %3102 = vmatprep.subr.bf16.mxu0 %v2845
    %3103 = vmatpush1.bf16.msra.mxu0 %v2844
    %3104 = vmatprep.subr.bf16.mxu0 %v2843
    %3105 = vmatpush1.bf16.msra.mxu0 %v2842
    %3106 = vmatprep.subr.bf16.mxu0 %v2841
    %3107 = vmatpush1.bf16.msra.mxu0 %v2840
    %3108 = vmatprep.subr.bf16.mxu0 %v2839
    %3109 = vmatpush1.bf16.msra.mxu0 %v2838
    %3110 = vmatprep.subr.bf16.mxu0 %v2869
    %3111 = vmatpush2.bf16.msra.mxu0 %v2868
    %3112 = vmatprep.subr.bf16.mxu0 %v2867
    %3113 = vmatpush2.bf16.msra.mxu0 %v2866
    %3114 = vmatprep.subr.bf16.mxu0 %v2865
    %3115 = vmatpush2.bf16.msra.mxu0 %v2864
    %3116 = vmatprep.subr.bf16.mxu0 %v2863
    %3117 = vmatpush2.bf16.msra.mxu0 %v2862
    %3118 = vmatprep.subr.bf16.mxu0 %v2861
    %3119 = vmatpush2.bf16.msra.mxu0 %v2860
    %3120 = vmatprep.subr.bf16.mxu0 %v2859
    %3121 = vmatpush2.bf16.msra.mxu0 %v2858
    %3122 = vmatprep.subr.bf16.mxu0 %v2857
    %3123 = vmatpush2.bf16.msra.mxu0 %v2856
    %3124 = vmatprep.subr.bf16.mxu0 %v2855
    %3125 = vmatpush2.bf16.msra.mxu0 %v2854
    %3126 = vmatprep.mubr.bf16.mxu0 %v2436
    %3127 = vmatmul.mubr.bf16.gmra.mxu0 %v2435
    %v3128 = vpop.f32.mrf.mxu0
    %v3129 = vadd.f32 %v2447, %v3128
    %v3130 = vpop.f32.mrf.mxu0
    %v3131 = vadd.f32 %v2451, %v3130
    %v3132 = vpop.f32.mrf.mxu0
    %v3133 = vpop.f32.mrf.mxu0
    %3134 = vdwg.mxu0
    %3135 = vmatprep.subr.bf16.mxu0 %v2885
    %3136 = vmatpush1.bf16.msra.mxu0 %v2884
    %3137 = vmatprep.subr.bf16.mxu0 %v2883
    %3138 = vmatpush1.bf16.msra.mxu0 %v2882
    %3139 = vmatprep.subr.bf16.mxu0 %v2881
    %3140 = vmatpush1.bf16.msra.mxu0 %v2880
    %3141 = vmatprep.subr.bf16.mxu0 %v2879
    %3142 = vmatpush1.bf16.msra.mxu0 %v2878
    %3143 = vmatprep.subr.bf16.mxu0 %v2877
    %3144 = vmatpush1.bf16.msra.mxu0 %v2876
    %3145 = vmatprep.subr.bf16.mxu0 %v2875
    %3146 = vmatpush1.bf16.msra.mxu0 %v2874
    %3147 = vmatprep.subr.bf16.mxu0 %v2873
    %3148 = vmatpush1.bf16.msra.mxu0 %v2872
    %3149 = vmatprep.subr.bf16.mxu0 %v2871
    %3150 = vmatpush1.bf16.msra.mxu0 %v2870
    %3151 = vmatprep.subr.bf16.mxu0 %v2901
    %3152 = vmatpush2.bf16.msra.mxu0 %v2900
    %3153 = vmatprep.subr.bf16.mxu0 %v2899
    %3154 = vmatpush2.bf16.msra.mxu0 %v2898
    %3155 = vmatprep.subr.bf16.mxu0 %v2897
    %3156 = vmatpush2.bf16.msra.mxu0 %v2896
    %3157 = vmatprep.subr.bf16.mxu0 %v2895
    %3158 = vmatpush2.bf16.msra.mxu0 %v2894
    %3159 = vmatprep.subr.bf16.mxu0 %v2893
    %3160 = vmatpush2.bf16.msra.mxu0 %v2892
    %3161 = vmatprep.subr.bf16.mxu0 %v2891
    %3162 = vmatpush2.bf16.msra.mxu0 %v2890
    %3163 = vmatprep.subr.bf16.mxu0 %v2889
    %3164 = vmatpush2.bf16.msra.mxu0 %v2888
    %3165 = vmatprep.subr.bf16.mxu0 %v2887
    %3166 = vmatpush2.bf16.msra.mxu0 %v2886
    %3167 = vmatprep.mubr.bf16.mxu0 %v2438
    %3168 = vmatmul.mubr.bf16.gmra.mxu0 %v2437
    %v3169 = vpop.f32.mrf.mxu0
    %v3170 = vadd.f32 %v3129, %v3169
    %v3171 = vpop.f32.mrf.mxu0
    %v3172 = vadd.f32 %v3131, %v3171
    %v3173 = vpop.f32.mrf.mxu0
    %v3174 = vpop.f32.mrf.mxu0
    %3175 = vdwg.mxu0
    %3176 = vmatprep.subr.bf16.mxu0 %v2917
    %3177 = vmatpush1.bf16.msra.mxu0 %v2916
    %3178 = vmatprep.subr.bf16.mxu0 %v2915
    %3179 = vmatpush1.bf16.msra.mxu0 %v2914
    %3180 = vmatprep.subr.bf16.mxu0 %v2913
    %3181 = vmatpush1.bf16.msra.mxu0 %v2912
    %3182 = vmatprep.subr.bf16.mxu0 %v2911
    %3183 = vmatpush1.bf16.msra.mxu0 %v2910
    %3184 = vmatprep.subr.bf16.mxu0 %v2909
    %3185 = vmatpush1.bf16.msra.mxu0 %v2908
    %3186 = vmatprep.subr.bf16.mxu0 %v2907
    %3187 = vmatpush1.bf16.msra.mxu0 %v2906
    %3188 = vmatprep.subr.bf16.mxu0 %v2905
    %3189 = vmatpush1.bf16.msra.mxu0 %v2904
    %3190 = vmatprep.subr.bf16.mxu0 %v2903
    %3191 = vmatpush1.bf16.msra.mxu0 %v2902
    %3192 = vmatprep.subr.bf16.mxu0 %v2933
    %3193 = vmatpush2.bf16.msra.mxu0 %v2932
    %3194 = vmatprep.subr.bf16.mxu0 %v2931
    %3195 = vmatpush2.bf16.msra.mxu0 %v2930
    %3196 = vmatprep.subr.bf16.mxu0 %v2929
    %3197 = vmatpush2.bf16.msra.mxu0 %v2928
    %3198 = vmatprep.subr.bf16.mxu0 %v2927
    %3199 = vmatpush2.bf16.msra.mxu0 %v2926
    %3200 = vmatprep.subr.bf16.mxu0 %v2925
    %3201 = vmatpush2.bf16.msra.mxu0 %v2924
    %3202 = vmatprep.subr.bf16.mxu0 %v2923
    %3203 = vmatpush2.bf16.msra.mxu0 %v2922
    %3204 = vmatprep.subr.bf16.mxu0 %v2921
    %3205 = vmatpush2.bf16.msra.mxu0 %v2920
    %3206 = vmatprep.subr.bf16.mxu0 %v2919
    %3207 = vmatpush2.bf16.msra.mxu0 %v2918
    %3208 = vmatprep.mubr.bf16.mxu0 %v2440
    %3209 = vmatmul.mubr.bf16.gmra.mxu0 %v2439
    %v3210 = vpop.f32.mrf.mxu0
    %v3211 = vadd.f32 %v3170, %v3210
    %v3212 = vpop.f32.mrf.mxu0
    %v3213 = vadd.f32 %v3172, %v3212
    %v3214 = vpop.f32.mrf.mxu0
    %v3215 = vpop.f32.mrf.mxu0
    %3216 = vdwg.mxu0
    %3217 = vmatprep.subr.bf16.mxu0 %v2949
    %3218 = vmatpush1.bf16.msra.mxu0 %v2948
    %3219 = vmatprep.subr.bf16.mxu0 %v2947
    %3220 = vmatpush1.bf16.msra.mxu0 %v2946
    %3221 = vmatprep.subr.bf16.mxu0 %v2945
    %3222 = vmatpush1.bf16.msra.mxu0 %v2944
    %3223 = vmatprep.subr.bf16.mxu0 %v2943
    %3224 = vmatpush1.bf16.msra.mxu0 %v2942
    %3225 = vmatprep.subr.bf16.mxu0 %v2941
    %3226 = vmatpush1.bf16.msra.mxu0 %v2940
    %3227 = vmatprep.subr.bf16.mxu0 %v2939
    %3228 = vmatpush1.bf16.msra.mxu0 %v2938
    %3229 = vmatprep.subr.bf16.mxu0 %v2937
    %3230 = vmatpush1.bf16.msra.mxu0 %v2936
    %3231 = vmatprep.subr.bf16.mxu0 %v2935
    %3232 = vmatpush1.bf16.msra.mxu0 %v2934
    %3233 = vmatprep.subr.bf16.mxu0 %v2965
    %3234 = vmatpush2.bf16.msra.mxu0 %v2964
    %3235 = vmatprep.subr.bf16.mxu0 %v2963
    %3236 = vmatpush2.bf16.msra.mxu0 %v2962
    %3237 = vmatprep.subr.bf16.mxu0 %v2961
    %3238 = vmatpush2.bf16.msra.mxu0 %v2960
    %3239 = vmatprep.subr.bf16.mxu0 %v2959
    %3240 = vmatpush2.bf16.msra.mxu0 %v2958
    %3241 = vmatprep.subr.bf16.mxu0 %v2957
    %3242 = vmatpush2.bf16.msra.mxu0 %v2956
    %3243 = vmatprep.subr.bf16.mxu0 %v2955
    %3244 = vmatpush2.bf16.msra.mxu0 %v2954
    %3245 = vmatprep.subr.bf16.mxu0 %v2953
    %3246 = vmatpush2.bf16.msra.mxu0 %v2952
    %3247 = vmatprep.subr.bf16.mxu0 %v2951
    %3248 = vmatpush2.bf16.msra.mxu0 %v2950
    %3249 = vmatprep.mubr.bf16.mxu0 %v2442
    %3250 = vmatmul.mubr.bf16.gmra.mxu0 %v2441
    %v3251 = vpop.f32.mrf.mxu0
    %v3252 = vadd.f32 %v3211, %v3251
    %v3253 = vpop.f32.mrf.mxu0
    %v3254 = vadd.f32 %v3213, %v3253
    %v3255 = vpop.f32.mrf.mxu0
    %v3256 = vpop.f32.mrf.mxu0
    %3257 = vdwg.mxu0
    %v3258 = vmax.f32 %v3252, 0.0
    %v3259 = vmax.f32 %v3254, 0.0
    %v3260 = vpack.c.bf16 %v3258, %v3258
    %v3261 = vpack.c.bf16 %v3259, %v3259
    %v3263 = vlaneseq
    %v3264 = vshrl.u32 %v3263, 7
    %v3265 = vsub.s32 0, %v3264
    %v3266 = vrot.slane %v2390, %v3265
    %v3267 = vlaneseq
    %v3268 = vshrl.u32 %v3267, 7
    %v3269 = vsub.s32 1, %v3268
    %v3270 = vrot.slane %v2390, %v3269
    %v3271 = vlaneseq
    %v3272 = vshrl.u32 %v3271, 7
    %v3273 = vsub.s32 2, %v3272
    %v3274 = vrot.slane %v2390, %v3273
    %v3275 = vlaneseq
    %v3276 = vshrl.u32 %v3275, 7
    %v3277 = vsub.s32 3, %v3276
    %v3278 = vrot.slane %v2390, %v3277
    %v3279 = vlaneseq
    %v3280 = vshrl.u32 %v3279, 7
    %v3281 = vsub.s32 4, %v3280
    %v3282 = vrot.slane %v2390, %v3281
    %v3283 = vlaneseq
    %v3284 = vshrl.u32 %v3283, 7
    %v3285 = vsub.s32 5, %v3284
    %v3286 = vrot.slane %v2390, %v3285
    %v3287 = vlaneseq
    %v3288 = vshrl.u32 %v3287, 7
    %v3289 = vsub.s32 6, %v3288
    %v3290 = vrot.slane %v2390, %v3289
    %v3291 = vlaneseq
    %v3292 = vshrl.u32 %v3291, 7
    %v3293 = vsub.s32 7, %v3292
    %v3294 = vrot.slane %v2390, %v3293
    %v3431 = vunpack.c.l.b16 %v2261
    %v3432 = vunpack.c.h.b16 %v2261
    %v3433 = vunpack.c.l.b16 %v2262
    %v3434 = vunpack.c.h.b16 %v2262
    %v3435 = vunpack.c.l.b16 %v2263
    %v3436 = vunpack.c.h.b16 %v2263
    %v3437 = vunpack.c.l.b16 %v2264
    %v3438 = vunpack.c.h.b16 %v2264
    %v3439 = vunpack.c.l.b16 %v2265
    %v3440 = vunpack.c.h.b16 %v2265
    %v3441 = vunpack.c.l.b16 %v2266
    %v3442 = vunpack.c.h.b16 %v2266
    %v3443 = vunpack.c.l.b16 %v2267
    %v3444 = vunpack.c.h.b16 %v2267
    %v3445 = vunpack.c.l.b16 %v2268
    %v3446 = vunpack.c.h.b16 %v2268
    %v3447 = vunpack.c.l.b16 %v2269
    %v3448 = vunpack.c.h.b16 %v2269
    %v3449 = vunpack.c.l.b16 %v2270
    %v3450 = vunpack.c.h.b16 %v2270
    %v3451 = vunpack.c.l.b16 %v2271
    %v3452 = vunpack.c.h.b16 %v2271
    %v3453 = vunpack.c.l.b16 %v2272
    %v3454 = vunpack.c.h.b16 %v2272
    %v3455 = vunpack.c.l.b16 %v2273
    %v3456 = vunpack.c.h.b16 %v2273
    %v3457 = vunpack.c.l.b16 %v2274
    %v3458 = vunpack.c.h.b16 %v2274
    %v3459 = vunpack.c.l.b16 %v2275
    %v3460 = vunpack.c.h.b16 %v2275
    %v3461 = vunpack.c.l.b16 %v2276
    %v3462 = vunpack.c.h.b16 %v2276
    %v3463 = vunpack.c.l.b16 %v2277
    %v3464 = vunpack.c.h.b16 %v2277
    %v3465 = vunpack.c.l.b16 %v2278
    %v3466 = vunpack.c.h.b16 %v2278
    %v3467 = vunpack.c.l.b16 %v2279
    %v3468 = vunpack.c.h.b16 %v2279
    %v3469 = vunpack.c.l.b16 %v2280
    %v3470 = vunpack.c.h.b16 %v2280
    %v3471 = vunpack.c.l.b16 %v2281
    %v3472 = vunpack.c.h.b16 %v2281
    %v3473 = vunpack.c.l.b16 %v2282
    %v3474 = vunpack.c.h.b16 %v2282
    %v3475 = vunpack.c.l.b16 %v2283
    %v3476 = vunpack.c.h.b16 %v2283
    %v3477 = vunpack.c.l.b16 %v2284
    %v3478 = vunpack.c.h.b16 %v2284
    %v3479 = vunpack.c.l.b16 %v2285
    %v3480 = vunpack.c.h.b16 %v2285
    %v3481 = vunpack.c.l.b16 %v2286
    %v3482 = vunpack.c.h.b16 %v2286
    %v3483 = vunpack.c.l.b16 %v2287
    %v3484 = vunpack.c.h.b16 %v2287
    %v3485 = vunpack.c.l.b16 %v2288
    %v3486 = vunpack.c.h.b16 %v2288
    %v3487 = vunpack.c.l.b16 %v2289
    %v3488 = vunpack.c.h.b16 %v2289
    %v3489 = vunpack.c.l.b16 %v2290
    %v3490 = vunpack.c.h.b16 %v2290
    %v3491 = vunpack.c.l.b16 %v2291
    %v3492 = vunpack.c.h.b16 %v2291
    %v3493 = vunpack.c.l.b16 %v2292
    %v3494 = vunpack.c.h.b16 %v2292
    %v3495 = vunpack.c.l.b16 %v2293
    %v3496 = vunpack.c.h.b16 %v2293
    %v3497 = vunpack.c.l.b16 %v2294
    %v3498 = vunpack.c.h.b16 %v2294
    %v3499 = vunpack.c.l.b16 %v2295
    %v3500 = vunpack.c.h.b16 %v2295
    %v3501 = vunpack.c.l.b16 %v2296
    %v3502 = vunpack.c.h.b16 %v2296
    %v3503 = vunpack.c.l.b16 %v2297
    %v3504 = vunpack.c.h.b16 %v2297
    %v3505 = vunpack.c.l.b16 %v2298
    %v3506 = vunpack.c.h.b16 %v2298
    %v3507 = vunpack.c.l.b16 %v2299
    %v3508 = vunpack.c.h.b16 %v2299
    %v3509 = vunpack.c.l.b16 %v2300
    %v3510 = vunpack.c.h.b16 %v2300
    %v3511 = vunpack.c.l.b16 %v2301
    %v3512 = vunpack.c.h.b16 %v2301
    %v3513 = vunpack.c.l.b16 %v2302
    %v3514 = vunpack.c.h.b16 %v2302
    %v3515 = vunpack.c.l.b16 %v2303
    %v3516 = vunpack.c.h.b16 %v2303
    %v3517 = vunpack.c.l.b16 %v2304
    %v3518 = vunpack.c.h.b16 %v2304
    %v3519 = vunpack.c.l.b16 %v2305
    %v3520 = vunpack.c.h.b16 %v2305
    %v3521 = vunpack.c.l.b16 %v2306
    %v3522 = vunpack.c.h.b16 %v2306
    %v3523 = vunpack.c.l.b16 %v2307
    %v3524 = vunpack.c.h.b16 %v2307
    %v3525 = vunpack.c.l.b16 %v2308
    %v3526 = vunpack.c.h.b16 %v2308
    %v3527 = vunpack.c.l.b16 %v2309
    %v3528 = vunpack.c.h.b16 %v2309
    %v3529 = vunpack.c.l.b16 %v2310
    %v3530 = vunpack.c.h.b16 %v2310
    %v3531 = vunpack.c.l.b16 %v2311
    %v3532 = vunpack.c.h.b16 %v2311
    %v3533 = vunpack.c.l.b16 %v2312
    %v3534 = vunpack.c.h.b16 %v2312
    %v3535 = vunpack.c.l.b16 %v2313
    %v3536 = vunpack.c.h.b16 %v2313
    %v3537 = vunpack.c.l.b16 %v2314
    %v3538 = vunpack.c.h.b16 %v2314
    %v3539 = vunpack.c.l.b16 %v2315
    %v3540 = vunpack.c.h.b16 %v2315
    %v3541 = vunpack.c.l.b16 %v2316
    %v3542 = vunpack.c.h.b16 %v2316
    %v3543 = vunpack.c.l.b16 %v2317
    %v3544 = vunpack.c.h.b16 %v2317
    %v3545 = vunpack.c.l.b16 %v2318
    %v3546 = vunpack.c.h.b16 %v2318
    %v3547 = vunpack.c.l.b16 %v2319
    %v3548 = vunpack.c.h.b16 %v2319
    %v3549 = vunpack.c.l.b16 %v2320
    %v3550 = vunpack.c.h.b16 %v2320
    %v3551 = vunpack.c.l.b16 %v2321
    %v3552 = vunpack.c.h.b16 %v2321
    %v3553 = vunpack.c.l.b16 %v2322
    %v3554 = vunpack.c.h.b16 %v2322
    %v3555 = vunpack.c.l.b16 %v2323
    %v3556 = vunpack.c.h.b16 %v2323
    %v3557 = vunpack.c.l.b16 %v2324
    %v3558 = vunpack.c.h.b16 %v2324
    %v3559 = vunpack.c.l.b16 %v2325
    %v3560 = vunpack.c.h.b16 %v2325
    %v3561 = vunpack.c.l.b16 %v2326
    %v3562 = vunpack.c.h.b16 %v2326
    %v3563 = vunpack.c.l.b16 %v2327
    %v3564 = vunpack.c.h.b16 %v2327
    %v3565 = vunpack.c.l.b16 %v2328
    %v3566 = vunpack.c.h.b16 %v2328
    %v3567 = vunpack.c.l.b16 %v2329
    %v3568 = vunpack.c.h.b16 %v2329
    %v3569 = vunpack.c.l.b16 %v2330
    %v3570 = vunpack.c.h.b16 %v2330
    %v3571 = vunpack.c.l.b16 %v2331
    %v3572 = vunpack.c.h.b16 %v2331
    %v3573 = vunpack.c.l.b16 %v2332
    %v3574 = vunpack.c.h.b16 %v2332
    %v3575 = vunpack.c.l.b16 %v2333
    %v3576 = vunpack.c.h.b16 %v2333
    %v3577 = vunpack.c.l.b16 %v2334
    %v3578 = vunpack.c.h.b16 %v2334
    %v3579 = vunpack.c.l.b16 %v2335
    %v3580 = vunpack.c.h.b16 %v2335
    %v3581 = vunpack.c.l.b16 %v2336
    %v3582 = vunpack.c.h.b16 %v2336
    %v3583 = vunpack.c.l.b16 %v2337
    %v3584 = vunpack.c.h.b16 %v2337
    %v3585 = vunpack.c.l.b16 %v2338
    %v3586 = vunpack.c.h.b16 %v2338
    %v3587 = vunpack.c.l.b16 %v2339
    %v3588 = vunpack.c.h.b16 %v2339
    %v3589 = vunpack.c.l.b16 %v2340
    %v3590 = vunpack.c.h.b16 %v2340
    %v3591 = vunpack.c.l.b16 %v2341
    %v3592 = vunpack.c.h.b16 %v2341
    %v3593 = vunpack.c.l.b16 %v2342
    %v3594 = vunpack.c.h.b16 %v2342
    %v3595 = vunpack.c.l.b16 %v2343
    %v3596 = vunpack.c.h.b16 %v2343
    %v3597 = vunpack.c.l.b16 %v2344
    %v3598 = vunpack.c.h.b16 %v2344
    %v3599 = vunpack.c.l.b16 %v2345
    %v3600 = vunpack.c.h.b16 %v2345
    %v3601 = vunpack.c.l.b16 %v2346
    %v3602 = vunpack.c.h.b16 %v2346
    %v3603 = vunpack.c.l.b16 %v2347
    %v3604 = vunpack.c.h.b16 %v2347
    %v3605 = vunpack.c.l.b16 %v2348
    %v3606 = vunpack.c.h.b16 %v2348
    %v3607 = vunpack.c.l.b16 %v2349
    %v3608 = vunpack.c.h.b16 %v2349
    %v3609 = vunpack.c.l.b16 %v2350
    %v3610 = vunpack.c.h.b16 %v2350
    %v3611 = vunpack.c.l.b16 %v2351
    %v3612 = vunpack.c.h.b16 %v2351
    %v3613 = vunpack.c.l.b16 %v2352
    %v3614 = vunpack.c.h.b16 %v2352
    %v3615 = vunpack.c.l.b16 %v2353
    %v3616 = vunpack.c.h.b16 %v2353
    %v3617 = vunpack.c.l.b16 %v2354
    %v3618 = vunpack.c.h.b16 %v2354
    %v3619 = vunpack.c.l.b16 %v2355
    %v3620 = vunpack.c.h.b16 %v2355
    %v3621 = vunpack.c.l.b16 %v2356
    %v3622 = vunpack.c.h.b16 %v2356
    %v3623 = vunpack.c.l.b16 %v2357
    %v3624 = vunpack.c.h.b16 %v2357
    %v3625 = vunpack.c.l.b16 %v2358
    %v3626 = vunpack.c.h.b16 %v2358
    %v3627 = vunpack.c.l.b16 %v2359
    %v3628 = vunpack.c.h.b16 %v2359
    %v3629 = vunpack.c.l.b16 %v2360
    %v3630 = vunpack.c.h.b16 %v2360
    %v3631 = vunpack.c.l.b16 %v2361
    %v3632 = vunpack.c.h.b16 %v2361
    %v3633 = vunpack.c.l.b16 %v2362
    %v3634 = vunpack.c.h.b16 %v2362
    %v3635 = vunpack.c.l.b16 %v2363
    %v3636 = vunpack.c.h.b16 %v2363
    %v3637 = vunpack.c.l.b16 %v2364
    %v3638 = vunpack.c.h.b16 %v2364
    %v3639 = vunpack.c.l.b16 %v2365
    %v3640 = vunpack.c.h.b16 %v2365
    %v3641 = vunpack.c.l.b16 %v2366
    %v3642 = vunpack.c.h.b16 %v2366
    %v3643 = vunpack.c.l.b16 %v2367
    %v3644 = vunpack.c.h.b16 %v2367
    %v3645 = vunpack.c.l.b16 %v2368
    %v3646 = vunpack.c.h.b16 %v2368
    %v3647 = vunpack.c.l.b16 %v2369
    %v3648 = vunpack.c.h.b16 %v2369
    %v3649 = vunpack.c.l.b16 %v2370
    %v3650 = vunpack.c.h.b16 %v2370
    %v3651 = vunpack.c.l.b16 %v2371
    %v3652 = vunpack.c.h.b16 %v2371
    %v3653 = vunpack.c.l.b16 %v2372
    %v3654 = vunpack.c.h.b16 %v2372
    %v3655 = vunpack.c.l.b16 %v2373
    %v3656 = vunpack.c.h.b16 %v2373
    %v3657 = vunpack.c.l.b16 %v2374
    %v3658 = vunpack.c.h.b16 %v2374
    %v3659 = vunpack.c.l.b16 %v2375
    %v3660 = vunpack.c.h.b16 %v2375
    %v3661 = vunpack.c.l.b16 %v2376
    %v3662 = vunpack.c.h.b16 %v2376
    %v3663 = vunpack.c.l.b16 %v2377
    %v3664 = vunpack.c.h.b16 %v2377
    %v3665 = vunpack.c.l.b16 %v2378
    %v3666 = vunpack.c.h.b16 %v2378
    %v3667 = vunpack.c.l.b16 %v2379
    %v3668 = vunpack.c.h.b16 %v2379
    %v3669 = vunpack.c.l.b16 %v2380
    %v3670 = vunpack.c.h.b16 %v2380
    %v3671 = vunpack.c.l.b16 %v2381
    %v3672 = vunpack.c.h.b16 %v2381
    %v3673 = vunpack.c.l.b16 %v2382
    %v3674 = vunpack.c.h.b16 %v2382
    %v3675 = vunpack.c.l.b16 %v2383
    %v3676 = vunpack.c.h.b16 %v2383
    %v3677 = vunpack.c.l.b16 %v2384
    %v3678 = vunpack.c.h.b16 %v2384
    %v3679 = vunpack.c.l.b16 %v2385
    %v3680 = vunpack.c.h.b16 %v2385
    %v3681 = vunpack.c.l.b16 %v2386
    %v3682 = vunpack.c.h.b16 %v2386
    %v3683 = vunpack.c.l.b16 %v2387
    %v3684 = vunpack.c.h.b16 %v2387
    %v3685 = vunpack.c.l.b16 %v2388
    %v3686 = vunpack.c.h.b16 %v2388
    %v3687 = vpack.c.b16 %v3439, %v3431
    %v3688 = vpack.c.b16 %v3440, %v3432
    %v3689 = vpack.c.b16 %v3441, %v3433
    %v3690 = vpack.c.b16 %v3442, %v3434
    %v3691 = vpack.c.b16 %v3443, %v3435
    %v3692 = vpack.c.b16 %v3444, %v3436
    %v3693 = vpack.c.b16 %v3445, %v3437
    %v3694 = vpack.c.b16 %v3446, %v3438
    %v3695 = vpack.c.b16 %v3455, %v3447
    %v3696 = vpack.c.b16 %v3456, %v3448
    %v3697 = vpack.c.b16 %v3457, %v3449
    %v3698 = vpack.c.b16 %v3458, %v3450
    %v3699 = vpack.c.b16 %v3459, %v3451
    %v3700 = vpack.c.b16 %v3460, %v3452
    %v3701 = vpack.c.b16 %v3461, %v3453
    %v3702 = vpack.c.b16 %v3462, %v3454
    %v3703 = vpack.c.b16 %v3471, %v3463
    %v3704 = vpack.c.b16 %v3472, %v3464
    %v3705 = vpack.c.b16 %v3473, %v3465
    %v3706 = vpack.c.b16 %v3474, %v3466
    %v3707 = vpack.c.b16 %v3475, %v3467
    %v3708 = vpack.c.b16 %v3476, %v3468
    %v3709 = vpack.c.b16 %v3477, %v3469
    %v3710 = vpack.c.b16 %v3478, %v3470
    %v3711 = vpack.c.b16 %v3487, %v3479
    %v3712 = vpack.c.b16 %v3488, %v3480
    %v3713 = vpack.c.b16 %v3489, %v3481
    %v3714 = vpack.c.b16 %v3490, %v3482
    %v3715 = vpack.c.b16 %v3491, %v3483
    %v3716 = vpack.c.b16 %v3492, %v3484
    %v3717 = vpack.c.b16 %v3493, %v3485
    %v3718 = vpack.c.b16 %v3494, %v3486
    %v3719 = vpack.c.b16 %v3503, %v3495
    %v3720 = vpack.c.b16 %v3504, %v3496
    %v3721 = vpack.c.b16 %v3505, %v3497
    %v3722 = vpack.c.b16 %v3506, %v3498
    %v3723 = vpack.c.b16 %v3507, %v3499
    %v3724 = vpack.c.b16 %v3508, %v3500
    %v3725 = vpack.c.b16 %v3509, %v3501
    %v3726 = vpack.c.b16 %v3510, %v3502
    %v3727 = vpack.c.b16 %v3519, %v3511
    %v3728 = vpack.c.b16 %v3520, %v3512
    %v3729 = vpack.c.b16 %v3521, %v3513
    %v3730 = vpack.c.b16 %v3522, %v3514
    %v3731 = vpack.c.b16 %v3523, %v3515
    %v3732 = vpack.c.b16 %v3524, %v3516
    %v3733 = vpack.c.b16 %v3525, %v3517
    %v3734 = vpack.c.b16 %v3526, %v3518
    %v3735 = vpack.c.b16 %v3535, %v3527
    %v3736 = vpack.c.b16 %v3536, %v3528
    %v3737 = vpack.c.b16 %v3537, %v3529
    %v3738 = vpack.c.b16 %v3538, %v3530
    %v3739 = vpack.c.b16 %v3539, %v3531
    %v3740 = vpack.c.b16 %v3540, %v3532
    %v3741 = vpack.c.b16 %v3541, %v3533
    %v3742 = vpack.c.b16 %v3542, %v3534
    %v3743 = vpack.c.b16 %v3551, %v3543
    %v3744 = vpack.c.b16 %v3552, %v3544
    %v3745 = vpack.c.b16 %v3553, %v3545
    %v3746 = vpack.c.b16 %v3554, %v3546
    %v3747 = vpack.c.b16 %v3555, %v3547
    %v3748 = vpack.c.b16 %v3556, %v3548
    %v3749 = vpack.c.b16 %v3557, %v3549
    %v3750 = vpack.c.b16 %v3558, %v3550
    %v3751 = vpack.c.b16 %v3567, %v3559
    %v3752 = vpack.c.b16 %v3568, %v3560
    %v3753 = vpack.c.b16 %v3569, %v3561
    %v3754 = vpack.c.b16 %v3570, %v3562
    %v3755 = vpack.c.b16 %v3571, %v3563
    %v3756 = vpack.c.b16 %v3572, %v3564
    %v3757 = vpack.c.b16 %v3573, %v3565
    %v3758 = vpack.c.b16 %v3574, %v3566
    %v3759 = vpack.c.b16 %v3583, %v3575
    %v3760 = vpack.c.b16 %v3584, %v3576
    %v3761 = vpack.c.b16 %v3585, %v3577
    %v3762 = vpack.c.b16 %v3586, %v3578
    %v3763 = vpack.c.b16 %v3587, %v3579
    %v3764 = vpack.c.b16 %v3588, %v3580
    %v3765 = vpack.c.b16 %v3589, %v3581
    %v3766 = vpack.c.b16 %v3590, %v3582
    %v3767 = vpack.c.b16 %v3599, %v3591
    %v3768 = vpack.c.b16 %v3600, %v3592
    %v3769 = vpack.c.b16 %v3601, %v3593
    %v3770 = vpack.c.b16 %v3602, %v3594
    %v3771 = vpack.c.b16 %v3603, %v3595
    %v3772 = vpack.c.b16 %v3604, %v3596
    %v3773 = vpack.c.b16 %v3605, %v3597
    %v3774 = vpack.c.b16 %v3606, %v3598
    %v3775 = vpack.c.b16 %v3615, %v3607
    %v3776 = vpack.c.b16 %v3616, %v3608
    %v3777 = vpack.c.b16 %v3617, %v3609
    %v3778 = vpack.c.b16 %v3618, %v3610
    %v3779 = vpack.c.b16 %v3619, %v3611
    %v3780 = vpack.c.b16 %v3620, %v3612
    %v3781 = vpack.c.b16 %v3621, %v3613
    %v3782 = vpack.c.b16 %v3622, %v3614
    %v3783 = vpack.c.b16 %v3631, %v3623
    %v3784 = vpack.c.b16 %v3632, %v3624
    %v3785 = vpack.c.b16 %v3633, %v3625
    %v3786 = vpack.c.b16 %v3634, %v3626
    %v3787 = vpack.c.b16 %v3635, %v3627
    %v3788 = vpack.c.b16 %v3636, %v3628
    %v3789 = vpack.c.b16 %v3637, %v3629
    %v3790 = vpack.c.b16 %v3638, %v3630
    %v3791 = vpack.c.b16 %v3647, %v3639
    %v3792 = vpack.c.b16 %v3648, %v3640
    %v3793 = vpack.c.b16 %v3649, %v3641
    %v3794 = vpack.c.b16 %v3650, %v3642
    %v3795 = vpack.c.b16 %v3651, %v3643
    %v3796 = vpack.c.b16 %v3652, %v3644
    %v3797 = vpack.c.b16 %v3653, %v3645
    %v3798 = vpack.c.b16 %v3654, %v3646
    %v3799 = vpack.c.b16 %v3663, %v3655
    %v3800 = vpack.c.b16 %v3664, %v3656
    %v3801 = vpack.c.b16 %v3665, %v3657
    %v3802 = vpack.c.b16 %v3666, %v3658
    %v3803 = vpack.c.b16 %v3667, %v3659
    %v3804 = vpack.c.b16 %v3668, %v3660
    %v3805 = vpack.c.b16 %v3669, %v3661
    %v3806 = vpack.c.b16 %v3670, %v3662
    %v3807 = vpack.c.b16 %v3679, %v3671
    %v3808 = vpack.c.b16 %v3680, %v3672
    %v3809 = vpack.c.b16 %v3681, %v3673
    %v3810 = vpack.c.b16 %v3682, %v3674
    %v3811 = vpack.c.b16 %v3683, %v3675
    %v3812 = vpack.c.b16 %v3684, %v3676
    %v3813 = vpack.c.b16 %v3685, %v3677
    %v3814 = vpack.c.b16 %v3686, %v3678
    %3943 = vmatprep.subr.bf16.mxu0 %v3744
    %3944 = vmatpush1.bf16.msra.mxu0 %v3743
    %3945 = vmatprep.subr.bf16.mxu0 %v3736
    %3946 = vmatpush1.bf16.msra.mxu0 %v3735
    %3947 = vmatprep.subr.bf16.mxu0 %v3728
    %3948 = vmatpush1.bf16.msra.mxu0 %v3727
    %3949 = vmatprep.subr.bf16.mxu0 %v3720
    %3950 = vmatpush1.bf16.msra.mxu0 %v3719
    %3951 = vmatprep.subr.bf16.mxu0 %v3712
    %3952 = vmatpush1.bf16.msra.mxu0 %v3711
    %3953 = vmatprep.subr.bf16.mxu0 %v3704
    %3954 = vmatpush1.bf16.msra.mxu0 %v3703
    %3955 = vmatprep.subr.bf16.mxu0 %v3696
    %3956 = vmatpush1.bf16.msra.mxu0 %v3695
    %3957 = vmatprep.subr.bf16.mxu0 %v3688
    %3958 = vmatpush1.bf16.msra.mxu0 %v3687
    %3959 = vmatprep.subr.bf16.mxu0 %v3808
    %3960 = vmatpush2.bf16.msra.mxu0 %v3807
    %3961 = vmatprep.subr.bf16.mxu0 %v3800
    %3962 = vmatpush2.bf16.msra.mxu0 %v3799
    %3963 = vmatprep.subr.bf16.mxu0 %v3792
    %3964 = vmatpush2.bf16.msra.mxu0 %v3791
    %3965 = vmatprep.subr.bf16.mxu0 %v3784
    %3966 = vmatpush2.bf16.msra.mxu0 %v3783
    %3967 = vmatprep.subr.bf16.mxu0 %v3776
    %3968 = vmatpush2.bf16.msra.mxu0 %v3775
    %3969 = vmatprep.subr.bf16.mxu0 %v3768
    %3970 = vmatpush2.bf16.msra.mxu0 %v3767
    %3971 = vmatprep.subr.bf16.mxu0 %v3760
    %3972 = vmatpush2.bf16.msra.mxu0 %v3759
    %3973 = vmatprep.subr.bf16.mxu0 %v3752
    %3974 = vmatpush2.bf16.msra.mxu0 %v3751
    %3975 = vmatprep.mubr.bf16.mxu0 %v3261
    %3976 = vmatmul.mubr.bf16.gmra.mxu0 %v3260
    %v3977 = vpop.f32.mrf.mxu0
    %v3978 = vadd.f32 %v3266, %v3977
    %v3979 = vpop.f32.mrf.mxu0
    %v3980 = vadd.f32 %v3270, %v3979
    %v3981 = vpop.f32.mrf.mxu0
    %v3982 = vpop.f32.mrf.mxu0
    %3983 = vdwg.mxu0
    %3984 = vmatprep.subr.bf16.mxu0 %v3746
    %3985 = vmatpush1.bf16.msra.mxu0 %v3745
    %3986 = vmatprep.subr.bf16.mxu0 %v3738
    %3987 = vmatpush1.bf16.msra.mxu0 %v3737
    %3988 = vmatprep.subr.bf16.mxu0 %v3730
    %3989 = vmatpush1.bf16.msra.mxu0 %v3729
    %3990 = vmatprep.subr.bf16.mxu0 %v3722
    %3991 = vmatpush1.bf16.msra.mxu0 %v3721
    %3992 = vmatprep.subr.bf16.mxu0 %v3714
    %3993 = vmatpush1.bf16.msra.mxu0 %v3713
    %3994 = vmatprep.subr.bf16.mxu0 %v3706
    %3995 = vmatpush1.bf16.msra.mxu0 %v3705
    %3996 = vmatprep.subr.bf16.mxu0 %v3698
    %3997 = vmatpush1.bf16.msra.mxu0 %v3697
    %3998 = vmatprep.subr.bf16.mxu0 %v3690
    %3999 = vmatpush1.bf16.msra.mxu0 %v3689
    %4000 = vmatprep.subr.bf16.mxu0 %v3810
    %4001 = vmatpush2.bf16.msra.mxu0 %v3809
    %4002 = vmatprep.subr.bf16.mxu0 %v3802
    %4003 = vmatpush2.bf16.msra.mxu0 %v3801
    %4004 = vmatprep.subr.bf16.mxu0 %v3794
    %4005 = vmatpush2.bf16.msra.mxu0 %v3793
    %4006 = vmatprep.subr.bf16.mxu0 %v3786
    %4007 = vmatpush2.bf16.msra.mxu0 %v3785
    %4008 = vmatprep.subr.bf16.mxu0 %v3778
    %4009 = vmatpush2.bf16.msra.mxu0 %v3777
    %4010 = vmatprep.subr.bf16.mxu0 %v3770
    %4011 = vmatpush2.bf16.msra.mxu0 %v3769
    %4012 = vmatprep.subr.bf16.mxu0 %v3762
    %4013 = vmatpush2.bf16.msra.mxu0 %v3761
    %4014 = vmatprep.subr.bf16.mxu0 %v3754
    %4015 = vmatpush2.bf16.msra.mxu0 %v3753
    %4016 = vmatprep.mubr.bf16.mxu0 %v3261
    %4017 = vmatmul.mubr.bf16.gmra.mxu0 %v3260
    %v4018 = vpop.f32.mrf.mxu0
    %v4019 = vadd.f32 %v3274, %v4018
    %v4020 = vpop.f32.mrf.mxu0
    %v4021 = vadd.f32 %v3278, %v4020
    %v4022 = vpop.f32.mrf.mxu0
    %v4023 = vpop.f32.mrf.mxu0
    %4024 = vdwg.mxu0
    %4025 = vmatprep.subr.bf16.mxu0 %v3748
    %4026 = vmatpush1.bf16.msra.mxu0 %v3747
    %4027 = vmatprep.subr.bf16.mxu0 %v3740
    %4028 = vmatpush1.bf16.msra.mxu0 %v3739
    %4029 = vmatprep.subr.bf16.mxu0 %v3732
    %4030 = vmatpush1.bf16.msra.mxu0 %v3731
    %4031 = vmatprep.subr.bf16.mxu0 %v3724
    %4032 = vmatpush1.bf16.msra.mxu0 %v3723
    %4033 = vmatprep.subr.bf16.mxu0 %v3716
    %4034 = vmatpush1.bf16.msra.mxu0 %v3715
    %4035 = vmatprep.subr.bf16.mxu0 %v3708
    %4036 = vmatpush1.bf16.msra.mxu0 %v3707
    %4037 = vmatprep.subr.bf16.mxu0 %v3700
    %4038 = vmatpush1.bf16.msra.mxu0 %v3699
    %4039 = vmatprep.subr.bf16.mxu0 %v3692
    %4040 = vmatpush1.bf16.msra.mxu0 %v3691
    %4041 = vmatprep.subr.bf16.mxu0 %v3812
    %4042 = vmatpush2.bf16.msra.mxu0 %v3811
    %4043 = vmatprep.subr.bf16.mxu0 %v3804
    %4044 = vmatpush2.bf16.msra.mxu0 %v3803
    %4045 = vmatprep.subr.bf16.mxu0 %v3796
    %4046 = vmatpush2.bf16.msra.mxu0 %v3795
    %4047 = vmatprep.subr.bf16.mxu0 %v3788
    %4048 = vmatpush2.bf16.msra.mxu0 %v3787
    %4049 = vmatprep.subr.bf16.mxu0 %v3780
    %4050 = vmatpush2.bf16.msra.mxu0 %v3779
    %4051 = vmatprep.subr.bf16.mxu0 %v3772
    %4052 = vmatpush2.bf16.msra.mxu0 %v3771
    %4053 = vmatprep.subr.bf16.mxu0 %v3764
    %4054 = vmatpush2.bf16.msra.mxu0 %v3763
    %4055 = vmatprep.subr.bf16.mxu0 %v3756
    %4056 = vmatpush2.bf16.msra.mxu0 %v3755
    %4057 = vmatprep.mubr.bf16.mxu0 %v3261
    %4058 = vmatmul.mubr.bf16.gmra.mxu0 %v3260
    %v4059 = vpop.f32.mrf.mxu0
    %v4060 = vadd.f32 %v3282, %v4059
    %v4061 = vpop.f32.mrf.mxu0
    %v4062 = vadd.f32 %v3286, %v4061
    %v4063 = vpop.f32.mrf.mxu0
    %v4064 = vpop.f32.mrf.mxu0
    %4065 = vdwg.mxu0
    %4066 = vmatprep.subr.bf16.mxu0 %v3750
    %4067 = vmatpush1.bf16.msra.mxu0 %v3749
    %4068 = vmatprep.subr.bf16.mxu0 %v3742
    %4069 = vmatpush1.bf16.msra.mxu0 %v3741
    %4070 = vmatprep.subr.bf16.mxu0 %v3734
    %4071 = vmatpush1.bf16.msra.mxu0 %v3733
    %4072 = vmatprep.subr.bf16.mxu0 %v3726
    %4073 = vmatpush1.bf16.msra.mxu0 %v3725
    %4074 = vmatprep.subr.bf16.mxu0 %v3718
    %4075 = vmatpush1.bf16.msra.mxu0 %v3717
    %4076 = vmatprep.subr.bf16.mxu0 %v3710
    %4077 = vmatpush1.bf16.msra.mxu0 %v3709
    %4078 = vmatprep.subr.bf16.mxu0 %v3702
    %4079 = vmatpush1.bf16.msra.mxu0 %v3701
    %4080 = vmatprep.subr.bf16.mxu0 %v3694
    %4081 = vmatpush1.bf16.msra.mxu0 %v3693
    %4082 = vmatprep.subr.bf16.mxu0 %v3814
    %4083 = vmatpush2.bf16.msra.mxu0 %v3813
    %4084 = vmatprep.subr.bf16.mxu0 %v3806
    %4085 = vmatpush2.bf16.msra.mxu0 %v3805
    %4086 = vmatprep.subr.bf16.mxu0 %v3798
    %4087 = vmatpush2.bf16.msra.mxu0 %v3797
    %4088 = vmatprep.subr.bf16.mxu0 %v3790
    %4089 = vmatpush2.bf16.msra.mxu0 %v3789
    %4090 = vmatprep.subr.bf16.mxu0 %v3782
    %4091 = vmatpush2.bf16.msra.mxu0 %v3781
    %4092 = vmatprep.subr.bf16.mxu0 %v3774
    %4093 = vmatpush2.bf16.msra.mxu0 %v3773
    %4094 = vmatprep.subr.bf16.mxu0 %v3766
    %4095 = vmatpush2.bf16.msra.mxu0 %v3765
    %4096 = vmatprep.subr.bf16.mxu0 %v3758
    %4097 = vmatpush2.bf16.msra.mxu0 %v3757
    %4098 = vmatprep.mubr.bf16.mxu0 %v3261
    %4099 = vmatmul.mubr.bf16.gmra.mxu0 %v3260
    %v4100 = vpop.f32.mrf.mxu0
    %v4101 = vadd.f32 %v3290, %v4100
    %v4102 = vpop.f32.mrf.mxu0
    %v4103 = vadd.f32 %v3294, %v4102
    %v4104 = vpop.f32.mrf.mxu0
    %v4105 = vpop.f32.mrf.mxu0
    %4106 = vdwg.mxu0
    %v4107 = vmax.f32 %v3978, 0.0
    %v4108 = vmax.f32 %v3980, 0.0
    %v4109 = vmax.f32 %v4019, 0.0
    %v4110 = vmax.f32 %v4021, 0.0
    %v4111 = vmax.f32 %v4060, 0.0
    %v4112 = vmax.f32 %v4062, 0.0
    %v4113 = vmax.f32 %v4101, 0.0
    %v4114 = vmax.f32 %v4103, 0.0
    %v4115 = vxor.u32 %v4107, 2147483648
    %v4116 = vxor.u32 %v4108, 2147483648
    %v4117 = vxor.u32 %v4109, 2147483648
    %v4118 = vxor.u32 %v4110, 2147483648
    %v4119 = vxor.u32 %v4111, 2147483648
    %v4120 = vxor.u32 %v4112, 2147483648
    %v4121 = vxor.u32 %v4113, 2147483648
    %v4122 = vxor.u32 %v4114, 2147483648
    %v4123 = vmul.f32 %v4115, 1.442695
    %v4124 = vpow.pop %v4123
    %v4125 = vmul.f32 %v4116, 1.442695
    %v4126 = vpow.pop %v4125
    %v4127 = vmul.f32 %v4117, 1.442695
    %v4128 = vpow.pop %v4127
    %v4129 = vmul.f32 %v4118, 1.442695
    %v4130 = vpow.pop %v4129
    %v4131 = vmul.f32 %v4119, 1.442695
    %v4132 = vpow.pop %v4131
    %v4133 = vmul.f32 %v4120, 1.442695
    %v4134 = vpow.pop %v4133
    %v4135 = vmul.f32 %v4121, 1.442695
    %v4136 = vpow.pop %v4135
    %v4137 = vmul.f32 %v4122, 1.442695
    %v4138 = vpow.pop %v4137
    %v4139 = vadd.f32 %v4124, 1.0
    %v4140 = vadd.f32 %v4126, 1.0
    %v4141 = vadd.f32 %v4128, 1.0
    %v4142 = vadd.f32 %v4130, 1.0
    %v4143 = vadd.f32 %v4132, 1.0
    %v4144 = vadd.f32 %v4134, 1.0
    %v4145 = vadd.f32 %v4136, 1.0
    %v4146 = vadd.f32 %v4138, 1.0
    %v4147 = vrcp.pop %v4139
    %v4148 = vmul.f32 1.0, %v4147
    %v4149 = vrcp.pop %v4140
    %v4150 = vmul.f32 1.0, %v4149
    %v4151 = vrcp.pop %v4141
    %v4152 = vmul.f32 1.0, %v4151
    %v4153 = vrcp.pop %v4142
    %v4154 = vmul.f32 1.0, %v4153
    %v4155 = vrcp.pop %v4143
    %v4156 = vmul.f32 1.0, %v4155
    %v4157 = vrcp.pop %v4144
    %v4158 = vmul.f32 1.0, %v4157
    %v4159 = vrcp.pop %v4145
    %v4160 = vmul.f32 1.0, %v4159
    %v4161 = vrcp.pop %v4146
    %v4162 = vmul.f32 1.0, %v4161
    %v4171 = vcombine.low %v4148, %v4150
    %v4172 = vcombine.low %v4152, %v4154
    %v4174 = vunpack.c.l.s4 1983009808
    %v4175 = vunpack.c.0.s8 %v4174
    %v4176 = vlaneseq
    %v4177 = vshrl.u32 %v4176, 7
    %v4178 = vsub.s32 %v4175, %v4177
    %v4179 = vrot.slane %v4171, %v4178
    %v4181 = vunpack.c.l.s4 1983009808
    %v4182 = vunpack.c.0.s8 %v4181
    %v4183 = vlaneseq
    %v4184 = vshrl.u32 %v4183, 7
    %v4185 = vsub.s32 %v4182, %v4184
    %v4186 = vrot.slane %v4172, %v4185
    %v4187 = vcombine.low %v4179, %v4186
    %v4188 = vcombine.low %v4156, %v4158
    %v4189 = vcombine.low %v4160, %v4162
    %v4191 = vunpack.c.l.s4 1983009808
    %v4192 = vunpack.c.0.s8 %v4191
    %v4193 = vlaneseq
    %v4194 = vshrl.u32 %v4193, 7
    %v4195 = vsub.s32 %v4192, %v4194
    %v4196 = vrot.slane %v4188, %v4195
    %v4198 = vunpack.c.l.s4 1983009808
    %v4199 = vunpack.c.0.s8 %v4198
    %v4200 = vlaneseq
    %v4201 = vshrl.u32 %v4200, 7
    %v4202 = vsub.s32 %v4199, %v4201
    %v4203 = vrot.slane %v4189, %v4202
    %v4204 = vcombine.low %v4196, %v4203
    %s4207 = scalar_lea.vmem %s5, 16
    %4208 = vst [vmem:[%s4207] sm:$0xff] %v4187
    %4209 = vst [vmem:[%s4207 + $0x8] sm:$0xff] %v4204
    // Predicated region
    $region30: #{get_stat_forward.1} parent=1 // pred_check
      _
    $region31: #{get_stat_forward.1} parent=1 // pred_check_branch
      %4211 = sbr.rel (0) target = $region33
    $region32: #{get_stat_forward.1} parent=1 // pred_region
      _
    $region33: #{get_stat_forward.1} parent=1 // pred_fallthru
      _
    // Predicated region
    $region34: #{get_stat_forward.1} parent=1 // pred_check
      _
    $region35: #{get_stat_forward.1} parent=1 // pred_check_branch
      %4213 = sbr.rel (0) target = $region37
    $region36: #{get_stat_forward.1} parent=1 // pred_region
      _
    $region37: #{get_stat_forward.1} parent=1 // pred_fallthru
      _
    %4214 = vsyncpa [#allocation3], 1
    %4215 = vsyncpa [#allocation5], 1

</llo_original>
